<compile_context>
chip_gen: v7x
topology: tpu7x:2x2x1
jax: 0.10.0
libtpu: 0.0.40
codegen_flags: <defaults>
</compile_context>

<pallas_src>
import jax
import jax.numpy as jnp
from jax.experimental import pallas as pl
from jax.experimental.pallas import tpu as pltpu

LANE = 128  # TPU lane width; channel dims are padded to a multiple of this.


def _round_up(n, m):
    return (n + m - 1) // m * m


def down_kernel(x_ref, w1_ref, b1_ref, w2_ref, b2_ref, o_ref, ps1, ps2):
    # x_ref : (1, H, Wh, 2*Cin) bf16   input image, adjacent W columns packed along lanes
    # w1_ref: (9, Cin, Cout)    bf16   conv1 taps (BN1 folded), tap index = 3*dy + dx
    # b1_ref: (1, Cout)         f32
    # w2_ref: (9, Cout, Cout)   bf16   conv2 taps (BN2 folded)
    # b2_ref: (1, Cout)         f32
    # o_ref : (1, Hh, Wh, Cout) f32
    # ps1   : (Hh*Wh + 2*HALO, Cin)  bf16 scratch: flattened, zero-haloed pooled input
    # ps2   : (Hh*Wh + 2*HALO, Cout) bf16 scratch: flattened, zero-haloed conv1 output
    _, Hh, Wh, Cout = o_ref.shape
    Cin = x_ref.shape[3] // 2
    HW = Hh * Wh
    HALO = (ps1.shape[0] - HW) // 2   # >= Wh + 1 zero rows above/below the interior

    # ---- MaxPool2d(2): elementwise maxima only (VPU), no sublane shuffles ----
    x_even = x_ref[0, :, :, :Cin]                      # (2*Hh, Wh, Cin) even W columns
    x_odd = x_ref[0, :, :, Cin:]                       # (2*Hh, Wh, Cin) odd  W columns
    mw = jnp.maximum(x_even, x_odd)                    # horizontal 2:1 max
    pooled = jnp.max(mw.reshape(Hh, 2, Wh, Cin), axis=1)   # vertical 2:1 max -> (Hh, Wh, Cin)

    # ---- stage pooled input in flattened zero-haloed form ----
    # Only the halo rows are re-zeroed (2*HALO tiny rows); the interior is always fully
    # overwritten.  Not guarding with program_id==0 keeps this correct even if the batch
    # axis is split across TensorCores (each core has its own scratch).
    ps1[pl.ds(0, HALO), :] = jnp.zeros((HALO, Cin), ps1.dtype)
    ps1[pl.ds(HALO + HW, HALO), :] = jnp.zeros((HALO, Cin), ps1.dtype)
    ps1[pl.ds(HALO, HW), :] = pooled.reshape(HW, Cin).astype(ps1.dtype)

    # W-edge validity masks shared by both convs (flat index n = y*Wh + x).
    col = jax.lax.broadcasted_iota(jnp.int32, (HW, 1), 0) % Wh
    not_first_col = col != 0          # tap reads column x-1: invalid at x == 0
    not_last_col = col != (Wh - 1)    # tap reads column x+1: invalid at x == Wh-1

    def conv3x3_relu(src, w_ref, b_ref, cout):
        # 9 shifted-row-window matmuls, K = src channel count (>=128), f32 accumulation.
        acc = jnp.zeros((HW, cout), jnp.float32)
        for dy in range(3):          # tap offset oy = dy - 1
            for dx in range(3):      # tap offset ox = dx - 1
                start = HALO + (dy - 1) * Wh + (dx - 1)
                lhs = src[pl.ds(start, HW), :]
                if dx == 0:
                    lhs = jnp.where(not_first_col, lhs, jnp.zeros((), lhs.dtype))
                elif dx == 2:
                    lhs = jnp.where(not_last_col, lhs, jnp.zeros((), lhs.dtype))
                acc = acc + jnp.dot(lhs, w_ref[3 * dy + dx],
                                    preferred_element_type=jnp.float32)
        return jnp.maximum(acc + b_ref[...], 0.0)      # bias + ReLU in f32

    # ---- conv1 + BN1 + ReLU ----
    y1 = conv3x3_relu(ps1, w1_ref, b1_ref, Cout)       # (HW, Cout) f32

    # ---- conv2 + BN2 + ReLU ----
    ps2[pl.ds(0, HALO), :] = jnp.zeros((HALO, Cout), ps2.dtype)
    ps2[pl.ds(HALO + HW, HALO), :] = jnp.zeros((HALO, Cout), ps2.dtype)
    ps2[pl.ds(HALO, HW), :] = y1.astype(ps2.dtype)

    y2 = conv3x3_relu(ps2, w2_ref, b2_ref, Cout)       # (HW, Cout) f32
    o_ref[0] = y2.reshape(Hh, Wh, Cout).astype(o_ref.dtype)


def prepare_down_params(w1_oihw, b1, w2_oihw, b2):
    """OIHW -> (9, Cin_p, Cout_p) HWIO bf16 with lane padding; biases stay f32.
    In a real model this runs once at load time, not per forward pass."""
    Cout, Cin = w1_oihw.shape[0], w1_oihw.shape[1]
    Cin_p, Cout_p = _round_up(Cin, LANE), _round_up(Cout, LANE)

    def prep_w(w_oihw, ci, ci_p):
        w = jnp.transpose(w_oihw, (2, 3, 1, 0))                    # OIHW -> HWIO
        w = jnp.pad(w, ((0, 0), (0, 0), (0, ci_p - ci), (0, Cout_p - Cout)))
        return w.reshape(9, ci_p, Cout_p).astype(jnp.bfloat16)

    def prep_b(b):
        return jnp.pad(b, (0, Cout_p - Cout)).reshape(1, Cout_p).astype(jnp.float32)

    return (prep_w(w1_oihw, Cin, Cin_p), prep_b(b1),
            prep_w(w2_oihw, Cout, Cout_p), prep_b(b2), Cin_p, Cout_p)


def down_block_nhwc(x_nhwc, w1_p, b1_p, w2_p, b2_p):
    """x_nhwc: (B, H, W, Cin_p) bf16, channel-padded. Returns (B, H/2, W/2, Cout_p) f32."""
    B, H, W, Cin_p = x_nhwc.shape
    Cout_p = w1_p.shape[2]
    assert H % 2 == 0 and W % 2 == 0, "MaxPool2d(2) needs even H and W"
    Hh, Wh = H // 2, W // 2
    assert Wh % 8 == 0, "W//2 must be a multiple of 8 (TPU sublane tile)"
    HW = Hh * Wh
    HALO = _round_up(Wh + 1, 16)   # zero-halo rows; multiple of 16 keeps bf16 stores aligned

    # Pack adjacent W columns into the lane dim (pure bitcast in XLA) so the horizontal
    # maxpool reduction in the kernel is a lane-aligned slice + elementwise max.
    x_packed = x_nhwc.reshape(B, H, Wh, 2 * Cin_p)

    return pl.pallas_call(
        down_kernel,
        out_shape=jax.ShapeDtypeStruct((B, Hh, Wh, Cout_p), jnp.float32),
        grid_spec=pltpu.PrefetchScalarGridSpec(
            num_scalar_prefetch=0,
            grid=(B,),
            in_specs=[
                pl.BlockSpec((1, H, Wh, 2 * Cin_p), lambda b: (b, 0, 0, 0)),
                pl.BlockSpec((9, Cin_p, Cout_p), lambda b: (0, 0, 0)),
                pl.BlockSpec((1, Cout_p), lambda b: (0, 0)),
                pl.BlockSpec((9, Cout_p, Cout_p), lambda b: (0, 0, 0)),
                pl.BlockSpec((1, Cout_p), lambda b: (0, 0)),
            ],
            out_specs=pl.BlockSpec((1, Hh, Wh, Cout_p), lambda b: (b, 0, 0, 0)),
            scratch_shapes=[
                pltpu.VMEM((HW + 2 * HALO, Cin_p), jnp.bfloat16),
                pltpu.VMEM((HW + 2 * HALO, Cout_p), jnp.bfloat16),
            ],
        ),
        compiler_params=pltpu.CompilerParams(
            dimension_semantics=("parallel",),      # batch steps -> both v7x TensorCores
            vmem_limit_bytes=32 * 1024 * 1024,      # explicit budget, fits v7x 64 MiB VMEM
        ),
    )(x_packed, w1_p, b1_p, w2_p, b2_p)


def down_pallas(x_nchw, w1_oihw, b1, w2_oihw, b2):
    """NCHW f32 convenience wrapper matching the PyTorch module (BN already folded).
    In a full UNet the transpose / pad / bf16 cast happens once at the network edge."""
    B, Cin, H, W = x_nchw.shape
    Cout = w1_oihw.shape[0]
    w1_p, b1_p, w2_p, b2_p, Cin_p, Cout_p = prepare_down_params(w1_oihw, b1, w2_oihw, b2)

    x = jnp.transpose(x_nchw, (0, 2, 3, 1))                                  # NCHW -> NHWC
    x = jnp.pad(x, ((0, 0), (0, 0), (0, 0), (0, Cin_p - Cin))).astype(jnp.bfloat16)

    out = down_block_nhwc(x, w1_p, b1_p, w2_p, b2_p)                         # (B,Hh,Wh,Cout_p)
    out = out[..., :Cout]                                                    # strip lane padding
    return jnp.transpose(out, (0, 3, 1, 2))                                  # NHWC -> NCHW


def down_reference(x_nchw, w1_oihw, b1, w2_oihw, b2):
    """Pure-JAX f32 reference (same folded-BN parameterization)."""
    p = jax.lax.reduce_window(x_nchw, -jnp.inf, jax.lax.max,
                              (1, 1, 2, 2), (1, 1, 2, 2), 'VALID')

    def conv(x, w, b):
        y = jax.lax.conv_general_dilated(
            x, w, window_strides=(1, 1), padding='SAME',
            dimension_numbers=('NCHW', 'OIHW', 'NCHW'))
        return y + b[None, :, None, None]

    y = jnp.maximum(conv(p, w1_oihw, b1), 0.0)
    y = jnp.maximum(conv(y, w2_oihw, b2), 0.0)
    return y


def fold_bn(w_oihw, conv_b, gamma, beta, mean, var, eps=1e-5):
    scale = gamma / jnp.sqrt(var + eps)
    w_eff = w_oihw * scale[:, None, None, None]
    b_eff = (conv_b - mean) * scale + beta
    return w_eff, b_eff


if __name__ == "__main__":
    B, Cin, Cout, H, W = 2, 4, 8, 16, 16
    key = jax.random.PRNGKey(0)
    ks = jax.random.split(key, 12)

    x = jax.random.normal(ks[0], (B, Cin, H, W), jnp.float32)

    # conv1 + BN1 parameters (deterministic synthetic init)
    w1 = jax.random.normal(ks[1], (Cout, Cin, 3, 3), jnp.float32) * 0.1
    cb1 = jax.random.normal(ks[2], (Cout,), jnp.float32) * 0.1
    g1 = jax.random.uniform(ks[3], (Cout,), jnp.float32, 0.5, 1.5)
    be1 = jax.random.normal(ks[4], (Cout,), jnp.float32) * 0.1
    m1 = jax.random.normal(ks[5], (Cout,), jnp.float32) * 0.1
    v1 = jax.random.uniform(ks[6], (Cout,), jnp.float32, 0.5, 1.5)

    # conv2 + BN2 parameters
    w2 = jax.random.normal(ks[7], (Cout, Cout, 3, 3), jnp.float32) * 0.1
    cb2 = jax.random.normal(ks[8], (Cout,), jnp.float32) * 0.1
    g2 = jax.random.uniform(ks[9], (Cout,), jnp.float32, 0.5, 1.5)
    be2 = jax.random.normal(ks[10], (Cout,), jnp.float32) * 0.1
    m2 = jax.random.normal(ks[11], (Cout,), jnp.float32) * 0.1
    v2 = jax.random.uniform(jax.random.fold_in(key, 99), (Cout,), jnp.float32, 0.5, 1.5)

    # Fold inference-mode BatchNorm into conv weights/biases.
    w1e, b1e = fold_bn(w1, cb1, g1, be1, m1, v1)
    w2e, b2e = fold_bn(w2, cb2, g2, be2, m2, v2)

    out = down_pallas(x, w1e, b1e, w2e, b2e)
    out = jax.block_until_ready(out)

    ref = down_reference(x, w1e, b1e, w2e, b2e)
    assert out.shape == (B, Cout, H // 2, W // 2)
    # bf16 activations/weights in the kernel (f32 accumulation) vs f32 reference -> relaxed tol.
    max_diff = float(jnp.max(jnp.abs(out - ref)))
    assert jnp.allclose(out, ref, rtol=5e-2, atol=5e-2), f"mismatch, max abs diff {max_diff}"

    print("KERNEL_OK")
</pallas_src>

<mosaic_0001>
module attributes {stable_mosaic.version = 11 : i64} {
  func.func @down_kernel(%arg0: i32, %arg1: memref<1x16x8x256xbf16, #tpu.memory_space<vmem>>, %arg2: memref<9x128x128xbf16, #tpu.memory_space<vmem>>, %arg3: memref<1x128xf32, #tpu.memory_space<vmem>>, %arg4: memref<9x128x128xbf16, #tpu.memory_space<vmem>>, %arg5: memref<1x128xf32, #tpu.memory_space<vmem>>, %arg6: memref<1x8x8x128xf32, #tpu.memory_space<vmem>>, %arg7: memref<96x128xbf16, #tpu.memory_space<vmem>>, %arg8: memref<96x128xbf16, #tpu.memory_space<vmem>>) attributes {dimension_semantics = [#tpu.dimension_semantics<parallel>], iteration_bounds = array<i64: 2>, scalar_prefetch = 0 : i64, scratch_operands = 2 : i64, tpu.core_type = #tpu.core_type<tc>, window_params = [{transform_indices = @transform_0, window_bounds = array<i64: 1, 16, 8, 256>}, {pipeline_mode = #tpu.pipeline_mode<synchronous>, transform_indices = @transform_1, window_bounds = array<i64: 9, 128, 128>}, {pipeline_mode = #tpu.pipeline_mode<synchronous>, transform_indices = @transform_2, window_bounds = array<i64: 1, 128>}, {pipeline_mode = #tpu.pipeline_mode<synchronous>, transform_indices = @transform_3, window_bounds = array<i64: 9, 128, 128>}, {pipeline_mode = #tpu.pipeline_mode<synchronous>, transform_indices = @transform_4, window_bounds = array<i64: 1, 128>}, {transform_indices = @transform_5, window_bounds = array<i64: 1, 8, 8, 128>}]} {
    %c0 = arith.constant 0 : index
    %c0_0 = arith.constant 0 : index
    %c0_1 = arith.constant 0 : index
    %c0_2 = arith.constant 0 : index
    %0 = vector.load %arg1[%c0, %c0_0, %c0_1, %c0_2] : memref<1x16x8x256xbf16, #tpu.memory_space<vmem>>, vector<1x16x8x128xbf16>
    %1 = vector.shape_cast %0 : vector<1x16x8x128xbf16> to vector<16x8x128xbf16>
    %c0_3 = arith.constant 0 : index
    %c0_4 = arith.constant 0 : index
    %c0_5 = arith.constant 0 : index
    %c128 = arith.constant 128 : index
    %2 = vector.load %arg1[%c0_3, %c0_4, %c0_5, %c128] : memref<1x16x8x256xbf16, #tpu.memory_space<vmem>>, vector<1x16x8x128xbf16>
    %3 = vector.shape_cast %2 : vector<1x16x8x128xbf16> to vector<16x8x128xbf16>
    %4 = arith.maximumf %1, %3 : vector<16x8x128xbf16>
    %5 = vector.shape_cast %4 : vector<16x8x128xbf16> to vector<8x2x8x128xbf16>
    %cst = arith.constant dense<0xFF80> : vector<8x8x128xbf16>
    %6 = vector.multi_reduction <maximumf>, %5, %cst [1] : vector<8x2x8x128xbf16> to vector<8x8x128xbf16>
    %cst_6 = arith.constant 0.000000e+00 : bf16
    %7 = vector.broadcast %cst_6 : bf16 to vector<16x128xbf16>
    %c0_7 = arith.constant 0 : index
    %c0_8 = arith.constant 0 : index
    %8 = vector.load %arg7[%c0_7, %c0_8] : memref<96x128xbf16, #tpu.memory_space<vmem>>, vector<16x128xbf16>
    tpu.vector_store %arg7[%c0_7, %c0_8], %7 {strides = array<i32>} : memref<96x128xbf16, #tpu.memory_space<vmem>>, vector<16x128xbf16>,
    %cst_9 = arith.constant 0.000000e+00 : bf16
    %9 = vector.broadcast %cst_9 : bf16 to vector<16x128xbf16>
    %c80 = arith.constant 80 : index
    %c0_10 = arith.constant 0 : index
    %10 = vector.load %arg7[%c80, %c0_10] : memref<96x128xbf16, #tpu.memory_space<vmem>>, vector<16x128xbf16>
    tpu.vector_store %arg7[%c80, %c0_10], %9 {strides = array<i32>} : memref<96x128xbf16, #tpu.memory_space<vmem>>, vector<16x128xbf16>,
    %11 = vector.shape_cast %6 : vector<8x8x128xbf16> to vector<64x128xbf16>
    %c16 = arith.constant 16 : index
    %c0_11 = arith.constant 0 : index
    %12 = vector.load %arg7[%c16, %c0_11] : memref<96x128xbf16, #tpu.memory_space<vmem>>, vector<64x128xbf16>
    tpu.vector_store %arg7[%c16, %c0_11], %11 {strides = array<i32>} : memref<96x128xbf16, #tpu.memory_space<vmem>>, vector<64x128xbf16>,
    %13 = tpu.iota {dimensions = array<i32: 0>} : vector<64x1xi32>
    %c8_i32 = arith.constant 8 : i32
    %c0_i32 = arith.constant 0 : i32
    %14 = arith.cmpi eq, %c8_i32, %c0_i32 : i32
    %c1_i32 = arith.constant 1 : i32
    %15 = arith.select %14, %c1_i32, %c8_i32 : i32
    %16 = vector.broadcast %15 : i32 to vector<64x1xi32>
    %17 = arith.remsi %13, %16 : vector<64x1xi32>
    %c0_i32_12 = arith.constant 0 : i32
    %18 = vector.broadcast %c0_i32_12 : i32 to vector<64x1xi32>
    %19 = arith.cmpi ne, %17, %18 : vector<64x1xi32>
    %c0_i32_13 = arith.constant 0 : i32
    %20 = vector.broadcast %c0_i32_13 : i32 to vector<64x1xi32>
    %21 = arith.cmpi slt, %17, %20 : vector<64x1xi32>
    %c0_i32_14 = arith.constant 0 : i32
    %22 = arith.cmpi slt, %15, %c0_i32_14 : i32
    %23 = vector.broadcast %22 : i1 to vector<64x1xi1>
    %24 = vector.broadcast %23 : vector<64x1xi1> to vector<64x1xi1>
    %25 = arith.xori %21, %24 : vector<64x1xi1>
    %26 = arith.andi %25, %19 : vector<64x1xi1>
    %27 = vector.broadcast %15 : i32 to vector<64x1xi32>
    %28 = arith.addi %17, %27 : vector<64x1xi32>
    %29 = arith.select %26, %28, %17 : vector<64x1xi1>, vector<64x1xi32>
    %c0_i32_15 = arith.constant 0 : i32
    %30 = vector.broadcast %c0_i32_15 : i32 to vector<64x1xi32>
    %31 = arith.cmpi ne, %29, %30 : vector<64x1xi32>
    %c7_i32 = arith.constant 7 : i32
    %32 = vector.broadcast %c7_i32 : i32 to vector<64x1xi32>
    %33 = arith.cmpi ne, %29, %32 : vector<64x1xi32>
    %cst_16 = arith.constant 0.000000e+00 : f32
    %34 = vector.broadcast %cst_16 : f32 to vector<64x128xf32>
    %c7 = arith.constant 7 : index
    %c0_17 = arith.constant 0 : index
    %35 = vector.load %arg7[%c7, %c0_17] : memref<96x128xbf16, #tpu.memory_space<vmem>>, vector<64x128xbf16>
    %cst_18 = arith.constant 0.000000e+00 : bf16
    %36 = vector.shape_cast %31 : vector<64x1xi1> to vector<64x1xi1>
    %37 = vector.broadcast %36 : vector<64x1xi1> to vector<64x128xi1>
    %38 = vector.broadcast %cst_18 : bf16 to vector<64x128xbf16>
    %39 = arith.select %37, %35, %38 : vector<64x128xi1>, vector<64x128xbf16>
    %c0_19 = arith.constant 0 : index
    %c0_20 = arith.constant 0 : index
    %c0_21 = arith.constant 0 : index
    %40 = vector.load %arg2[%c0_19, %c0_20, %c0_21] : memref<9x128x128xbf16, #tpu.memory_space<vmem>>, vector<1x128x128xbf16>
    %41 = vector.shape_cast %40 : vector<1x128x128xbf16> to vector<128x128xbf16>
    %cst_22 = arith.constant dense<0.000000e+00> : vector<64x128xf32>
    %42 = tpu.matmul %39, %41, %cst_22 {dimension_numbers = #tpu.dot_dimension_numbers<[1], [0], [0], [1], [0, 0, 1, 1], [], []>} : vector<64x128xbf16>, vector<128x128xbf16>, vector<64x128xf32> -> vector<64x128xf32>
    %43 = arith.addf %34, %42 : vector<64x128xf32>
    %c8 = arith.constant 8 : index
    %c0_23 = arith.constant 0 : index
    %44 = vector.load %arg7[%c8, %c0_23] : memref<96x128xbf16, #tpu.memory_space<vmem>>, vector<64x128xbf16>
    %c1 = arith.constant 1 : index
    %c0_24 = arith.constant 0 : index
    %c0_25 = arith.constant 0 : index
    %45 = vector.load %arg2[%c1, %c0_24, %c0_25] : memref<9x128x128xbf16, #tpu.memory_space<vmem>>, vector<1x128x128xbf16>
    %46 = vector.shape_cast %45 : vector<1x128x128xbf16> to vector<128x128xbf16>
    %cst_26 = arith.constant dense<0.000000e+00> : vector<64x128xf32>
    %47 = tpu.matmul %44, %46, %cst_26 {dimension_numbers = #tpu.dot_dimension_numbers<[1], [0], [0], [1], [0, 0, 1, 1], [], []>} : vector<64x128xbf16>, vector<128x128xbf16>, vector<64x128xf32> -> vector<64x128xf32>
    %48 = arith.addf %43, %47 : vector<64x128xf32>
    %c9 = arith.constant 9 : index
    %c0_27 = arith.constant 0 : index
    %49 = vector.load %arg7[%c9, %c0_27] : memref<96x128xbf16, #tpu.memory_space<vmem>>, vector<64x128xbf16>
    %cst_28 = arith.constant 0.000000e+00 : bf16
    %50 = vector.shape_cast %33 : vector<64x1xi1> to vector<64x1xi1>
    %51 = vector.broadcast %50 : vector<64x1xi1> to vector<64x128xi1>
    %52 = vector.broadcast %cst_28 : bf16 to vector<64x128xbf16>
    %53 = arith.select %51, %49, %52 : vector<64x128xi1>, vector<64x128xbf16>
    %c2 = arith.constant 2 : index
    %c0_29 = arith.constant 0 : index
    %c0_30 = arith.constant 0 : index
    %54 = vector.load %arg2[%c2, %c0_29, %c0_30] : memref<9x128x128xbf16, #tpu.memory_space<vmem>>, vector<1x128x128xbf16>
    %55 = vector.shape_cast %54 : vector<1x128x128xbf16> to vector<128x128xbf16>
    %cst_31 = arith.constant dense<0.000000e+00> : vector<64x128xf32>
    %56 = tpu.matmul %53, %55, %cst_31 {dimension_numbers = #tpu.dot_dimension_numbers<[1], [0], [0], [1], [0, 0, 1, 1], [], []>} : vector<64x128xbf16>, vector<128x128xbf16>, vector<64x128xf32> -> vector<64x128xf32>
    %57 = arith.addf %48, %56 : vector<64x128xf32>
    %c15 = arith.constant 15 : index
    %c0_32 = arith.constant 0 : index
    %58 = vector.load %arg7[%c15, %c0_32] : memref<96x128xbf16, #tpu.memory_space<vmem>>, vector<64x128xbf16>
    %cst_33 = arith.constant 0.000000e+00 : bf16
    %59 = vector.shape_cast %31 : vector<64x1xi1> to vector<64x1xi1>
    %60 = vector.broadcast %59 : vector<64x1xi1> to vector<64x128xi1>
    %61 = vector.broadcast %cst_33 : bf16 to vector<64x128xbf16>
    %62 = arith.select %60, %58, %61 : vector<64x128xi1>, vector<64x128xbf16>
    %c3 = arith.constant 3 : index
    %c0_34 = arith.constant 0 : index
    %c0_35 = arith.constant 0 : index
    %63 = vector.load %arg2[%c3, %c0_34, %c0_35] : memref<9x128x128xbf16, #tpu.memory_space<vmem>>, vector<1x128x128xbf16>
    %64 = vector.shape_cast %63 : vector<1x128x128xbf16> to vector<128x128xbf16>
    %cst_36 = arith.constant dense<0.000000e+00> : vector<64x128xf32>
    %65 = tpu.matmul %62, %64, %cst_36 {dimension_numbers = #tpu.dot_dimension_numbers<[1], [0], [0], [1], [0, 0, 1, 1], [], []>} : vector<64x128xbf16>, vector<128x128xbf16>, vector<64x128xf32> -> vector<64x128xf32>
    %66 = arith.addf %57, %65 : vector<64x128xf32>
    %c16_37 = arith.constant 16 : index
    %c0_38 = arith.constant 0 : index
    %67 = vector.load %arg7[%c16_37, %c0_38] : memref<96x128xbf16, #tpu.memory_space<vmem>>, vector<64x128xbf16>
    %c4 = arith.constant 4 : index
    %c0_39 = arith.constant 0 : index
    %c0_40 = arith.constant 0 : index
    %68 = vector.load %arg2[%c4, %c0_39, %c0_40] : memref<9x128x128xbf16, #tpu.memory_space<vmem>>, vector<1x128x128xbf16>
    %69 = vector.shape_cast %68 : vector<1x128x128xbf16> to vector<128x128xbf16>
    %cst_41 = arith.constant dense<0.000000e+00> : vector<64x128xf32>
    %70 = tpu.matmul %67, %69, %cst_41 {dimension_numbers = #tpu.dot_dimension_numbers<[1], [0], [0], [1], [0, 0, 1, 1], [], []>} : vector<64x128xbf16>, vector<128x128xbf16>, vector<64x128xf32> -> vector<64x128xf32>
    %71 = arith.addf %66, %70 : vector<64x128xf32>
    %c17 = arith.constant 17 : index
    %c0_42 = arith.constant 0 : index
    %72 = vector.load %arg7[%c17, %c0_42] : memref<96x128xbf16, #tpu.memory_space<vmem>>, vector<64x128xbf16>
    %cst_43 = arith.constant 0.000000e+00 : bf16
    %73 = vector.shape_cast %33 : vector<64x1xi1> to vector<64x1xi1>
    %74 = vector.broadcast %73 : vector<64x1xi1> to vector<64x128xi1>
    %75 = vector.broadcast %cst_43 : bf16 to vector<64x128xbf16>
    %76 = arith.select %74, %72, %75 : vector<64x128xi1>, vector<64x128xbf16>
    %c5 = arith.constant 5 : index
    %c0_44 = arith.constant 0 : index
    %c0_45 = arith.constant 0 : index
    %77 = vector.load %arg2[%c5, %c0_44, %c0_45] : memref<9x128x128xbf16, #tpu.memory_space<vmem>>, vector<1x128x128xbf16>
    %78 = vector.shape_cast %77 : vector<1x128x128xbf16> to vector<128x128xbf16>
    %cst_46 = arith.constant dense<0.000000e+00> : vector<64x128xf32>
    %79 = tpu.matmul %76, %78, %cst_46 {dimension_numbers = #tpu.dot_dimension_numbers<[1], [0], [0], [1], [0, 0, 1, 1], [], []>} : vector<64x128xbf16>, vector<128x128xbf16>, vector<64x128xf32> -> vector<64x128xf32>
    %80 = arith.addf %71, %79 : vector<64x128xf32>
    %c23 = arith.constant 23 : index
    %c0_47 = arith.constant 0 : index
    %81 = vector.load %arg7[%c23, %c0_47] : memref<96x128xbf16, #tpu.memory_space<vmem>>, vector<64x128xbf16>
    %cst_48 = arith.constant 0.000000e+00 : bf16
    %82 = vector.shape_cast %31 : vector<64x1xi1> to vector<64x1xi1>
    %83 = vector.broadcast %82 : vector<64x1xi1> to vector<64x128xi1>
    %84 = vector.broadcast %cst_48 : bf16 to vector<64x128xbf16>
    %85 = arith.select %83, %81, %84 : vector<64x128xi1>, vector<64x128xbf16>
    %c6 = arith.constant 6 : index
    %c0_49 = arith.constant 0 : index
    %c0_50 = arith.constant 0 : index
    %86 = vector.load %arg2[%c6, %c0_49, %c0_50] : memref<9x128x128xbf16, #tpu.memory_space<vmem>>, vector<1x128x128xbf16>
    %87 = vector.shape_cast %86 : vector<1x128x128xbf16> to vector<128x128xbf16>
    %cst_51 = arith.constant dense<0.000000e+00> : vector<64x128xf32>
    %88 = tpu.matmul %85, %87, %cst_51 {dimension_numbers = #tpu.dot_dimension_numbers<[1], [0], [0], [1], [0, 0, 1, 1], [], []>} : vector<64x128xbf16>, vector<128x128xbf16>, vector<64x128xf32> -> vector<64x128xf32>
    %89 = arith.addf %80, %88 : vector<64x128xf32>
    %c24 = arith.constant 24 : index
    %c0_52 = arith.constant 0 : index
    %90 = vector.load %arg7[%c24, %c0_52] : memref<96x128xbf16, #tpu.memory_space<vmem>>, vector<64x128xbf16>
    %c7_53 = arith.constant 7 : index
    %c0_54 = arith.constant 0 : index
    %c0_55 = arith.constant 0 : index
    %91 = vector.load %arg2[%c7_53, %c0_54, %c0_55] : memref<9x128x128xbf16, #tpu.memory_space<vmem>>, vector<1x128x128xbf16>
    %92 = vector.shape_cast %91 : vector<1x128x128xbf16> to vector<128x128xbf16>
    %cst_56 = arith.constant dense<0.000000e+00> : vector<64x128xf32>
    %93 = tpu.matmul %90, %92, %cst_56 {dimension_numbers = #tpu.dot_dimension_numbers<[1], [0], [0], [1], [0, 0, 1, 1], [], []>} : vector<64x128xbf16>, vector<128x128xbf16>, vector<64x128xf32> -> vector<64x128xf32>
    %94 = arith.addf %89, %93 : vector<64x128xf32>
    %c25 = arith.constant 25 : index
    %c0_57 = arith.constant 0 : index
    %95 = vector.load %arg7[%c25, %c0_57] : memref<96x128xbf16, #tpu.memory_space<vmem>>, vector<64x128xbf16>
    %cst_58 = arith.constant 0.000000e+00 : bf16
    %96 = vector.shape_cast %33 : vector<64x1xi1> to vector<64x1xi1>
    %97 = vector.broadcast %96 : vector<64x1xi1> to vector<64x128xi1>
    %98 = vector.broadcast %cst_58 : bf16 to vector<64x128xbf16>
    %99 = arith.select %97, %95, %98 : vector<64x128xi1>, vector<64x128xbf16>
    %c8_59 = arith.constant 8 : index
    %c0_60 = arith.constant 0 : index
    %c0_61 = arith.constant 0 : index
    %100 = vector.load %arg2[%c8_59, %c0_60, %c0_61] : memref<9x128x128xbf16, #tpu.memory_space<vmem>>, vector<1x128x128xbf16>
    %101 = vector.shape_cast %100 : vector<1x128x128xbf16> to vector<128x128xbf16>
    %cst_62 = arith.constant dense<0.000000e+00> : vector<64x128xf32>
    %102 = tpu.matmul %99, %101, %cst_62 {dimension_numbers = #tpu.dot_dimension_numbers<[1], [0], [0], [1], [0, 0, 1, 1], [], []>} : vector<64x128xbf16>, vector<128x128xbf16>, vector<64x128xf32> -> vector<64x128xf32>
    %103 = arith.addf %94, %102 : vector<64x128xf32>
    %c0_63 = arith.constant 0 : index
    %c0_64 = arith.constant 0 : index
    %104 = vector.load %arg3[%c0_63, %c0_64] : memref<1x128xf32, #tpu.memory_space<vmem>>, vector<1x128xf32>
    %105 = vector.broadcast %104 : vector<1x128xf32> to vector<64x128xf32>
    %106 = arith.addf %103, %105 : vector<64x128xf32>
    %cst_65 = arith.constant 0.000000e+00 : f32
    %107 = vector.broadcast %cst_65 : f32 to vector<64x128xf32>
    %108 = arith.maximumf %106, %107 : vector<64x128xf32>
    %cst_66 = arith.constant 0.000000e+00 : bf16
    %109 = vector.broadcast %cst_66 : bf16 to vector<16x128xbf16>
    %c0_67 = arith.constant 0 : index
    %c0_68 = arith.constant 0 : index
    %110 = vector.load %arg8[%c0_67, %c0_68] : memref<96x128xbf16, #tpu.memory_space<vmem>>, vector<16x128xbf16>
    tpu.vector_store %arg8[%c0_67, %c0_68], %109 {strides = array<i32>} : memref<96x128xbf16, #tpu.memory_space<vmem>>, vector<16x128xbf16>,
    %cst_69 = arith.constant 0.000000e+00 : bf16
    %111 = vector.broadcast %cst_69 : bf16 to vector<16x128xbf16>
    %c80_70 = arith.constant 80 : index
    %c0_71 = arith.constant 0 : index
    %112 = vector.load %arg8[%c80_70, %c0_71] : memref<96x128xbf16, #tpu.memory_space<vmem>>, vector<16x128xbf16>
    tpu.vector_store %arg8[%c80_70, %c0_71], %111 {strides = array<i32>} : memref<96x128xbf16, #tpu.memory_space<vmem>>, vector<16x128xbf16>,
    %113 = arith.truncf %108 : vector<64x128xf32> to vector<64x128xbf16>
    %c16_72 = arith.constant 16 : index
    %c0_73 = arith.constant 0 : index
    %114 = vector.load %arg8[%c16_72, %c0_73] : memref<96x128xbf16, #tpu.memory_space<vmem>>, vector<64x128xbf16>
    tpu.vector_store %arg8[%c16_72, %c0_73], %113 {strides = array<i32>} : memref<96x128xbf16, #tpu.memory_space<vmem>>, vector<64x128xbf16>,
    %cst_74 = arith.constant 0.000000e+00 : f32
    %115 = vector.broadcast %cst_74 : f32 to vector<64x128xf32>
    %c7_75 = arith.constant 7 : index
    %c0_76 = arith.constant 0 : index
    %116 = vector.load %arg8[%c7_75, %c0_76] : memref<96x128xbf16, #tpu.memory_space<vmem>>, vector<64x128xbf16>
    %cst_77 = arith.constant 0.000000e+00 : bf16
    %117 = vector.shape_cast %31 : vector<64x1xi1> to vector<64x1xi1>
    %118 = vector.broadcast %117 : vector<64x1xi1> to vector<64x128xi1>
    %119 = vector.broadcast %cst_77 : bf16 to vector<64x128xbf16>
    %120 = arith.select %118, %116, %119 : vector<64x128xi1>, vector<64x128xbf16>
    %c0_78 = arith.constant 0 : index
    %c0_79 = arith.constant 0 : index
    %c0_80 = arith.constant 0 : index
    %121 = vector.load %arg4[%c0_78, %c0_79, %c0_80] : memref<9x128x128xbf16, #tpu.memory_space<vmem>>, vector<1x128x128xbf16>
    %122 = vector.shape_cast %121 : vector<1x128x128xbf16> to vector<128x128xbf16>
    %cst_81 = arith.constant dense<0.000000e+00> : vector<64x128xf32>
    %123 = tpu.matmul %120, %122, %cst_81 {dimension_numbers = #tpu.dot_dimension_numbers<[1], [0], [0], [1], [0, 0, 1, 1], [], []>} : vector<64x128xbf16>, vector<128x128xbf16>, vector<64x128xf32> -> vector<64x128xf32>
    %124 = arith.addf %115, %123 : vector<64x128xf32>
    %c8_82 = arith.constant 8 : index
    %c0_83 = arith.constant 0 : index
    %125 = vector.load %arg8[%c8_82, %c0_83] : memref<96x128xbf16, #tpu.memory_space<vmem>>, vector<64x128xbf16>
    %c1_84 = arith.constant 1 : index
    %c0_85 = arith.constant 0 : index
    %c0_86 = arith.constant 0 : index
    %126 = vector.load %arg4[%c1_84, %c0_85, %c0_86] : memref<9x128x128xbf16, #tpu.memory_space<vmem>>, vector<1x128x128xbf16>
    %127 = vector.shape_cast %126 : vector<1x128x128xbf16> to vector<128x128xbf16>
    %cst_87 = arith.constant dense<0.000000e+00> : vector<64x128xf32>
    %128 = tpu.matmul %125, %127, %cst_87 {dimension_numbers = #tpu.dot_dimension_numbers<[1], [0], [0], [1], [0, 0, 1, 1], [], []>} : vector<64x128xbf16>, vector<128x128xbf16>, vector<64x128xf32> -> vector<64x128xf32>
    %129 = arith.addf %124, %128 : vector<64x128xf32>
    %c9_88 = arith.constant 9 : index
    %c0_89 = arith.constant 0 : index
    %130 = vector.load %arg8[%c9_88, %c0_89] : memref<96x128xbf16, #tpu.memory_space<vmem>>, vector<64x128xbf16>
    %cst_90 = arith.constant 0.000000e+00 : bf16
    %131 = vector.shape_cast %33 : vector<64x1xi1> to vector<64x1xi1>
    %132 = vector.broadcast %131 : vector<64x1xi1> to vector<64x128xi1>
    %133 = vector.broadcast %cst_90 : bf16 to vector<64x128xbf16>
    %134 = arith.select %132, %130, %133 : vector<64x128xi1>, vector<64x128xbf16>
    %c2_91 = arith.constant 2 : index
    %c0_92 = arith.constant 0 : index
    %c0_93 = arith.constant 0 : index
    %135 = vector.load %arg4[%c2_91, %c0_92, %c0_93] : memref<9x128x128xbf16, #tpu.memory_space<vmem>>, vector<1x128x128xbf16>
    %136 = vector.shape_cast %135 : vector<1x128x128xbf16> to vector<128x128xbf16>
    %cst_94 = arith.constant dense<0.000000e+00> : vector<64x128xf32>
    %137 = tpu.matmul %134, %136, %cst_94 {dimension_numbers = #tpu.dot_dimension_numbers<[1], [0], [0], [1], [0, 0, 1, 1], [], []>} : vector<64x128xbf16>, vector<128x128xbf16>, vector<64x128xf32> -> vector<64x128xf32>
    %138 = arith.addf %129, %137 : vector<64x128xf32>
    %c15_95 = arith.constant 15 : index
    %c0_96 = arith.constant 0 : index
    %139 = vector.load %arg8[%c15_95, %c0_96] : memref<96x128xbf16, #tpu.memory_space<vmem>>, vector<64x128xbf16>
    %cst_97 = arith.constant 0.000000e+00 : bf16
    %140 = vector.shape_cast %31 : vector<64x1xi1> to vector<64x1xi1>
    %141 = vector.broadcast %140 : vector<64x1xi1> to vector<64x128xi1>
    %142 = vector.broadcast %cst_97 : bf16 to vector<64x128xbf16>
    %143 = arith.select %141, %139, %142 : vector<64x128xi1>, vector<64x128xbf16>
    %c3_98 = arith.constant 3 : index
    %c0_99 = arith.constant 0 : index
    %c0_100 = arith.constant 0 : index
    %144 = vector.load %arg4[%c3_98, %c0_99, %c0_100] : memref<9x128x128xbf16, #tpu.memory_space<vmem>>, vector<1x128x128xbf16>
    %145 = vector.shape_cast %144 : vector<1x128x128xbf16> to vector<128x128xbf16>
    %cst_101 = arith.constant dense<0.000000e+00> : vector<64x128xf32>
    %146 = tpu.matmul %143, %145, %cst_101 {dimension_numbers = #tpu.dot_dimension_numbers<[1], [0], [0], [1], [0, 0, 1, 1], [], []>} : vector<64x128xbf16>, vector<128x128xbf16>, vector<64x128xf32> -> vector<64x128xf32>
    %147 = arith.addf %138, %146 : vector<64x128xf32>
    %c16_102 = arith.constant 16 : index
    %c0_103 = arith.constant 0 : index
    %148 = vector.load %arg8[%c16_102, %c0_103] : memref<96x128xbf16, #tpu.memory_space<vmem>>, vector<64x128xbf16>
    %c4_104 = arith.constant 4 : index
    %c0_105 = arith.constant 0 : index
    %c0_106 = arith.constant 0 : index
    %149 = vector.load %arg4[%c4_104, %c0_105, %c0_106] : memref<9x128x128xbf16, #tpu.memory_space<vmem>>, vector<1x128x128xbf16>
    %150 = vector.shape_cast %149 : vector<1x128x128xbf16> to vector<128x128xbf16>
    %cst_107 = arith.constant dense<0.000000e+00> : vector<64x128xf32>
    %151 = tpu.matmul %148, %150, %cst_107 {dimension_numbers = #tpu.dot_dimension_numbers<[1], [0], [0], [1], [0, 0, 1, 1], [], []>} : vector<64x128xbf16>, vector<128x128xbf16>, vector<64x128xf32> -> vector<64x128xf32>
    %152 = arith.addf %147, %151 : vector<64x128xf32>
    %c17_108 = arith.constant 17 : index
    %c0_109 = arith.constant 0 : index
    %153 = vector.load %arg8[%c17_108, %c0_109] : memref<96x128xbf16, #tpu.memory_space<vmem>>, vector<64x128xbf16>
    %cst_110 = arith.constant 0.000000e+00 : bf16
    %154 = vector.shape_cast %33 : vector<64x1xi1> to vector<64x1xi1>
    %155 = vector.broadcast %154 : vector<64x1xi1> to vector<64x128xi1>
    %156 = vector.broadcast %cst_110 : bf16 to vector<64x128xbf16>
    %157 = arith.select %155, %153, %156 : vector<64x128xi1>, vector<64x128xbf16>
    %c5_111 = arith.constant 5 : index
    %c0_112 = arith.constant 0 : index
    %c0_113 = arith.constant 0 : index
    %158 = vector.load %arg4[%c5_111, %c0_112, %c0_113] : memref<9x128x128xbf16, #tpu.memory_space<vmem>>, vector<1x128x128xbf16>
    %159 = vector.shape_cast %158 : vector<1x128x128xbf16> to vector<128x128xbf16>
    %cst_114 = arith.constant dense<0.000000e+00> : vector<64x128xf32>
    %160 = tpu.matmul %157, %159, %cst_114 {dimension_numbers = #tpu.dot_dimension_numbers<[1], [0], [0], [1], [0, 0, 1, 1], [], []>} : vector<64x128xbf16>, vector<128x128xbf16>, vector<64x128xf32> -> vector<64x128xf32>
    %161 = arith.addf %152, %160 : vector<64x128xf32>
    %c23_115 = arith.constant 23 : index
    %c0_116 = arith.constant 0 : index
    %162 = vector.load %arg8[%c23_115, %c0_116] : memref<96x128xbf16, #tpu.memory_space<vmem>>, vector<64x128xbf16>
    %cst_117 = arith.constant 0.000000e+00 : bf16
    %163 = vector.shape_cast %31 : vector<64x1xi1> to vector<64x1xi1>
    %164 = vector.broadcast %163 : vector<64x1xi1> to vector<64x128xi1>
    %165 = vector.broadcast %cst_117 : bf16 to vector<64x128xbf16>
    %166 = arith.select %164, %162, %165 : vector<64x128xi1>, vector<64x128xbf16>
    %c6_118 = arith.constant 6 : index
    %c0_119 = arith.constant 0 : index
    %c0_120 = arith.constant 0 : index
    %167 = vector.load %arg4[%c6_118, %c0_119, %c0_120] : memref<9x128x128xbf16, #tpu.memory_space<vmem>>, vector<1x128x128xbf16>
    %168 = vector.shape_cast %167 : vector<1x128x128xbf16> to vector<128x128xbf16>
    %cst_121 = arith.constant dense<0.000000e+00> : vector<64x128xf32>
    %169 = tpu.matmul %166, %168, %cst_121 {dimension_numbers = #tpu.dot_dimension_numbers<[1], [0], [0], [1], [0, 0, 1, 1], [], []>} : vector<64x128xbf16>, vector<128x128xbf16>, vector<64x128xf32> -> vector<64x128xf32>
    %170 = arith.addf %161, %169 : vector<64x128xf32>
    %c24_122 = arith.constant 24 : index
    %c0_123 = arith.constant 0 : index
    %171 = vector.load %arg8[%c24_122, %c0_123] : memref<96x128xbf16, #tpu.memory_space<vmem>>, vector<64x128xbf16>
    %c7_124 = arith.constant 7 : index
    %c0_125 = arith.constant 0 : index
    %c0_126 = arith.constant 0 : index
    %172 = vector.load %arg4[%c7_124, %c0_125, %c0_126] : memref<9x128x128xbf16, #tpu.memory_space<vmem>>, vector<1x128x128xbf16>
    %173 = vector.shape_cast %172 : vector<1x128x128xbf16> to vector<128x128xbf16>
    %cst_127 = arith.constant dense<0.000000e+00> : vector<64x128xf32>
    %174 = tpu.matmul %171, %173, %cst_127 {dimension_numbers = #tpu.dot_dimension_numbers<[1], [0], [0], [1], [0, 0, 1, 1], [], []>} : vector<64x128xbf16>, vector<128x128xbf16>, vector<64x128xf32> -> vector<64x128xf32>
    %175 = arith.addf %170, %174 : vector<64x128xf32>
    %c25_128 = arith.constant 25 : index
    %c0_129 = arith.constant 0 : index
    %176 = vector.load %arg8[%c25_128, %c0_129] : memref<96x128xbf16, #tpu.memory_space<vmem>>, vector<64x128xbf16>
    %cst_130 = arith.constant 0.000000e+00 : bf16
    %177 = vector.shape_cast %33 : vector<64x1xi1> to vector<64x1xi1>
    %178 = vector.broadcast %177 : vector<64x1xi1> to vector<64x128xi1>
    %179 = vector.broadcast %cst_130 : bf16 to vector<64x128xbf16>
    %180 = arith.select %178, %176, %179 : vector<64x128xi1>, vector<64x128xbf16>
    %c8_131 = arith.constant 8 : index
    %c0_132 = arith.constant 0 : index
    %c0_133 = arith.constant 0 : index
    %181 = vector.load %arg4[%c8_131, %c0_132, %c0_133] : memref<9x128x128xbf16, #tpu.memory_space<vmem>>, vector<1x128x128xbf16>
    %182 = vector.shape_cast %181 : vector<1x128x128xbf16> to vector<128x128xbf16>
    %cst_134 = arith.constant dense<0.000000e+00> : vector<64x128xf32>
    %183 = tpu.matmul %180, %182, %cst_134 {dimension_numbers = #tpu.dot_dimension_numbers<[1], [0], [0], [1], [0, 0, 1, 1], [], []>} : vector<64x128xbf16>, vector<128x128xbf16>, vector<64x128xf32> -> vector<64x128xf32>
    %184 = arith.addf %175, %183 : vector<64x128xf32>
    %c0_135 = arith.constant 0 : index
    %c0_136 = arith.constant 0 : index
    %185 = vector.load %arg5[%c0_135, %c0_136] : memref<1x128xf32, #tpu.memory_space<vmem>>, vector<1x128xf32>
    %186 = vector.broadcast %185 : vector<1x128xf32> to vector<64x128xf32>
    %187 = arith.addf %184, %186 : vector<64x128xf32>
    %cst_137 = arith.constant 0.000000e+00 : f32
    %188 = vector.broadcast %cst_137 : f32 to vector<64x128xf32>
    %189 = arith.maximumf %187, %188 : vector<64x128xf32>
    %190 = vector.shape_cast %189 : vector<64x128xf32> to vector<8x8x128xf32>
    %c0_138 = arith.constant 0 : index
    %c0_139 = arith.constant 0 : index
    %c0_140 = arith.constant 0 : index
    %c0_141 = arith.constant 0 : index
    %191 = vector.load %arg6[%c0_138, %c0_139, %c0_140, %c0_141] : memref<1x8x8x128xf32, #tpu.memory_space<vmem>>, vector<1x8x8x128xf32>
    %192 = vector.shape_cast %191 : vector<1x8x8x128xf32> to vector<8x8x128xf32>
    %193 = vector.shape_cast %190 : vector<8x8x128xf32> to vector<1x8x8x128xf32>
    tpu.vector_store %arg6[%c0_138, %c0_139, %c0_140, %c0_141], %193 {strides = array<i32>} : memref<1x8x8x128xf32, #tpu.memory_space<vmem>>, vector<1x8x8x128xf32>,
    return
  }
  func.func @transform_0(%arg0: i32) -> (i32, i32, i32, i32) {
    %c0_i32 = arith.constant 0 : i32
    %c0_i32_0 = arith.constant 0 : i32
    %c0_i32_1 = arith.constant 0 : i32
    %c0_i32_2 = arith.constant 0 : i32
    return %arg0, %c0_i32, %c0_i32_0, %c0_i32_1 : i32, i32, i32, i32
  }
  func.func @transform_1(%arg0: i32) -> (i32, i32, i32) {
    %c0_i32 = arith.constant 0 : i32
    %c0_i32_0 = arith.constant 0 : i32
    %c0_i32_1 = arith.constant 0 : i32
    %c0_i32_2 = arith.constant 0 : i32
    return %c0_i32, %c0_i32_0, %c0_i32_1 : i32, i32, i32
  }
  func.func @transform_2(%arg0: i32) -> (i32, i32) {
    %c0_i32 = arith.constant 0 : i32
    %c0_i32_0 = arith.constant 0 : i32
    %c0_i32_1 = arith.constant 0 : i32
    return %c0_i32, %c0_i32_0 : i32, i32
  }
  func.func @transform_3(%arg0: i32) -> (i32, i32, i32) {
    %c0_i32 = arith.constant 0 : i32
    %c0_i32_0 = arith.constant 0 : i32
    %c0_i32_1 = arith.constant 0 : i32
    %c0_i32_2 = arith.constant 0 : i32
    return %c0_i32, %c0_i32_0, %c0_i32_1 : i32, i32, i32
  }
  func.func @transform_4(%arg0: i32) -> (i32, i32) {
    %c0_i32 = arith.constant 0 : i32
    %c0_i32_0 = arith.constant 0 : i32
    %c0_i32_1 = arith.constant 0 : i32
    return %c0_i32, %c0_i32_0 : i32, i32
  }
  func.func @transform_5(%arg0: i32) -> (i32, i32, i32, i32) {
    %c0_i32 = arith.constant 0 : i32
    %c0_i32_0 = arith.constant 0 : i32
    %c0_i32_1 = arith.constant 0 : i32
    %c0_i32_2 = arith.constant 0 : i32
    return %arg0, %c0_i32, %c0_i32_0, %c0_i32_1 : i32, i32, i32, i32
  }
}

</mosaic_0001>

<llo_original>
// kernel: tpu_custom_call.1
$region0: #{tpu_custom_call.1}
  #allocation0 [shape = 'u32[]', space=smem, size = 0x4, offset = 0x4, fixed_abs, tag = 'smem constant byte address 0x4 - core index']
  #allocation1 [shape = 'u32[144,128]{1,0:T(1,128)}', space=vmem, size = 0x12000, scoped, tag = 'internal scratch']
  #allocation2 [shape = 'bf16[96,128]{1,0:T(16,128)(2,1)}', space=vmem, size = 0x6000, scoped, tag = 'scratch operand']
  #allocation3 [shape = 'bf16[96,128]{1,0:T(16,128)(2,1)}', space=vmem, size = 0x6000, scoped, tag = 'scratch operand']
  %s0 = inlined_call_operand.hbm [shape: bf16[2,16,8,256], index: 0, kind: input, shape index: {}]
  %s1 = inlined_call_operand.hbm [shape: bf16[9,128,128], index: 1, kind: input, shape index: {}]
  %s2 = inlined_call_operand.vmem [shape: f32[1,128], index: 2, kind: input, shape index: {}]
  %s3 = inlined_call_operand.hbm [shape: bf16[9,128,128], index: 3, kind: input, shape index: {}]
  %s4 = inlined_call_operand.vmem [shape: f32[1,128], index: 4, kind: input, shape index: {}]
  %s5 = inlined_call_operand.hbm [shape: f32[2,8,8,128], index: 5, kind: output, shape index: {}]
  %s6 = sld [smem:[#allocation0]]
  $region65: #{tpu_custom_call.1} parent=0
    _
  %s8 = ssub.s32 1, %s6
  %s9 = scalar_select 0, %s8, %s6
  $region1: #{tpu_custom_call.1} parent=0
    #allocation4 [shape = 'u8[131072]{0}', space=vmem, size = 0x20000, scoped, tag = 'input window, operand 0']
    #allocation5 [shape = 's32[2]{0}', space=sflag, size = 0x8, scoped, tag = 'scoped memory for tpu_custom_call.1']
    #allocation6 [shape = 's32[2]{0}', space=sflag, size = 0x8, scoped, tag = 'scoped memory for tpu_custom_call.1']
    #allocation7 [shape = 'u8[294912]{0}', space=vmem, size = 0x48000, scoped, tag = 'input window, operand 1, single buffered']
    #allocation8 [shape = 's32[1]{0}', space=sflag, size = 0x4, scoped, tag = 'scoped memory for tpu_custom_call.1']
    #allocation9 [shape = 'u8[294912]{0}', space=vmem, size = 0x48000, scoped, tag = 'input window, operand 3, single buffered']
    #allocation10 [shape = 'u8[65536]{0}', space=vmem, size = 0x10000, scoped, tag = 'output window, operand 0']
    %10 = vsyncpa [#allocation5], 0
    %s11 = scalar_lea.sflag [#allocation5], 1
    %12 = vsyncpa %s11, 0
    %13 = vsyncpa [#allocation8], 0
    %14 = vsyncpa [#allocation6], 0
    %s15 = scalar_lea.sflag [#allocation6], 1
    %16 = vsyncpa %s15, 0
    loop: start=0, step=1, limit=4
    $region2: #{tpu_custom_call.1} parent=1 // loop_pre_header
      _
    $region3: #{tpu_custom_call.1} parent=1 // loop_header
      %s18 = sphi 0, %s22
      %p19 = scmp.ge.s32.totalorder %s18, 4
      %s28 = sphi 0, %s30
      %s31 = sphi 0, %s28
      %s32 = sphi 0, %s31
      %s48 = sphi 0, %s32
      %s52 = sphi 0, %s52
      %s54 = sphi 0, %s52
      %s55 = sphi 0, %s54
      %s69 = sphi 0, %s55
      %s73 = sphi 0, %s73
      %s75 = sphi 0, %s73
      %s76 = sphi 0, %s75
      %s90 = sphi 0, %s76
      %s94 = sphi 0, %s94
      %s96 = sphi 0, %s94
      %s97 = sphi 0, %s96
      %s111 = sphi 0, %s97
      %s115 = sphi 0, %s115
      %s117 = sphi 0, %s115
      %s118 = sphi 0, %s117
      %s132 = sphi 0, %s118
      %s138 = sphi 0, %s140
      %s141 = sphi 0, %s138
      %s142 = sphi 0, %s141
      %s158 = sphi 0, %s142
    $region4: #{tpu_custom_call.1} parent=1 // loop_header_branch
      %21 = sbr.rel (%p19) target = $region8
    $region5: #{tpu_custom_call.1} parent=1 // loop_body
      %s23 = ssub.s32 %s18, 1
      %s24 = ssub.s32 %s18, 2
      %s25 = sadd.s32 %s18, 1
      %s26 = ssub.s32 %s18, %s25
      %p27 = scmp.eq.s32.totalorder %s26, 0
      %s29 = sadd.s32 %s28, 1
      %s30 = scalar_select %p27, %s28, %s29
      %p33 = pneg %p27
      %p34 = scmp.eq.s32.totalorder %s18, 1
      %p35 = por %p33, %p34
      %p36 = scmp.ne.s32.totalorder %s28, %s31
      %p37 = scmp.eq.s32.totalorder %s18, 0
      %p38 = por %p36, %p37
      %p39 = scmp.ne.s32.totalorder %s28, %s31
      %p40 = scmp.eq.s32.totalorder %s23, 1
      %p41 = por %p39, %p40
      %p42 = scmp.ne.s32.totalorder %s31, %s32
      %p43 = scmp.eq.s32.totalorder %s23, 0
      %p44 = por %p42, %p43
      %p45 = scmp.ne.s32.totalorder %s31, %s32
      %p46 = scmp.eq.s32.totalorder %s24, 1
      %p47 = por %p45, %p46
      %p49 = scmp.ne.s32.totalorder %s32, %s48
      %p50 = scmp.eq.s32.totalorder %s24, 0
      %p51 = por %p49, %p50
      %s53 = sadd.s32 %s52, 1
      %p56 = scmp.eq.s32.totalorder %s18, 1
      %p57 = scmp.ne.s32.totalorder %s52, %s54
      %p58 = scmp.eq.s32.totalorder %s18, 0
      %p59 = por %p57, %p58
      %p60 = scmp.ne.s32.totalorder %s52, %s54
      %p61 = scmp.eq.s32.totalorder %s23, 1
      %p62 = por %p60, %p61
      %p63 = scmp.ne.s32.totalorder %s54, %s55
      %p64 = scmp.eq.s32.totalorder %s23, 0
      %p65 = por %p63, %p64
      %p66 = scmp.ne.s32.totalorder %s54, %s55
      %p67 = scmp.eq.s32.totalorder %s24, 1
      %p68 = por %p66, %p67
      %p70 = scmp.ne.s32.totalorder %s55, %s69
      %p71 = scmp.eq.s32.totalorder %s24, 0
      %p72 = por %p70, %p71
      %s74 = sadd.s32 %s73, 1
      %p77 = scmp.eq.s32.totalorder %s18, 1
      %p78 = scmp.ne.s32.totalorder %s73, %s75
      %p79 = scmp.eq.s32.totalorder %s18, 0
      %p80 = por %p78, %p79
      %p81 = scmp.ne.s32.totalorder %s73, %s75
      %p82 = scmp.eq.s32.totalorder %s23, 1
      %p83 = por %p81, %p82
      %p84 = scmp.ne.s32.totalorder %s75, %s76
      %p85 = scmp.eq.s32.totalorder %s23, 0
      %p86 = por %p84, %p85
      %p87 = scmp.ne.s32.totalorder %s75, %s76
      %p88 = scmp.eq.s32.totalorder %s24, 1
      %p89 = por %p87, %p88
      %p91 = scmp.ne.s32.totalorder %s76, %s90
      %p92 = scmp.eq.s32.totalorder %s24, 0
      %p93 = por %p91, %p92
      %s95 = sadd.s32 %s94, 1
      %p98 = scmp.eq.s32.totalorder %s18, 1
      %p99 = scmp.ne.s32.totalorder %s94, %s96
      %p100 = scmp.eq.s32.totalorder %s18, 0
      %p101 = por %p99, %p100
      %p102 = scmp.ne.s32.totalorder %s94, %s96
      %p103 = scmp.eq.s32.totalorder %s23, 1
      %p104 = por %p102, %p103
      %p105 = scmp.ne.s32.totalorder %s96, %s97
      %p106 = scmp.eq.s32.totalorder %s23, 0
      %p107 = por %p105, %p106
      %p108 = scmp.ne.s32.totalorder %s96, %s97
      %p109 = scmp.eq.s32.totalorder %s24, 1
      %p110 = por %p108, %p109
      %p112 = scmp.ne.s32.totalorder %s97, %s111
      %p113 = scmp.eq.s32.totalorder %s24, 0
      %p114 = por %p112, %p113
      %s116 = sadd.s32 %s115, 1
      %p119 = scmp.eq.s32.totalorder %s18, 1
      %p120 = scmp.ne.s32.totalorder %s115, %s117
      %p121 = scmp.eq.s32.totalorder %s18, 0
      %p122 = por %p120, %p121
      %p123 = scmp.ne.s32.totalorder %s115, %s117
      %p124 = scmp.eq.s32.totalorder %s23, 1
      %p125 = por %p123, %p124
      %p126 = scmp.ne.s32.totalorder %s117, %s118
      %p127 = scmp.eq.s32.totalorder %s23, 0
      %p128 = por %p126, %p127
      %p129 = scmp.ne.s32.totalorder %s117, %s118
      %p130 = scmp.eq.s32.totalorder %s24, 1
      %p131 = por %p129, %p130
      %p133 = scmp.ne.s32.totalorder %s118, %s132
      %p134 = scmp.eq.s32.totalorder %s24, 0
      %p135 = por %p133, %p134
      %s136 = ssub.s32 %s18, %s25
      %p137 = scmp.eq.s32.totalorder %s136, 0
      %s139 = sadd.s32 %s138, 1
      %s140 = scalar_select %p137, %s138, %s139
      %p143 = pneg %p137
      %p144 = scmp.eq.s32.totalorder %s18, 1
      %p145 = por %p143, %p144
      %p146 = scmp.ne.s32.totalorder %s138, %s141
      %p147 = scmp.eq.s32.totalorder %s18, 0
      %p148 = por %p146, %p147
      %p149 = scmp.ne.s32.totalorder %s138, %s141
      %p150 = scmp.eq.s32.totalorder %s23, 1
      %p151 = por %p149, %p150
      %p152 = scmp.ne.s32.totalorder %s141, %s142
      %p153 = scmp.eq.s32.totalorder %s23, 0
      %p154 = por %p152, %p153
      %p155 = scmp.ne.s32.totalorder %s141, %s142
      %p156 = scmp.eq.s32.totalorder %s24, 1
      %p157 = por %p155, %p156
      %p159 = scmp.ne.s32.totalorder %s142, %s158
      %p160 = scmp.eq.s32.totalorder %s24, 0
      %p161 = por %p159, %p160
      %p162 = scmp.le.s32.totalorder 1, %s18
      %p163 = scmp.lt.s32.totalorder %s18, 3
      %p164 = pnand %p162, %p163
      %p165 = pneg %p164
      // Predicated region
      $region9: #{tpu_custom_call.1} parent=5 // pred_check
        _
      $region10: #{tpu_custom_call.1} parent=5 // pred_check_branch
        %167 = sbr.rel (%p164) target = $region12
      $region11: #{tpu_custom_call.1} parent=5 // pred_region
        %s168 = ssub.s32 %s18, 1
        // Predicated region
        $region13: #{tpu_custom_call.1} parent=11 // pred_check
          %p169 = pneg %p65
        $region14: #{tpu_custom_call.1} parent=11 // pred_check_branch
          %171 = sbr.rel (%p169) target = $region16
        $region15: #{tpu_custom_call.1} parent=11 // pred_region
          %s173 = ssub.s32 9216, 9216
          %174 = vsyncadd [#allocation8], %s173
          %s175 = sshll.u32 [#allocation7], 4
          %s176 = int_to_ptr.vmem [resolvable:$true] %s175
          %181 = dma.hbm_to_vmem [thread:$0]  %s1, 9216, %s176, [#allocation8], 64, 64, 4
        $region16: #{tpu_custom_call.1} parent=11 // pred_fallthru
          _
        // Predicated region
        $region17: #{tpu_custom_call.1} parent=11 // pred_check
          %p182 = pneg %p86
        $region18: #{tpu_custom_call.1} parent=11 // pred_check_branch
          %184 = sbr.rel (%p182) target = $region20
        $region19: #{tpu_custom_call.1} parent=11 // pred_region
          _
        $region20: #{tpu_custom_call.1} parent=11 // pred_fallthru
          _
        // Predicated region
        $region21: #{tpu_custom_call.1} parent=11 // pred_check
          %p185 = pneg %p107
        $region22: #{tpu_custom_call.1} parent=11 // pred_check_branch
          %187 = sbr.rel (%p185) target = $region24
        $region23: #{tpu_custom_call.1} parent=11 // pred_region
          %s189 = ssub.s32 9216, 9216
          %190 = vsyncadd [#allocation8], %s189
          %s191 = sshll.u32 [#allocation9], 4
          %s192 = int_to_ptr.vmem [resolvable:$true] %s191
          %197 = dma.hbm_to_vmem [thread:$0]  %s3, 9216, %s192, [#allocation8], 64, 64, 4
        $region24: #{tpu_custom_call.1} parent=11 // pred_fallthru
          _
        // Predicated region
        $region25: #{tpu_custom_call.1} parent=11 // pred_check
          %p198 = pneg %p128
        $region26: #{tpu_custom_call.1} parent=11 // pred_check_branch
          %200 = sbr.rel (%p198) target = $region28
        $region27: #{tpu_custom_call.1} parent=11 // pred_region
          _
        $region28: #{tpu_custom_call.1} parent=11 // pred_fallthru
          _
      $region12: #{tpu_custom_call.1} parent=5 // pred_fallthru
        _
      %p201 = scmp.lt.s32.totalorder %s18, 2
      // Predicated region
      $region29: #{tpu_custom_call.1} parent=5 // pred_check
        %p202 = pneg %p201
      $region30: #{tpu_custom_call.1} parent=5 // pred_check_branch
        %204 = sbr.rel (%p202) target = $region32
      $region31: #{tpu_custom_call.1} parent=5 // pred_region
        // Predicated region
        $region33: #{tpu_custom_call.1} parent=31 // pred_check
          %p205 = pneg %p38
        $region34: #{tpu_custom_call.1} parent=31 // pred_check_branch
          %207 = sbr.rel (%p205) target = $region36
        $region35: #{tpu_custom_call.1} parent=31 // pred_region
          %s208 = sand.u32 %s28, 1
          %s209 = scalar_lea.sflag [#allocation5], %s208
          %s210 = sand.u32 %s28, 1
          %s211 = smul.addr %s210, 128
          %s212 = scalar_lea.vmem [#allocation4], %s211
          %s214 = ssub.s32 2048, 2048
          %215 = vsyncadd %s209, %s214
          %s216 = smul.addr %s18, 32
          %s217 = smul.addr %s216, 64
          %s218 = scalar_lea.hbm %s0, %s217
          %s219 = sshll.u32 %s212, 4
          %s220 = int_to_ptr.vmem [resolvable:$true] %s219
          %225 = dma.hbm_to_vmem [thread:$0]  %s218, 2048, %s220, %s209, 128, 128, 8
        $region36: #{tpu_custom_call.1} parent=31 // pred_fallthru
          _
      $region32: #{tpu_custom_call.1} parent=5 // pred_fallthru
        _
      %p226 = scmp.le.s32.totalorder 1, %s18
      %p227 = scmp.lt.s32.totalorder %s18, 3
      %p228 = pnand %p226, %p227
      %p229 = pneg %p228
      // Predicated region
      $region37: #{tpu_custom_call.1} parent=5 // pred_check
        _
      $region38: #{tpu_custom_call.1} parent=5 // pred_check_branch
        %231 = sbr.rel (%p228) target = $region40
      $region39: #{tpu_custom_call.1} parent=5 // pred_region
        %s232 = ssub.s32 %s18, 1
        %s233 = sand.u32 %s31, 1
        %s234 = scalar_lea.sflag [#allocation5], %s233
        %s235 = sand.u32 %s31, 1
        %s236 = smul.addr %s235, 128
        %s237 = scalar_lea.vmem [#allocation4], %s236
        // Predicated region
        $region41: #{tpu_custom_call.1} parent=39 // pred_check
          %p238 = pneg %p44
        $region42: #{tpu_custom_call.1} parent=39 // pred_check_branch
          %240 = sbr.rel (%p238) target = $region44
        $region43: #{tpu_custom_call.1} parent=39 // pred_region
          %241 = dma.done %s234, 2048
        $region44: #{tpu_custom_call.1} parent=39 // pred_fallthru
          _
        // Predicated region
        $region45: #{tpu_custom_call.1} parent=39 // pred_check
          %p242 = pneg %p65
        $region46: #{tpu_custom_call.1} parent=39 // pred_check_branch
          %244 = sbr.rel (%p242) target = $region48
        $region47: #{tpu_custom_call.1} parent=39 // pred_region
          %245 = dma.done [#allocation8], 9216
        $region48: #{tpu_custom_call.1} parent=39 // pred_fallthru
          _
        // Predicated region
        $region49: #{tpu_custom_call.1} parent=39 // pred_check
          %p246 = pneg %p107
        $region50: #{tpu_custom_call.1} parent=39 // pred_check_branch
          %248 = sbr.rel (%p246) target = $region52
        $region51: #{tpu_custom_call.1} parent=39 // pred_region
          %249 = dma.done [#allocation8], 9216
        $region52: #{tpu_custom_call.1} parent=39 // pred_fallthru
          _
        %s250 = sand.u32 %s31, 1
        %s251 = scalar_lea.sflag [#allocation5], %s250
        %s252 = sand.u32 %s31, 1
        %s253 = smul.addr %s252, 128
        %s254 = scalar_lea.vmem [#allocation4], %s253
        %p255 = pneg %p44
        %p256 = pneg %p41
        %p257 = pneg %p65
        %p258 = pneg %p62
        %p259 = pneg %p86
        %p260 = pneg %p83
        %p261 = pneg %p107
        %p262 = pneg %p104
        %p263 = pneg %p128
        %p264 = pneg %p125
        %p265 = pneg %p154
        %p266 = pneg %p151
        %s267 = sand.u32 %s141, 1
        %s268 = scalar_lea.sflag [#allocation6], %s267
        %s269 = sand.u32 %s141, 1
        %s270 = smul.addr %s269, 64
        %s271 = scalar_lea.vmem [#allocation10], %s270
        %v276 = vld [vmem:[%s237] sm:$0xf]
        %v277 = vld [vmem:[%s237 + $0x8] sm:$0xf]
        %v278 = vld [vmem:[%s237 + $0x10] sm:$0xf]
        %v279 = vld [vmem:[%s237 + $0x18] sm:$0xf]
        %v280 = vld [vmem:[%s237 + $0x20] sm:$0xf]
        %v281 = vld [vmem:[%s237 + $0x28] sm:$0xf]
        %v282 = vld [vmem:[%s237 + $0x30] sm:$0xf]
        %v283 = vld [vmem:[%s237 + $0x38] sm:$0xf]
        %v284 = vld [vmem:[%s237 + $0x40] sm:$0xf]
        %v285 = vld [vmem:[%s237 + $0x48] sm:$0xf]
        %v286 = vld [vmem:[%s237 + $0x50] sm:$0xf]
        %v287 = vld [vmem:[%s237 + $0x58] sm:$0xf]
        %v288 = vld [vmem:[%s237 + $0x60] sm:$0xf]
        %v289 = vld [vmem:[%s237 + $0x68] sm:$0xf]
        %v290 = vld [vmem:[%s237 + $0x70] sm:$0xf]
        %v291 = vld [vmem:[%s237 + $0x78] sm:$0xf]
        %v292 = vld [vmem:[%s237 + $0x4] sm:$0xf]
        %v293 = vld [vmem:[%s237 + $0xc] sm:$0xf]
        %v294 = vld [vmem:[%s237 + $0x14] sm:$0xf]
        %v295 = vld [vmem:[%s237 + $0x1c] sm:$0xf]
        %v296 = vld [vmem:[%s237 + $0x24] sm:$0xf]
        %v297 = vld [vmem:[%s237 + $0x2c] sm:$0xf]
        %v298 = vld [vmem:[%s237 + $0x34] sm:$0xf]
        %v299 = vld [vmem:[%s237 + $0x3c] sm:$0xf]
        %v300 = vld [vmem:[%s237 + $0x44] sm:$0xf]
        %v301 = vld [vmem:[%s237 + $0x4c] sm:$0xf]
        %v302 = vld [vmem:[%s237 + $0x54] sm:$0xf]
        %v303 = vld [vmem:[%s237 + $0x5c] sm:$0xf]
        %v304 = vld [vmem:[%s237 + $0x64] sm:$0xf]
        %v305 = vld [vmem:[%s237 + $0x6c] sm:$0xf]
        %v306 = vld [vmem:[%s237 + $0x74] sm:$0xf]
        %v307 = vld [vmem:[%s237 + $0x7c] sm:$0xf]
        %v308 = vmax.bf16 %v276, %v292
        %v309 = vmax.bf16 %v277, %v293
        %v310 = vmax.bf16 %v278, %v294
        %v311 = vmax.bf16 %v279, %v295
        %v312 = vmax.bf16 %v280, %v296
        %v313 = vmax.bf16 %v281, %v297
        %v314 = vmax.bf16 %v282, %v298
        %v315 = vmax.bf16 %v283, %v299
        %v316 = vmax.bf16 %v284, %v300
        %v317 = vmax.bf16 %v285, %v301
        %v318 = vmax.bf16 %v286, %v302
        %v319 = vmax.bf16 %v287, %v303
        %v320 = vmax.bf16 %v288, %v304
        %v321 = vmax.bf16 %v289, %v305
        %v322 = vmax.bf16 %v290, %v306
        %v323 = vmax.bf16 %v291, %v307
        %vm324 = vcmask 1043456
        %v327 = vsel %vm324, %v308, 4286644096
        %v330 = vsel %vm324, %v309, 4286644096
        %v332 = vmax.bf16 %v327, %v330
        %v334 = vsel %vm324, %v310, 4286644096
        %v337 = vsel %vm324, %v311, 4286644096
        %v339 = vmax.bf16 %v334, %v337
        %v341 = vsel %vm324, %v312, 4286644096
        %v344 = vsel %vm324, %v313, 4286644096
        %v346 = vmax.bf16 %v341, %v344
        %v348 = vsel %vm324, %v314, 4286644096
        %v351 = vsel %vm324, %v315, 4286644096
        %v353 = vmax.bf16 %v348, %v351
        %v355 = vsel %vm324, %v316, 4286644096
        %v358 = vsel %vm324, %v317, 4286644096
        %v360 = vmax.bf16 %v355, %v358
        %v362 = vsel %vm324, %v318, 4286644096
        %v365 = vsel %vm324, %v319, 4286644096
        %v367 = vmax.bf16 %v362, %v365
        %v369 = vsel %vm324, %v320, 4286644096
        %v372 = vsel %vm324, %v321, 4286644096
        %v374 = vmax.bf16 %v369, %v372
        %v376 = vsel %vm324, %v322, 4286644096
        %v379 = vsel %vm324, %v323, 4286644096
        %v381 = vmax.bf16 %v376, %v379
        %382 = vst [vmem:[#allocation2] sm:$0xff] 0
        %383 = vst [vmem:[#allocation2 + $0x28] sm:$0xff] 0
        %v392 = vunpack.c.l.b16 %v332
        %v393 = vunpack.c.l.b16 %v339
        %v394 = vunpack.c.l.b16 %v346
        %v395 = vunpack.c.l.b16 %v353
        %v396 = vunpack.c.l.b16 %v360
        %v397 = vunpack.c.l.b16 %v367
        %v398 = vunpack.c.l.b16 %v374
        %v399 = vunpack.c.l.b16 %v381
        %v400 = vpack.c.b16 %v393, %v392
        %v401 = vpack.c.b16 %v395, %v394
        %v402 = vpack.c.b16 %v397, %v396
        %v403 = vpack.c.b16 %v399, %v398
        %408 = vst [vmem:[#allocation2 + $0x8] sm:$0xff] %v400
        %409 = vst [vmem:[#allocation2 + $0x10] sm:$0xff] %v401
        %410 = vst [vmem:[#allocation2 + $0x18] sm:$0xff] %v402
        %411 = vst [vmem:[#allocation2 + $0x20] sm:$0xff] %v403
        %v412 = vlaneseq
        %v413 = vshrl.u32 %v412, 7
        %v414 = vadd.s32 %v413, 8
        %v415 = vadd.s32 %v413, 16
        %v416 = vadd.s32 %v413, 24
        %v417 = vadd.s32 %v413, 32
        %v418 = vadd.s32 %v413, 40
        %v419 = vadd.s32 %v413, 48
        %v420 = vadd.s32 %v413, 56
        %vm421 = vcmp.lt.s32.totalorder %v413, 0
        %v422 = vsub.s32 0, %v413
        %v423 = vsel %vm421, %v422, %v413
        %v424 = vshrl.u32 %v423, 3
        %v425 = vand.u32 %v423, 7
        %v426 = vsub.s32 0, %v425
        %v427 = vsel %vm421, %v426, %v425
        %vm428 = vcmp.lt.s32.totalorder %v414, 0
        %v429 = vsub.s32 0, %v414
        %v430 = vsel %vm428, %v429, %v414
        %v431 = vshrl.u32 %v430, 3
        %v432 = vand.u32 %v430, 7
        %v433 = vsub.s32 0, %v432
        %v434 = vsel %vm428, %v433, %v432
        %vm435 = vcmp.lt.s32.totalorder %v415, 0
        %v436 = vsub.s32 0, %v415
        %v437 = vsel %vm435, %v436, %v415
        %v438 = vshrl.u32 %v437, 3
        %v439 = vand.u32 %v437, 7
        %v440 = vsub.s32 0, %v439
        %v441 = vsel %vm435, %v440, %v439
        %vm442 = vcmp.lt.s32.totalorder %v416, 0
        %v443 = vsub.s32 0, %v416
        %v444 = vsel %vm442, %v443, %v416
        %v445 = vshrl.u32 %v444, 3
        %v446 = vand.u32 %v444, 7
        %v447 = vsub.s32 0, %v446
        %v448 = vsel %vm442, %v447, %v446
        %vm449 = vcmp.lt.s32.totalorder %v417, 0
        %v450 = vsub.s32 0, %v417
        %v451 = vsel %vm449, %v450, %v417
        %v452 = vshrl.u32 %v451, 3
        %v453 = vand.u32 %v451, 7
        %v454 = vsub.s32 0, %v453
        %v455 = vsel %vm449, %v454, %v453
        %vm456 = vcmp.lt.s32.totalorder %v418, 0
        %v457 = vsub.s32 0, %v418
        %v458 = vsel %vm456, %v457, %v418
        %v459 = vshrl.u32 %v458, 3
        %v460 = vand.u32 %v458, 7
        %v461 = vsub.s32 0, %v460
        %v462 = vsel %vm456, %v461, %v460
        %vm463 = vcmp.lt.s32.totalorder %v419, 0
        %v464 = vsub.s32 0, %v419
        %v465 = vsel %vm463, %v464, %v419
        %v466 = vshrl.u32 %v465, 3
        %v467 = vand.u32 %v465, 7
        %v468 = vsub.s32 0, %v467
        %v469 = vsel %vm463, %v468, %v467
        %vm470 = vcmp.lt.s32.totalorder %v420, 0
        %v471 = vsub.s32 0, %v420
        %v472 = vsel %vm470, %v471, %v420
        %v473 = vshrl.u32 %v472, 3
        %v474 = vand.u32 %v472, 7
        %v475 = vsub.s32 0, %v474
        %v476 = vsel %vm470, %v475, %v474
        %vm477 = vcmp.ne.s32.totalorder %v427, 0
        %vm478 = vcmp.ne.s32.totalorder %v434, 0
        %vm479 = vcmp.ne.s32.totalorder %v441, 0
        %vm480 = vcmp.ne.s32.totalorder %v448, 0
        %vm481 = vcmp.ne.s32.totalorder %v455, 0
        %vm482 = vcmp.ne.s32.totalorder %v462, 0
        %vm483 = vcmp.ne.s32.totalorder %v469, 0
        %vm484 = vcmp.ne.s32.totalorder %v476, 0
        %vm485 = vcmp.lt.s32.totalorder %v427, 0
        %vm486 = vcmp.lt.s32.totalorder %v434, 0
        %vm487 = vcmp.lt.s32.totalorder %v441, 0
        %vm488 = vcmp.lt.s32.totalorder %v448, 0
        %vm489 = vcmp.lt.s32.totalorder %v455, 0
        %vm490 = vcmp.lt.s32.totalorder %v462, 0
        %vm491 = vcmp.lt.s32.totalorder %v469, 0
        %vm492 = vcmp.lt.s32.totalorder %v476, 0
        %vm493 = vmand %vm485, %vm477
        %vm494 = vmand %vm486, %vm478
        %vm495 = vmand %vm487, %vm479
        %vm496 = vmand %vm488, %vm480
        %vm497 = vmand %vm489, %vm481
        %vm498 = vmand %vm490, %vm482
        %vm499 = vmand %vm491, %vm483
        %vm500 = vmand %vm492, %vm484
        %v501 = vadd.s32 %v427, 8
        %v502 = vadd.s32 %v434, 8
        %v503 = vadd.s32 %v441, 8
        %v504 = vadd.s32 %v448, 8
        %v505 = vadd.s32 %v455, 8
        %v506 = vadd.s32 %v462, 8
        %v507 = vadd.s32 %v469, 8
        %v508 = vadd.s32 %v476, 8
        %v509 = vsel %vm493, %v501, %v427
        %v510 = vsel %vm494, %v502, %v434
        %v511 = vsel %vm495, %v503, %v441
        %v512 = vsel %vm496, %v504, %v448
        %v513 = vsel %vm497, %v505, %v455
        %v514 = vsel %vm498, %v506, %v462
        %v515 = vsel %vm499, %v507, %v469
        %v516 = vsel %vm500, %v508, %v476
        %vm517 = vcmp.ne.s32.totalorder %v509, 0
        %vm518 = vcmp.ne.s32.totalorder %v510, 0
        %vm519 = vcmp.ne.s32.totalorder %v511, 0
        %vm520 = vcmp.ne.s32.totalorder %v512, 0
        %vm521 = vcmp.ne.s32.totalorder %v513, 0
        %vm522 = vcmp.ne.s32.totalorder %v514, 0
        %vm523 = vcmp.ne.s32.totalorder %v515, 0
        %vm524 = vcmp.ne.s32.totalorder %v516, 0
        %vm525 = vcmp.ne.s32.totalorder %v509, 7
        %vm526 = vcmp.ne.s32.totalorder %v510, 7
        %vm527 = vcmp.ne.s32.totalorder %v511, 7
        %vm528 = vcmp.ne.s32.totalorder %v512, 7
        %vm529 = vcmp.ne.s32.totalorder %v513, 7
        %vm530 = vcmp.ne.s32.totalorder %v514, 7
        %vm531 = vcmp.ne.s32.totalorder %v515, 7
        %vm532 = vcmp.ne.s32.totalorder %v516, 7
        %v533 = vld [vmem:[#allocation2] sm:$0xf8]
        %v534 = vld [vmem:[#allocation2 + $0x8] sm:$0xff]
        %v535 = vld [vmem:[#allocation2 + $0x10] sm:$0xff]
        %v536 = vld [vmem:[#allocation2 + $0x18] sm:$0xff]
        %v537 = vld [vmem:[#allocation2 + $0x20] sm:$0xf]
        %v538 = vsel %vm517, 1, 0
        %v539 = vsel %vm518, 1, 0
        %v540 = vsel %vm519, 1, 0
        %v541 = vsel %vm520, 1, 0
        %v542 = vsel %vm521, 1, 0
        %v543 = vsel %vm522, 1, 0
        %v544 = vsel %vm523, 1, 0
        %v545 = vsel %vm524, 1, 0
        %vm546 = vcmp.eq.s32.totalorder %v538, 1
        %vm547 = vcmp.eq.s32.totalorder %v539, 1
        %vm548 = vcmp.eq.s32.totalorder %v540, 1
        %vm549 = vcmp.eq.s32.totalorder %v541, 1
        %vm550 = vcmp.eq.s32.totalorder %v542, 1
        %vm551 = vcmp.eq.s32.totalorder %v543, 1
        %vm552 = vcmp.eq.s32.totalorder %v544, 1
        %vm553 = vcmp.eq.s32.totalorder %v545, 1
        %vm554 = vmpackc.low %vm546, %vm546
        %vm555 = vmpackc.low %vm547, %vm547
        %vm556 = vmpackc.low %vm548, %vm548
        %vm557 = vmpackc.low %vm549, %vm549
        %vm558 = vmpackc.low %vm550, %vm550
        %vm559 = vmpackc.low %vm551, %vm551
        %vm560 = vmpackc.low %vm552, %vm552
        %vm561 = vmpackc.low %vm553, %vm553
        %v562 = vsel %vm554, 65537, 0
        %v563 = vsel %vm555, 65537, 0
        %v564 = vsel %vm556, 65537, 0
        %v565 = vsel %vm557, 65537, 0
        %v566 = vsel %vm558, 65537, 0
        %v567 = vsel %vm559, 65537, 0
        %v568 = vsel %vm560, 65537, 0
        %v569 = vsel %vm561, 65537, 0
        %v570 = vunpack.c.l.b16 %v562
        %v571 = vunpack.c.l.b16 %v563
        %v572 = vunpack.c.l.b16 %v564
        %v573 = vunpack.c.l.b16 %v565
        %v574 = vunpack.c.l.b16 %v566
        %v575 = vunpack.c.l.b16 %v567
        %v576 = vunpack.c.l.b16 %v568
        %v577 = vunpack.c.l.b16 %v569
        %v578 = vpack.c.b16 %v571, %v570
        %v579 = vpack.c.b16 %v573, %v572
        %v580 = vpack.c.b16 %v575, %v574
        %v581 = vpack.c.b16 %v577, %v576
        %vm582 = vsmask.f32 3328
        %v584 = vshrl.u32 %v578, 16
        %v586 = vrot.slane %v584, 4
        %v587 = vshll.u32 %v578, 16
        %v589 = vrot.slane %v587, 5
        %v590 = vor.u32 %v586, %v589
        %v592 = vshrl.u32 %v579, 16
        %v594 = vrot.slane %v592, 4
        %v595 = vshll.u32 %v579, 16
        %v597 = vrot.slane %v595, 5
        %v598 = vor.u32 %v594, %v597
        %v599 = vsel %vm582, %v590, %v598
        %v601 = vshrl.u32 %v580, 16
        %v603 = vrot.slane %v601, 4
        %v604 = vshll.u32 %v580, 16
        %v606 = vrot.slane %v604, 5
        %v607 = vor.u32 %v603, %v606
        %v608 = vsel %vm582, %v598, %v607
        %v610 = vshrl.u32 %v581, 16
        %v612 = vrot.slane %v610, 4
        %v613 = vshll.u32 %v581, 16
        %v615 = vrot.slane %v613, 5
        %v616 = vor.u32 %v612, %v615
        %v617 = vsel %vm582, %v607, %v616
        %vm618 = vcmp.ne.s16.totalorder %v590, 0
        %vm619 = vcmp.ne.s16.totalorder %v599, 0
        %vm620 = vcmp.ne.s16.totalorder %v608, 0
        %vm621 = vcmp.ne.s16.totalorder %v617, 0
        %vm622 = vcmp.ne.s16.totalorder %v616, 0
        %v623 = vsel %vm618, %v533, 0
        %v624 = vsel %vm619, %v534, 0
        %v625 = vsel %vm620, %v535, 0
        %v626 = vsel %vm621, %v536, 0
        %v627 = vsel %vm622, %v537, 0
        %v628 = vld [vmem:[#allocation7] sm:$0xf]
        %v629 = vld [vmem:[#allocation7 + $0x4] sm:$0xf]
        %v630 = vld [vmem:[#allocation7 + $0x8] sm:$0xf]
        %v631 = vld [vmem:[#allocation7 + $0xc] sm:$0xf]
        %v632 = vld [vmem:[#allocation7 + $0x10] sm:$0xf]
        %v633 = vld [vmem:[#allocation7 + $0x14] sm:$0xf]
        %v634 = vld [vmem:[#allocation7 + $0x18] sm:$0xf]
        %v635 = vld [vmem:[#allocation7 + $0x1c] sm:$0xf]
        %v636 = vld [vmem:[#allocation7 + $0x20] sm:$0xf]
        %v637 = vld [vmem:[#allocation7 + $0x24] sm:$0xf]
        %v638 = vld [vmem:[#allocation7 + $0x28] sm:$0xf]
        %v639 = vld [vmem:[#allocation7 + $0x2c] sm:$0xf]
        %v640 = vld [vmem:[#allocation7 + $0x30] sm:$0xf]
        %v641 = vld [vmem:[#allocation7 + $0x34] sm:$0xf]
        %v642 = vld [vmem:[#allocation7 + $0x38] sm:$0xf]
        %v643 = vld [vmem:[#allocation7 + $0x3c] sm:$0xf]
        %v644 = vld [vmem:[#allocation2] sm:$0xf0]
        %s645 = scalar_lea.vmem [#allocation7], 64
        %v646 = vld [vmem:[%s645] sm:$0xf]
        %v647 = vld [vmem:[%s645 + $0x4] sm:$0xf]
        %v648 = vld [vmem:[%s645 + $0x8] sm:$0xf]
        %v649 = vld [vmem:[%s645 + $0xc] sm:$0xf]
        %v650 = vld [vmem:[%s645 + $0x10] sm:$0xf]
        %v651 = vld [vmem:[%s645 + $0x14] sm:$0xf]
        %v652 = vld [vmem:[%s645 + $0x18] sm:$0xf]
        %v653 = vld [vmem:[%s645 + $0x1c] sm:$0xf]
        %v654 = vld [vmem:[%s645 + $0x20] sm:$0xf]
        %v655 = vld [vmem:[%s645 + $0x24] sm:$0xf]
        %v656 = vld [vmem:[%s645 + $0x28] sm:$0xf]
        %v657 = vld [vmem:[%s645 + $0x2c] sm:$0xf]
        %v658 = vld [vmem:[%s645 + $0x30] sm:$0xf]
        %v659 = vld [vmem:[%s645 + $0x34] sm:$0xf]
        %v660 = vld [vmem:[%s645 + $0x38] sm:$0xf]
        %v661 = vld [vmem:[%s645 + $0x3c] sm:$0xf]
        %vm667 = vcmask 1043456
        %v668 = vrot.slane %v644, 4
        %v669 = vrot.slane %v534, 4
        %v670 = vsel %vm667, %v668, %v669
        %v671 = vrot.slane %v535, 4
        %v672 = vsel %vm667, %v669, %v671
        %v673 = vrot.slane %v536, 4
        %v674 = vsel %vm667, %v671, %v673
        %v675 = vrot.slane %v537, 4
        %v676 = vsel %vm667, %v673, %v675
        %v697 = vunpack.c.l.b16 %v646
        %v698 = vunpack.c.l.b16 %v647
        %v699 = vunpack.c.l.b16 %v648
        %v700 = vunpack.c.l.b16 %v649
        %v701 = vunpack.c.l.b16 %v650
        %v702 = vunpack.c.l.b16 %v651
        %v703 = vunpack.c.l.b16 %v652
        %v704 = vunpack.c.l.b16 %v653
        %v705 = vunpack.c.l.b16 %v654
        %v706 = vunpack.c.l.b16 %v655
        %v707 = vunpack.c.l.b16 %v656
        %v708 = vunpack.c.l.b16 %v657
        %v709 = vunpack.c.l.b16 %v658
        %v710 = vunpack.c.l.b16 %v659
        %v711 = vunpack.c.l.b16 %v660
        %v712 = vunpack.c.l.b16 %v661
        %v713 = vpack.c.b16 %v698, %v697
        %v714 = vpack.c.b16 %v700, %v699
        %v715 = vpack.c.b16 %v702, %v701
        %v716 = vpack.c.b16 %v704, %v703
        %v717 = vpack.c.b16 %v706, %v705
        %v718 = vpack.c.b16 %v708, %v707
        %v719 = vpack.c.b16 %v710, %v709
        %v720 = vpack.c.b16 %v712, %v711
        %729 = vmatprep.subr.bf16.mxu0 0
        %730 = vmatpush1.bf16.msra.mxu0 %v713
        %731 = vmatprep.subr.bf16.mxu0 0
        %732 = vmatpush1.bf16.msra.mxu0 %v714
        %733 = vmatprep.subr.bf16.mxu0 0
        %734 = vmatpush1.bf16.msra.mxu0 %v715
        %735 = vmatprep.subr.bf16.mxu0 0
        %736 = vmatpush1.bf16.msra.mxu0 %v716
        %737 = vmatprep.subr.bf16.mxu0 0
        %738 = vmatpush1.bf16.msra.mxu0 %v717
        %739 = vmatprep.subr.bf16.mxu0 0
        %740 = vmatpush1.bf16.msra.mxu0 %v718
        %741 = vmatprep.subr.bf16.mxu0 0
        %742 = vmatpush1.bf16.msra.mxu0 %v719
        %743 = vmatprep.subr.bf16.mxu0 0
        %744 = vmatpush1.bf16.msra.mxu0 %v720
        %745 = vmatprep.subr.bf16.mxu0 0
        %746 = vmatpush1.bf16.msra.mxu0 0
        %747 = vmatprep.subr.bf16.mxu0 0
        %748 = vmatpush1.bf16.msra.mxu0 0
        %749 = vmatprep.subr.bf16.mxu0 0
        %750 = vmatpush1.bf16.msra.mxu0 0
        %751 = vmatprep.subr.bf16.mxu0 0
        %752 = vmatpush1.bf16.msra.mxu0 0
        %753 = vmatprep.subr.bf16.mxu0 0
        %754 = vmatpush1.bf16.msra.mxu0 0
        %755 = vmatprep.subr.bf16.mxu0 0
        %756 = vmatpush1.bf16.msra.mxu0 0
        %757 = vmatprep.subr.bf16.mxu0 0
        %758 = vmatpush1.bf16.msra.mxu0 0
        %759 = vmatprep.subr.bf16.mxu0 0
        %760 = vmatpush1.bf16.msra.mxu0 0
        %761 = vmatprep.mubr.bf16.mxu0 0
        %762 = vmatmul.mubr.bf16.gmra.mrb[0].mxu0 %v670
        %v763 = vpop.f32.mrb[0].mxu0
        %v764 = vadd.f32 0.0, %v763
        %v765 = vpop.f32.mrb[0].mxu0
        %v766 = vpop.f32.mrb[0].mxu0
        %v767 = vadd.f32 0.0, %v766
        %v768 = vpop.f32.mrb[0].mxu0
        %769 = vmatprep.mubr.bf16.mxu0 0
        %770 = vmatmul.mubr.bf16.gmra.mrb[0].mxu0 %v672
        %v771 = vpop.f32.mrb[0].mxu0
        %v772 = vadd.f32 0.0, %v771
        %v773 = vpop.f32.mrb[0].mxu0
        %v774 = vpop.f32.mrb[0].mxu0
        %v775 = vadd.f32 0.0, %v774
        %v776 = vpop.f32.mrb[0].mxu0
        %777 = vmatprep.mubr.bf16.mxu0 0
        %778 = vmatmul.mubr.bf16.gmra.mrb[0].mxu0 %v674
        %v779 = vpop.f32.mrb[0].mxu0
        %v780 = vadd.f32 0.0, %v779
        %v781 = vpop.f32.mrb[0].mxu0
        %v782 = vpop.f32.mrb[0].mxu0
        %v783 = vadd.f32 0.0, %v782
        %v784 = vpop.f32.mrb[0].mxu0
        %785 = vmatprep.mubr.bf16.mxu0 0
        %786 = vmatmul.mubr.bf16.gmra.mrb[0].mxu0 %v676
        %v787 = vpop.f32.mrb[0].mxu0
        %v788 = vadd.f32 0.0, %v787
        %v789 = vpop.f32.mrb[0].mxu0
        %v790 = vpop.f32.mrb[0].mxu0
        %v791 = vadd.f32 0.0, %v790
        %v792 = vpop.f32.mrb[0].mxu0
        %793 = vdwg.mxu0
        %vm794 = vsmask.f32 4352
        %v796 = vshrl.u32 %v623, 16
        %v798 = vrot.slane %v796, 3
        %v799 = vshll.u32 %v623, 16
        %v801 = vrot.slane %v799, 4
        %v802 = vor.u32 %v798, %v801
        %v804 = vshrl.u32 %v624, 16
        %v806 = vrot.slane %v804, 3
        %v807 = vshll.u32 %v624, 16
        %v809 = vrot.slane %v807, 4
        %v810 = vor.u32 %v806, %v809
        %v811 = vsel %vm794, %v802, %v810
        %v813 = vshrl.u32 %v625, 16
        %v815 = vrot.slane %v813, 3
        %v816 = vshll.u32 %v625, 16
        %v818 = vrot.slane %v816, 4
        %v819 = vor.u32 %v815, %v818
        %v820 = vsel %vm794, %v810, %v819
        %v822 = vshrl.u32 %v626, 16
        %v824 = vrot.slane %v822, 3
        %v825 = vshll.u32 %v626, 16
        %v827 = vrot.slane %v825, 4
        %v828 = vor.u32 %v824, %v827
        %v829 = vsel %vm794, %v819, %v828
        %v831 = vshrl.u32 %v627, 16
        %v833 = vrot.slane %v831, 3
        %v834 = vshll.u32 %v627, 16
        %v836 = vrot.slane %v834, 4
        %v837 = vor.u32 %v833, %v836
        %v838 = vsel %vm794, %v828, %v837
        %v859 = vunpack.c.l.b16 %v628
        %v860 = vunpack.c.l.b16 %v629
        %v861 = vunpack.c.l.b16 %v630
        %v862 = vunpack.c.l.b16 %v631
        %v863 = vunpack.c.l.b16 %v632
        %v864 = vunpack.c.l.b16 %v633
        %v865 = vunpack.c.l.b16 %v634
        %v866 = vunpack.c.l.b16 %v635
        %v867 = vunpack.c.l.b16 %v636
        %v868 = vunpack.c.l.b16 %v637
        %v869 = vunpack.c.l.b16 %v638
        %v870 = vunpack.c.l.b16 %v639
        %v871 = vunpack.c.l.b16 %v640
        %v872 = vunpack.c.l.b16 %v641
        %v873 = vunpack.c.l.b16 %v642
        %v874 = vunpack.c.l.b16 %v643
        %v875 = vpack.c.b16 %v860, %v859
        %v876 = vpack.c.b16 %v862, %v861
        %v877 = vpack.c.b16 %v864, %v863
        %v878 = vpack.c.b16 %v866, %v865
        %v879 = vpack.c.b16 %v868, %v867
        %v880 = vpack.c.b16 %v870, %v869
        %v881 = vpack.c.b16 %v872, %v871
        %v882 = vpack.c.b16 %v874, %v873
        %891 = vmatprep.subr.bf16.mxu0 0
        %892 = vmatpush1.bf16.msra.mxu0 %v875
        %893 = vmatprep.subr.bf16.mxu0 0
        %894 = vmatpush1.bf16.msra.mxu0 %v876
        %895 = vmatprep.subr.bf16.mxu0 0
        %896 = vmatpush1.bf16.msra.mxu0 %v877
        %897 = vmatprep.subr.bf16.mxu0 0
        %898 = vmatpush1.bf16.msra.mxu0 %v878
        %899 = vmatprep.subr.bf16.mxu0 0
        %900 = vmatpush1.bf16.msra.mxu0 %v879
        %901 = vmatprep.subr.bf16.mxu0 0
        %902 = vmatpush1.bf16.msra.mxu0 %v880
        %903 = vmatprep.subr.bf16.mxu0 0
        %904 = vmatpush1.bf16.msra.mxu0 %v881
        %905 = vmatprep.subr.bf16.mxu0 0
        %906 = vmatpush1.bf16.msra.mxu0 %v882
        %907 = vmatprep.subr.bf16.mxu0 0
        %908 = vmatpush1.bf16.msra.mxu0 0
        %909 = vmatprep.subr.bf16.mxu0 0
        %910 = vmatpush1.bf16.msra.mxu0 0
        %911 = vmatprep.subr.bf16.mxu0 0
        %912 = vmatpush1.bf16.msra.mxu0 0
        %913 = vmatprep.subr.bf16.mxu0 0
        %914 = vmatpush1.bf16.msra.mxu0 0
        %915 = vmatprep.subr.bf16.mxu0 0
        %916 = vmatpush1.bf16.msra.mxu0 0
        %917 = vmatprep.subr.bf16.mxu0 0
        %918 = vmatpush1.bf16.msra.mxu0 0
        %919 = vmatprep.subr.bf16.mxu0 0
        %920 = vmatpush1.bf16.msra.mxu0 0
        %921 = vmatprep.subr.bf16.mxu0 0
        %922 = vmatpush1.bf16.msra.mxu0 0
        %923 = vmatprep.mubr.bf16.mxu0 0
        %924 = vmatmul.mubr.bf16.gmra.mrb[0].mxu0 %v811
        %v925 = vpop.f32.mrb[0].mxu0
        %v926 = vadd.f32 %v764, %v925
        %v927 = vpop.f32.mrb[0].mxu0
        %v928 = vpop.f32.mrb[0].mxu0
        %v929 = vadd.f32 %v767, %v928
        %v930 = vpop.f32.mrb[0].mxu0
        %931 = vmatprep.mubr.bf16.mxu0 0
        %932 = vmatmul.mubr.bf16.gmra.mrb[0].mxu0 %v820
        %v933 = vpop.f32.mrb[0].mxu0
        %v934 = vadd.f32 %v772, %v933
        %v935 = vpop.f32.mrb[0].mxu0
        %v936 = vpop.f32.mrb[0].mxu0
        %v937 = vadd.f32 %v775, %v936
        %v938 = vpop.f32.mrb[0].mxu0
        %939 = vmatprep.mubr.bf16.mxu0 0
        %940 = vmatmul.mubr.bf16.gmra.mrb[0].mxu0 %v829
        %v941 = vpop.f32.mrb[0].mxu0
        %v942 = vadd.f32 %v780, %v941
        %v943 = vpop.f32.mrb[0].mxu0
        %v944 = vpop.f32.mrb[0].mxu0
        %v945 = vadd.f32 %v783, %v944
        %v946 = vpop.f32.mrb[0].mxu0
        %947 = vmatprep.mubr.bf16.mxu0 0
        %948 = vmatmul.mubr.bf16.gmra.mrb[0].mxu0 %v838
        %v949 = vpop.f32.mrb[0].mxu0
        %v950 = vadd.f32 %v788, %v949
        %v951 = vpop.f32.mrb[0].mxu0
        %v952 = vpop.f32.mrb[0].mxu0
        %v953 = vadd.f32 %v791, %v952
        %v954 = vpop.f32.mrb[0].mxu0
        %955 = vdwg.mxu0
        %v956 = vld [vmem:[#allocation2 + $0x20] sm:$0x1f]
        %v957 = vsel %vm525, 1, 0
        %v958 = vsel %vm526, 1, 0
        %v959 = vsel %vm527, 1, 0
        %v960 = vsel %vm528, 1, 0
        %v961 = vsel %vm529, 1, 0
        %v962 = vsel %vm530, 1, 0
        %v963 = vsel %vm531, 1, 0
        %v964 = vsel %vm532, 1, 0
        %vm965 = vcmp.eq.s32.totalorder %v957, 1
        %vm966 = vcmp.eq.s32.totalorder %v958, 1
        %vm967 = vcmp.eq.s32.totalorder %v959, 1
        %vm968 = vcmp.eq.s32.totalorder %v960, 1
        %vm969 = vcmp.eq.s32.totalorder %v961, 1
        %vm970 = vcmp.eq.s32.totalorder %v962, 1
        %vm971 = vcmp.eq.s32.totalorder %v963, 1
        %vm972 = vcmp.eq.s32.totalorder %v964, 1
        %vm973 = vmpackc.low %vm965, %vm965
        %vm974 = vmpackc.low %vm966, %vm966
        %vm975 = vmpackc.low %vm967, %vm967
        %vm976 = vmpackc.low %vm968, %vm968
        %vm977 = vmpackc.low %vm969, %vm969
        %vm978 = vmpackc.low %vm970, %vm970
        %vm979 = vmpackc.low %vm971, %vm971
        %vm980 = vmpackc.low %vm972, %vm972
        %v981 = vsel %vm973, 65537, 0
        %v982 = vsel %vm974, 65537, 0
        %v983 = vsel %vm975, 65537, 0
        %v984 = vsel %vm976, 65537, 0
        %v985 = vsel %vm977, 65537, 0
        %v986 = vsel %vm978, 65537, 0
        %v987 = vsel %vm979, 65537, 0
        %v988 = vsel %vm980, 65537, 0
        %v989 = vunpack.c.l.b16 %v981
        %v990 = vunpack.c.l.b16 %v982
        %v991 = vunpack.c.l.b16 %v983
        %v992 = vunpack.c.l.b16 %v984
        %v993 = vunpack.c.l.b16 %v985
        %v994 = vunpack.c.l.b16 %v986
        %v995 = vunpack.c.l.b16 %v987
        %v996 = vunpack.c.l.b16 %v988
        %v997 = vpack.c.b16 %v990, %v989
        %v998 = vpack.c.b16 %v992, %v991
        %v999 = vpack.c.b16 %v994, %v993
        %v1000 = vpack.c.b16 %v996, %v995
        %v1002 = vshrl.u32 %v997, 16
        %v1004 = vrot.slane %v1002, 3
        %v1005 = vshll.u32 %v997, 16
        %v1007 = vrot.slane %v1005, 4
        %v1008 = vor.u32 %v1004, %v1007
        %v1010 = vshrl.u32 %v998, 16
        %v1012 = vrot.slane %v1010, 3
        %v1013 = vshll.u32 %v998, 16
        %v1015 = vrot.slane %v1013, 4
        %v1016 = vor.u32 %v1012, %v1015
        %v1017 = vsel %vm794, %v1008, %v1016
        %v1019 = vshrl.u32 %v999, 16
        %v1021 = vrot.slane %v1019, 3
        %v1022 = vshll.u32 %v999, 16
        %v1024 = vrot.slane %v1022, 4
        %v1025 = vor.u32 %v1021, %v1024
        %v1026 = vsel %vm794, %v1016, %v1025
        %v1028 = vshrl.u32 %v1000, 16
        %v1030 = vrot.slane %v1028, 3
        %v1031 = vshll.u32 %v1000, 16
        %v1033 = vrot.slane %v1031, 4
        %v1034 = vor.u32 %v1030, %v1033
        %v1035 = vsel %vm794, %v1025, %v1034
        %vm1036 = vcmp.ne.s16.totalorder %v1008, 0
        %vm1037 = vcmp.ne.s16.totalorder %v1017, 0
        %vm1038 = vcmp.ne.s16.totalorder %v1026, 0
        %vm1039 = vcmp.ne.s16.totalorder %v1035, 0
        %vm1040 = vcmp.ne.s16.totalorder %v1034, 0
        %v1041 = vsel %vm1036, %v644, 0
        %v1042 = vsel %vm1037, %v534, 0
        %v1043 = vsel %vm1038, %v535, 0
        %v1044 = vsel %vm1039, %v536, 0
        %v1045 = vsel %vm1040, %v956, 0
        %s1046 = scalar_lea.vmem [#allocation7], 128
        %v1047 = vld [vmem:[%s1046] sm:$0xf]
        %v1048 = vld [vmem:[%s1046 + $0x4] sm:$0xf]
        %v1049 = vld [vmem:[%s1046 + $0x8] sm:$0xf]
        %v1050 = vld [vmem:[%s1046 + $0xc] sm:$0xf]
        %v1051 = vld [vmem:[%s1046 + $0x10] sm:$0xf]
        %v1052 = vld [vmem:[%s1046 + $0x14] sm:$0xf]
        %v1053 = vld [vmem:[%s1046 + $0x18] sm:$0xf]
        %v1054 = vld [vmem:[%s1046 + $0x1c] sm:$0xf]
        %v1055 = vld [vmem:[%s1046 + $0x20] sm:$0xf]
        %v1056 = vld [vmem:[%s1046 + $0x24] sm:$0xf]
        %v1057 = vld [vmem:[%s1046 + $0x28] sm:$0xf]
        %v1058 = vld [vmem:[%s1046 + $0x2c] sm:$0xf]
        %v1059 = vld [vmem:[%s1046 + $0x30] sm:$0xf]
        %v1060 = vld [vmem:[%s1046 + $0x34] sm:$0xf]
        %v1061 = vld [vmem:[%s1046 + $0x38] sm:$0xf]
        %v1062 = vld [vmem:[%s1046 + $0x3c] sm:$0xf]
        %v1064 = vshrl.u32 %v1041, 16
        %v1066 = vrot.slane %v1064, 4
        %v1067 = vshll.u32 %v1041, 16
        %v1069 = vrot.slane %v1067, 5
        %v1070 = vor.u32 %v1066, %v1069
        %v1072 = vshrl.u32 %v1042, 16
        %v1074 = vrot.slane %v1072, 4
        %v1075 = vshll.u32 %v1042, 16
        %v1077 = vrot.slane %v1075, 5
        %v1078 = vor.u32 %v1074, %v1077
        %v1079 = vsel %vm582, %v1070, %v1078
        %v1081 = vshrl.u32 %v1043, 16
        %v1083 = vrot.slane %v1081, 4
        %v1084 = vshll.u32 %v1043, 16
        %v1086 = vrot.slane %v1084, 5
        %v1087 = vor.u32 %v1083, %v1086
        %v1088 = vsel %vm582, %v1078, %v1087
        %v1090 = vshrl.u32 %v1044, 16
        %v1092 = vrot.slane %v1090, 4
        %v1093 = vshll.u32 %v1044, 16
        %v1095 = vrot.slane %v1093, 5
        %v1096 = vor.u32 %v1092, %v1095
        %v1097 = vsel %vm582, %v1087, %v1096
        %v1099 = vshrl.u32 %v1045, 16
        %v1101 = vrot.slane %v1099, 4
        %v1102 = vshll.u32 %v1045, 16
        %v1104 = vrot.slane %v1102, 5
        %v1105 = vor.u32 %v1101, %v1104
        %v1106 = vsel %vm582, %v1096, %v1105
        %v1127 = vunpack.c.l.b16 %v1047
        %v1128 = vunpack.c.l.b16 %v1048
        %v1129 = vunpack.c.l.b16 %v1049
        %v1130 = vunpack.c.l.b16 %v1050
        %v1131 = vunpack.c.l.b16 %v1051
        %v1132 = vunpack.c.l.b16 %v1052
        %v1133 = vunpack.c.l.b16 %v1053
        %v1134 = vunpack.c.l.b16 %v1054
        %v1135 = vunpack.c.l.b16 %v1055
        %v1136 = vunpack.c.l.b16 %v1056
        %v1137 = vunpack.c.l.b16 %v1057
        %v1138 = vunpack.c.l.b16 %v1058
        %v1139 = vunpack.c.l.b16 %v1059
        %v1140 = vunpack.c.l.b16 %v1060
        %v1141 = vunpack.c.l.b16 %v1061
        %v1142 = vunpack.c.l.b16 %v1062
        %v1143 = vpack.c.b16 %v1128, %v1127
        %v1144 = vpack.c.b16 %v1130, %v1129
        %v1145 = vpack.c.b16 %v1132, %v1131
        %v1146 = vpack.c.b16 %v1134, %v1133
        %v1147 = vpack.c.b16 %v1136, %v1135
        %v1148 = vpack.c.b16 %v1138, %v1137
        %v1149 = vpack.c.b16 %v1140, %v1139
        %v1150 = vpack.c.b16 %v1142, %v1141
        %1159 = vmatprep.subr.bf16.mxu0 0
        %1160 = vmatpush1.bf16.msra.mxu0 %v1143
        %1161 = vmatprep.subr.bf16.mxu0 0
        %1162 = vmatpush1.bf16.msra.mxu0 %v1144
        %1163 = vmatprep.subr.bf16.mxu0 0
        %1164 = vmatpush1.bf16.msra.mxu0 %v1145
        %1165 = vmatprep.subr.bf16.mxu0 0
        %1166 = vmatpush1.bf16.msra.mxu0 %v1146
        %1167 = vmatprep.subr.bf16.mxu0 0
        %1168 = vmatpush1.bf16.msra.mxu0 %v1147
        %1169 = vmatprep.subr.bf16.mxu0 0
        %1170 = vmatpush1.bf16.msra.mxu0 %v1148
        %1171 = vmatprep.subr.bf16.mxu0 0
        %1172 = vmatpush1.bf16.msra.mxu0 %v1149
        %1173 = vmatprep.subr.bf16.mxu0 0
        %1174 = vmatpush1.bf16.msra.mxu0 %v1150
        %1175 = vmatprep.subr.bf16.mxu0 0
        %1176 = vmatpush1.bf16.msra.mxu0 0
        %1177 = vmatprep.subr.bf16.mxu0 0
        %1178 = vmatpush1.bf16.msra.mxu0 0
        %1179 = vmatprep.subr.bf16.mxu0 0
        %1180 = vmatpush1.bf16.msra.mxu0 0
        %1181 = vmatprep.subr.bf16.mxu0 0
        %1182 = vmatpush1.bf16.msra.mxu0 0
        %1183 = vmatprep.subr.bf16.mxu0 0
        %1184 = vmatpush1.bf16.msra.mxu0 0
        %1185 = vmatprep.subr.bf16.mxu0 0
        %1186 = vmatpush1.bf16.msra.mxu0 0
        %1187 = vmatprep.subr.bf16.mxu0 0
        %1188 = vmatpush1.bf16.msra.mxu0 0
        %1189 = vmatprep.subr.bf16.mxu0 0
        %1190 = vmatpush1.bf16.msra.mxu0 0
        %1191 = vmatprep.mubr.bf16.mxu0 0
        %1192 = vmatmul.mubr.bf16.gmra.mrb[0].mxu0 %v1079
        %v1193 = vpop.f32.mrb[0].mxu0
        %v1194 = vadd.f32 0.0, %v1193
        %v1195 = vpop.f32.mrb[0].mxu0
        %v1196 = vpop.f32.mrb[0].mxu0
        %v1197 = vadd.f32 0.0, %v1196
        %v1198 = vpop.f32.mrb[0].mxu0
        %1199 = vmatprep.mubr.bf16.mxu0 0
        %1200 = vmatmul.mubr.bf16.gmra.mrb[0].mxu0 %v1088
        %v1201 = vpop.f32.mrb[0].mxu0
        %v1202 = vadd.f32 0.0, %v1201
        %v1203 = vpop.f32.mrb[0].mxu0
        %v1204 = vpop.f32.mrb[0].mxu0
        %v1205 = vadd.f32 0.0, %v1204
        %v1206 = vpop.f32.mrb[0].mxu0
        %1207 = vmatprep.mubr.bf16.mxu0 0
        %1208 = vmatmul.mubr.bf16.gmra.mrb[0].mxu0 %v1097
        %v1209 = vpop.f32.mrb[0].mxu0
        %v1210 = vadd.f32 0.0, %v1209
        %v1211 = vpop.f32.mrb[0].mxu0
        %v1212 = vpop.f32.mrb[0].mxu0
        %v1213 = vadd.f32 0.0, %v1212
        %v1214 = vpop.f32.mrb[0].mxu0
        %1215 = vmatprep.mubr.bf16.mxu0 0
        %1216 = vmatmul.mubr.bf16.gmra.mrb[0].mxu0 %v1106
        %v1217 = vpop.f32.mrb[0].mxu0
        %v1218 = vadd.f32 0.0, %v1217
        %v1219 = vpop.f32.mrb[0].mxu0
        %v1220 = vpop.f32.mrb[0].mxu0
        %v1221 = vadd.f32 0.0, %v1220
        %v1222 = vpop.f32.mrb[0].mxu0
        %1223 = vdwg.mxu0
        %v1224 = vadd.f32 %v926, %v1194
        %v1225 = vadd.f32 %v929, %v1197
        %v1226 = vadd.f32 %v934, %v1202
        %v1227 = vadd.f32 %v937, %v1205
        %v1228 = vadd.f32 %v942, %v1210
        %v1229 = vadd.f32 %v945, %v1213
        %v1230 = vadd.f32 %v950, %v1218
        %v1231 = vadd.f32 %v953, %v1221
        %v1232 = vld [vmem:[#allocation2] sm:$0x80]
        %v1233 = vld [vmem:[#allocation2 + $0x20] sm:$0xff]
        %vm1234 = vsmask.f32 7424
        %v1235 = vrot.slane %v587, 1
        %v1236 = vor.u32 %v584, %v1235
        %v1237 = vrot.slane %v595, 1
        %v1238 = vsel %vm1234, %v1236, %v1237
        %v1239 = vor.u32 %v592, %v1237
        %v1240 = vrot.slane %v604, 1
        %v1241 = vsel %vm1234, %v1239, %v1240
        %v1242 = vor.u32 %v601, %v1240
        %v1243 = vrot.slane %v613, 1
        %v1244 = vsel %vm1234, %v1242, %v1243
        %v1245 = vor.u32 %v610, %v1243
        %vm1246 = vcmp.ne.s16.totalorder %v1235, 0
        %vm1247 = vcmp.ne.s16.totalorder %v1238, 0
        %vm1248 = vcmp.ne.s16.totalorder %v1241, 0
        %vm1249 = vcmp.ne.s16.totalorder %v1244, 0
        %vm1250 = vcmp.ne.s16.totalorder %v1245, 0
        %v1251 = vsel %vm1246, %v1232, 0
        %v1252 = vsel %vm1247, %v534, 0
        %v1253 = vsel %vm1248, %v535, 0
        %v1254 = vsel %vm1249, %v536, 0
        %v1255 = vsel %vm1250, %v1233, 0
        %s1256 = scalar_lea.vmem [#allocation7], 192
        %v1257 = vld [vmem:[%s1256] sm:$0xf]
        %v1258 = vld [vmem:[%s1256 + $0x4] sm:$0xf]
        %v1259 = vld [vmem:[%s1256 + $0x8] sm:$0xf]
        %v1260 = vld [vmem:[%s1256 + $0xc] sm:$0xf]
        %v1261 = vld [vmem:[%s1256 + $0x10] sm:$0xf]
        %v1262 = vld [vmem:[%s1256 + $0x14] sm:$0xf]
        %v1263 = vld [vmem:[%s1256 + $0x18] sm:$0xf]
        %v1264 = vld [vmem:[%s1256 + $0x1c] sm:$0xf]
        %v1265 = vld [vmem:[%s1256 + $0x20] sm:$0xf]
        %v1266 = vld [vmem:[%s1256 + $0x24] sm:$0xf]
        %v1267 = vld [vmem:[%s1256 + $0x28] sm:$0xf]
        %v1268 = vld [vmem:[%s1256 + $0x2c] sm:$0xf]
        %v1269 = vld [vmem:[%s1256 + $0x30] sm:$0xf]
        %v1270 = vld [vmem:[%s1256 + $0x34] sm:$0xf]
        %v1271 = vld [vmem:[%s1256 + $0x38] sm:$0xf]
        %v1272 = vld [vmem:[%s1256 + $0x3c] sm:$0xf]
        %vm1273 = vsmask.f32 256
        %v1275 = vshrl.u32 %v1251, 16
        %v1277 = vrot.slane %v1275, 7
        %v1279 = vshrl.u32 %v1252, 16
        %v1281 = vrot.slane %v1279, 7
        %v1282 = vshll.u32 %v1252, 16
        %v1284 = vor.u32 %v1281, %v1282
        %v1285 = vsel %vm1273, %v1277, %v1284
        %v1287 = vshrl.u32 %v1253, 16
        %v1289 = vrot.slane %v1287, 7
        %v1290 = vshll.u32 %v1253, 16
        %v1292 = vor.u32 %v1289, %v1290
        %v1293 = vsel %vm1273, %v1281, %v1292
        %v1295 = vshrl.u32 %v1254, 16
        %v1297 = vrot.slane %v1295, 7
        %v1298 = vshll.u32 %v1254, 16
        %v1300 = vor.u32 %v1297, %v1298
        %v1301 = vsel %vm1273, %v1289, %v1300
        %v1303 = vshrl.u32 %v1255, 16
        %v1305 = vrot.slane %v1303, 7
        %v1306 = vshll.u32 %v1255, 16
        %v1308 = vor.u32 %v1305, %v1306
        %v1309 = vsel %vm1273, %v1297, %v1308
        %v1330 = vunpack.c.l.b16 %v1257
        %v1331 = vunpack.c.l.b16 %v1258
        %v1332 = vunpack.c.l.b16 %v1259
        %v1333 = vunpack.c.l.b16 %v1260
        %v1334 = vunpack.c.l.b16 %v1261
        %v1335 = vunpack.c.l.b16 %v1262
        %v1336 = vunpack.c.l.b16 %v1263
        %v1337 = vunpack.c.l.b16 %v1264
        %v1338 = vunpack.c.l.b16 %v1265
        %v1339 = vunpack.c.l.b16 %v1266
        %v1340 = vunpack.c.l.b16 %v1267
        %v1341 = vunpack.c.l.b16 %v1268
        %v1342 = vunpack.c.l.b16 %v1269
        %v1343 = vunpack.c.l.b16 %v1270
        %v1344 = vunpack.c.l.b16 %v1271
        %v1345 = vunpack.c.l.b16 %v1272
        %v1346 = vpack.c.b16 %v1331, %v1330
        %v1347 = vpack.c.b16 %v1333, %v1332
        %v1348 = vpack.c.b16 %v1335, %v1334
        %v1349 = vpack.c.b16 %v1337, %v1336
        %v1350 = vpack.c.b16 %v1339, %v1338
        %v1351 = vpack.c.b16 %v1341, %v1340
        %v1352 = vpack.c.b16 %v1343, %v1342
        %v1353 = vpack.c.b16 %v1345, %v1344
        %1362 = vmatprep.subr.bf16.mxu0 0
        %1363 = vmatpush1.bf16.msra.mxu0 %v1346
        %1364 = vmatprep.subr.bf16.mxu0 0
        %1365 = vmatpush1.bf16.msra.mxu0 %v1347
        %1366 = vmatprep.subr.bf16.mxu0 0
        %1367 = vmatpush1.bf16.msra.mxu0 %v1348
        %1368 = vmatprep.subr.bf16.mxu0 0
        %1369 = vmatpush1.bf16.msra.mxu0 %v1349
        %1370 = vmatprep.subr.bf16.mxu0 0
        %1371 = vmatpush1.bf16.msra.mxu0 %v1350
        %1372 = vmatprep.subr.bf16.mxu0 0
        %1373 = vmatpush1.bf16.msra.mxu0 %v1351
        %1374 = vmatprep.subr.bf16.mxu0 0
        %1375 = vmatpush1.bf16.msra.mxu0 %v1352
        %1376 = vmatprep.subr.bf16.mxu0 0
        %1377 = vmatpush1.bf16.msra.mxu0 %v1353
        %1378 = vmatprep.subr.bf16.mxu0 0
        %1379 = vmatpush1.bf16.msra.mxu0 0
        %1380 = vmatprep.subr.bf16.mxu0 0
        %1381 = vmatpush1.bf16.msra.mxu0 0
        %1382 = vmatprep.subr.bf16.mxu0 0
        %1383 = vmatpush1.bf16.msra.mxu0 0
        %1384 = vmatprep.subr.bf16.mxu0 0
        %1385 = vmatpush1.bf16.msra.mxu0 0
        %1386 = vmatprep.subr.bf16.mxu0 0
        %1387 = vmatpush1.bf16.msra.mxu0 0
        %1388 = vmatprep.subr.bf16.mxu0 0
        %1389 = vmatpush1.bf16.msra.mxu0 0
        %1390 = vmatprep.subr.bf16.mxu0 0
        %1391 = vmatpush1.bf16.msra.mxu0 0
        %1392 = vmatprep.subr.bf16.mxu0 0
        %1393 = vmatpush1.bf16.msra.mxu0 0
        %1394 = vmatprep.mubr.bf16.mxu0 0
        %1395 = vmatmul.mubr.bf16.gmra.mrb[0].mxu0 %v1285
        %v1396 = vpop.f32.mrb[0].mxu0
        %v1397 = vadd.f32 0.0, %v1396
        %v1398 = vpop.f32.mrb[0].mxu0
        %v1399 = vpop.f32.mrb[0].mxu0
        %v1400 = vadd.f32 0.0, %v1399
        %v1401 = vpop.f32.mrb[0].mxu0
        %1402 = vmatprep.mubr.bf16.mxu0 0
        %1403 = vmatmul.mubr.bf16.gmra.mrb[0].mxu0 %v1293
        %v1404 = vpop.f32.mrb[0].mxu0
        %v1405 = vadd.f32 0.0, %v1404
        %v1406 = vpop.f32.mrb[0].mxu0
        %v1407 = vpop.f32.mrb[0].mxu0
        %v1408 = vadd.f32 0.0, %v1407
        %v1409 = vpop.f32.mrb[0].mxu0
        %1410 = vmatprep.mubr.bf16.mxu0 0
        %1411 = vmatmul.mubr.bf16.gmra.mrb[0].mxu0 %v1301
        %v1412 = vpop.f32.mrb[0].mxu0
        %v1413 = vadd.f32 0.0, %v1412
        %v1414 = vpop.f32.mrb[0].mxu0
        %v1415 = vpop.f32.mrb[0].mxu0
        %v1416 = vadd.f32 0.0, %v1415
        %v1417 = vpop.f32.mrb[0].mxu0
        %1418 = vmatprep.mubr.bf16.mxu0 0
        %1419 = vmatmul.mubr.bf16.gmra.mrb[0].mxu0 %v1309
        %v1420 = vpop.f32.mrb[0].mxu0
        %v1421 = vadd.f32 0.0, %v1420
        %v1422 = vpop.f32.mrb[0].mxu0
        %v1423 = vpop.f32.mrb[0].mxu0
        %v1424 = vadd.f32 0.0, %v1423
        %v1425 = vpop.f32.mrb[0].mxu0
        %1426 = vdwg.mxu0
        %v1427 = vadd.f32 %v1224, %v1397
        %v1428 = vadd.f32 %v1225, %v1400
        %v1429 = vadd.f32 %v1226, %v1405
        %v1430 = vadd.f32 %v1227, %v1408
        %v1431 = vadd.f32 %v1228, %v1413
        %v1432 = vadd.f32 %v1229, %v1416
        %v1433 = vadd.f32 %v1230, %v1421
        %v1434 = vadd.f32 %v1231, %v1424
        %s1435 = scalar_lea.vmem [#allocation7], 256
        %v1436 = vld [vmem:[%s1435] sm:$0xf]
        %v1437 = vld [vmem:[%s1435 + $0x4] sm:$0xf]
        %v1438 = vld [vmem:[%s1435 + $0x8] sm:$0xf]
        %v1439 = vld [vmem:[%s1435 + $0xc] sm:$0xf]
        %v1440 = vld [vmem:[%s1435 + $0x10] sm:$0xf]
        %v1441 = vld [vmem:[%s1435 + $0x14] sm:$0xf]
        %v1442 = vld [vmem:[%s1435 + $0x18] sm:$0xf]
        %v1443 = vld [vmem:[%s1435 + $0x1c] sm:$0xf]
        %v1444 = vld [vmem:[%s1435 + $0x20] sm:$0xf]
        %v1445 = vld [vmem:[%s1435 + $0x24] sm:$0xf]
        %v1446 = vld [vmem:[%s1435 + $0x28] sm:$0xf]
        %v1447 = vld [vmem:[%s1435 + $0x2c] sm:$0xf]
        %v1448 = vld [vmem:[%s1435 + $0x30] sm:$0xf]
        %v1449 = vld [vmem:[%s1435 + $0x34] sm:$0xf]
        %v1450 = vld [vmem:[%s1435 + $0x38] sm:$0xf]
        %v1451 = vld [vmem:[%s1435 + $0x3c] sm:$0xf]
        %v1468 = vunpack.c.l.b16 %v1436
        %v1469 = vunpack.c.l.b16 %v1437
        %v1470 = vunpack.c.l.b16 %v1438
        %v1471 = vunpack.c.l.b16 %v1439
        %v1472 = vunpack.c.l.b16 %v1440
        %v1473 = vunpack.c.l.b16 %v1441
        %v1474 = vunpack.c.l.b16 %v1442
        %v1475 = vunpack.c.l.b16 %v1443
        %v1476 = vunpack.c.l.b16 %v1444
        %v1477 = vunpack.c.l.b16 %v1445
        %v1478 = vunpack.c.l.b16 %v1446
        %v1479 = vunpack.c.l.b16 %v1447
        %v1480 = vunpack.c.l.b16 %v1448
        %v1481 = vunpack.c.l.b16 %v1449
        %v1482 = vunpack.c.l.b16 %v1450
        %v1483 = vunpack.c.l.b16 %v1451
        %v1484 = vpack.c.b16 %v1469, %v1468
        %v1485 = vpack.c.b16 %v1471, %v1470
        %v1486 = vpack.c.b16 %v1473, %v1472
        %v1487 = vpack.c.b16 %v1475, %v1474
        %v1488 = vpack.c.b16 %v1477, %v1476
        %v1489 = vpack.c.b16 %v1479, %v1478
        %v1490 = vpack.c.b16 %v1481, %v1480
        %v1491 = vpack.c.b16 %v1483, %v1482
        %1500 = vmatprep.subr.bf16.mxu0 0
        %1501 = vmatpush1.bf16.msra.mxu0 %v1484
        %1502 = vmatprep.subr.bf16.mxu0 0
        %1503 = vmatpush1.bf16.msra.mxu0 %v1485
        %1504 = vmatprep.subr.bf16.mxu0 0
        %1505 = vmatpush1.bf16.msra.mxu0 %v1486
        %1506 = vmatprep.subr.bf16.mxu0 0
        %1507 = vmatpush1.bf16.msra.mxu0 %v1487
        %1508 = vmatprep.subr.bf16.mxu0 0
        %1509 = vmatpush1.bf16.msra.mxu0 %v1488
        %1510 = vmatprep.subr.bf16.mxu0 0
        %1511 = vmatpush1.bf16.msra.mxu0 %v1489
        %1512 = vmatprep.subr.bf16.mxu0 0
        %1513 = vmatpush1.bf16.msra.mxu0 %v1490
        %1514 = vmatprep.subr.bf16.mxu0 0
        %1515 = vmatpush1.bf16.msra.mxu0 %v1491
        %1516 = vmatprep.subr.bf16.mxu0 0
        %1517 = vmatpush1.bf16.msra.mxu0 0
        %1518 = vmatprep.subr.bf16.mxu0 0
        %1519 = vmatpush1.bf16.msra.mxu0 0
        %1520 = vmatprep.subr.bf16.mxu0 0
        %1521 = vmatpush1.bf16.msra.mxu0 0
        %1522 = vmatprep.subr.bf16.mxu0 0
        %1523 = vmatpush1.bf16.msra.mxu0 0
        %1524 = vmatprep.subr.bf16.mxu0 0
        %1525 = vmatpush1.bf16.msra.mxu0 0
        %1526 = vmatprep.subr.bf16.mxu0 0
        %1527 = vmatpush1.bf16.msra.mxu0 0
        %1528 = vmatprep.subr.bf16.mxu0 0
        %1529 = vmatpush1.bf16.msra.mxu0 0
        %1530 = vmatprep.subr.bf16.mxu0 0
        %1531 = vmatpush1.bf16.msra.mxu0 0
        %1532 = vmatprep.mubr.bf16.mxu0 0
        %1533 = vmatmul.mubr.bf16.gmra.mrb[0].mxu0 %v534
        %v1534 = vpop.f32.mrb[0].mxu0
        %v1535 = vadd.f32 0.0, %v1534
        %v1536 = vpop.f32.mrb[0].mxu0
        %v1537 = vpop.f32.mrb[0].mxu0
        %v1538 = vadd.f32 0.0, %v1537
        %v1539 = vpop.f32.mrb[0].mxu0
        %1540 = vmatprep.mubr.bf16.mxu0 0
        %1541 = vmatmul.mubr.bf16.gmra.mrb[0].mxu0 %v535
        %v1542 = vpop.f32.mrb[0].mxu0
        %v1543 = vadd.f32 0.0, %v1542
        %v1544 = vpop.f32.mrb[0].mxu0
        %v1545 = vpop.f32.mrb[0].mxu0
        %v1546 = vadd.f32 0.0, %v1545
        %v1547 = vpop.f32.mrb[0].mxu0
        %1548 = vmatprep.mubr.bf16.mxu0 0
        %1549 = vmatmul.mubr.bf16.gmra.mrb[0].mxu0 %v536
        %v1550 = vpop.f32.mrb[0].mxu0
        %v1551 = vadd.f32 0.0, %v1550
        %v1552 = vpop.f32.mrb[0].mxu0
        %v1553 = vpop.f32.mrb[0].mxu0
        %v1554 = vadd.f32 0.0, %v1553
        %v1555 = vpop.f32.mrb[0].mxu0
        %1556 = vmatprep.mubr.bf16.mxu0 0
        %1557 = vmatmul.mubr.bf16.gmra.mrb[0].mxu0 %v1233
        %v1558 = vpop.f32.mrb[0].mxu0
        %v1559 = vadd.f32 0.0, %v1558
        %v1560 = vpop.f32.mrb[0].mxu0
        %v1561 = vpop.f32.mrb[0].mxu0
        %v1562 = vadd.f32 0.0, %v1561
        %v1563 = vpop.f32.mrb[0].mxu0
        %1564 = vdwg.mxu0
        %v1565 = vadd.f32 %v1427, %v1535
        %v1566 = vadd.f32 %v1428, %v1538
        %v1567 = vadd.f32 %v1429, %v1543
        %v1568 = vadd.f32 %v1430, %v1546
        %v1569 = vadd.f32 %v1431, %v1551
        %v1570 = vadd.f32 %v1432, %v1554
        %v1571 = vadd.f32 %v1433, %v1559
        %v1572 = vadd.f32 %v1434, %v1562
        %v1573 = vld [vmem:[#allocation2 + $0x8] sm:$0xff]
        %v1574 = vld [vmem:[#allocation2 + $0x10] sm:$0xff]
        %v1575 = vld [vmem:[#allocation2 + $0x18] sm:$0xff]
        %v1576 = vld [vmem:[#allocation2 + $0x20] sm:$0xff]
        %v1577 = vld [vmem:[#allocation2 + $0x28] sm:$0x1]
        %v1578 = vrot.slane %v1002, 7
        %v1579 = vor.u32 %v1578, %v1005
        %v1580 = vrot.slane %v1010, 7
        %v1581 = vor.u32 %v1580, %v1013
        %v1582 = vsel %vm1273, %v1578, %v1581
        %v1583 = vrot.slane %v1019, 7
        %v1584 = vor.u32 %v1583, %v1022
        %v1585 = vsel %vm1273, %v1580, %v1584
        %v1586 = vrot.slane %v1028, 7
        %v1587 = vor.u32 %v1586, %v1031
        %v1588 = vsel %vm1273, %v1583, %v1587
        %vm1589 = vcmp.ne.s16.totalorder %v1579, 0
        %vm1590 = vcmp.ne.s16.totalorder %v1582, 0
        %vm1591 = vcmp.ne.s16.totalorder %v1585, 0
        %vm1592 = vcmp.ne.s16.totalorder %v1588, 0
        %vm1593 = vcmp.ne.s16.totalorder %v1586, 0
        %v1594 = vsel %vm1589, %v1573, 0
        %v1595 = vsel %vm1590, %v1574, 0
        %v1596 = vsel %vm1591, %v1575, 0
        %v1597 = vsel %vm1592, %v1576, 0
        %v1598 = vsel %vm1593, %v1577, 0
        %s1599 = scalar_lea.vmem [#allocation7], 320
        %v1600 = vld [vmem:[%s1599] sm:$0xf]
        %v1601 = vld [vmem:[%s1599 + $0x4] sm:$0xf]
        %v1602 = vld [vmem:[%s1599 + $0x8] sm:$0xf]
        %v1603 = vld [vmem:[%s1599 + $0xc] sm:$0xf]
        %v1604 = vld [vmem:[%s1599 + $0x10] sm:$0xf]
        %v1605 = vld [vmem:[%s1599 + $0x14] sm:$0xf]
        %v1606 = vld [vmem:[%s1599 + $0x18] sm:$0xf]
        %v1607 = vld [vmem:[%s1599 + $0x1c] sm:$0xf]
        %v1608 = vld [vmem:[%s1599 + $0x20] sm:$0xf]
        %v1609 = vld [vmem:[%s1599 + $0x24] sm:$0xf]
        %v1610 = vld [vmem:[%s1599 + $0x28] sm:$0xf]
        %v1611 = vld [vmem:[%s1599 + $0x2c] sm:$0xf]
        %v1612 = vld [vmem:[%s1599 + $0x30] sm:$0xf]
        %v1613 = vld [vmem:[%s1599 + $0x34] sm:$0xf]
        %v1614 = vld [vmem:[%s1599 + $0x38] sm:$0xf]
        %v1615 = vld [vmem:[%s1599 + $0x3c] sm:$0xf]
        %v1617 = vshrl.u32 %v1594, 16
        %v1619 = vshll.u32 %v1594, 16
        %v1621 = vrot.slane %v1619, 1
        %v1622 = vor.u32 %v1617, %v1621
        %v1624 = vshll.u32 %v1595, 16
        %v1626 = vrot.slane %v1624, 1
        %v1627 = vsel %vm1234, %v1622, %v1626
        %v1628 = vshrl.u32 %v1595, 16
        %v1630 = vor.u32 %v1628, %v1626
        %v1632 = vshll.u32 %v1596, 16
        %v1634 = vrot.slane %v1632, 1
        %v1635 = vsel %vm1234, %v1630, %v1634
        %v1636 = vshrl.u32 %v1596, 16
        %v1638 = vor.u32 %v1636, %v1634
        %v1640 = vshll.u32 %v1597, 16
        %v1642 = vrot.slane %v1640, 1
        %v1643 = vsel %vm1234, %v1638, %v1642
        %v1644 = vshrl.u32 %v1597, 16
        %v1646 = vor.u32 %v1644, %v1642
        %v1648 = vshll.u32 %v1598, 16
        %v1650 = vrot.slane %v1648, 1
        %v1651 = vsel %vm1234, %v1646, %v1650
        %v1672 = vunpack.c.l.b16 %v1600
        %v1673 = vunpack.c.l.b16 %v1601
        %v1674 = vunpack.c.l.b16 %v1602
        %v1675 = vunpack.c.l.b16 %v1603
        %v1676 = vunpack.c.l.b16 %v1604
        %v1677 = vunpack.c.l.b16 %v1605
        %v1678 = vunpack.c.l.b16 %v1606
        %v1679 = vunpack.c.l.b16 %v1607
        %v1680 = vunpack.c.l.b16 %v1608
        %v1681 = vunpack.c.l.b16 %v1609
        %v1682 = vunpack.c.l.b16 %v1610
        %v1683 = vunpack.c.l.b16 %v1611
        %v1684 = vunpack.c.l.b16 %v1612
        %v1685 = vunpack.c.l.b16 %v1613
        %v1686 = vunpack.c.l.b16 %v1614
        %v1687 = vunpack.c.l.b16 %v1615
        %v1688 = vpack.c.b16 %v1673, %v1672
        %v1689 = vpack.c.b16 %v1675, %v1674
        %v1690 = vpack.c.b16 %v1677, %v1676
        %v1691 = vpack.c.b16 %v1679, %v1678
        %v1692 = vpack.c.b16 %v1681, %v1680
        %v1693 = vpack.c.b16 %v1683, %v1682
        %v1694 = vpack.c.b16 %v1685, %v1684
        %v1695 = vpack.c.b16 %v1687, %v1686
        %1704 = vmatprep.subr.bf16.mxu0 0
        %1705 = vmatpush1.bf16.msra.mxu0 %v1688
        %1706 = vmatprep.subr.bf16.mxu0 0
        %1707 = vmatpush1.bf16.msra.mxu0 %v1689
        %1708 = vmatprep.subr.bf16.mxu0 0
        %1709 = vmatpush1.bf16.msra.mxu0 %v1690
        %1710 = vmatprep.subr.bf16.mxu0 0
        %1711 = vmatpush1.bf16.msra.mxu0 %v1691
        %1712 = vmatprep.subr.bf16.mxu0 0
        %1713 = vmatpush1.bf16.msra.mxu0 %v1692
        %1714 = vmatprep.subr.bf16.mxu0 0
        %1715 = vmatpush1.bf16.msra.mxu0 %v1693
        %1716 = vmatprep.subr.bf16.mxu0 0
        %1717 = vmatpush1.bf16.msra.mxu0 %v1694
        %1718 = vmatprep.subr.bf16.mxu0 0
        %1719 = vmatpush1.bf16.msra.mxu0 %v1695
        %1720 = vmatprep.subr.bf16.mxu0 0
        %1721 = vmatpush1.bf16.msra.mxu0 0
        %1722 = vmatprep.subr.bf16.mxu0 0
        %1723 = vmatpush1.bf16.msra.mxu0 0
        %1724 = vmatprep.subr.bf16.mxu0 0
        %1725 = vmatpush1.bf16.msra.mxu0 0
        %1726 = vmatprep.subr.bf16.mxu0 0
        %1727 = vmatpush1.bf16.msra.mxu0 0
        %1728 = vmatprep.subr.bf16.mxu0 0
        %1729 = vmatpush1.bf16.msra.mxu0 0
        %1730 = vmatprep.subr.bf16.mxu0 0
        %1731 = vmatpush1.bf16.msra.mxu0 0
        %1732 = vmatprep.subr.bf16.mxu0 0
        %1733 = vmatpush1.bf16.msra.mxu0 0
        %1734 = vmatprep.subr.bf16.mxu0 0
        %1735 = vmatpush1.bf16.msra.mxu0 0
        %1736 = vmatprep.mubr.bf16.mxu0 0
        %1737 = vmatmul.mubr.bf16.gmra.mrb[0].mxu0 %v1627
        %v1738 = vpop.f32.mrb[0].mxu0
        %v1739 = vadd.f32 0.0, %v1738
        %v1740 = vpop.f32.mrb[0].mxu0
        %v1741 = vpop.f32.mrb[0].mxu0
        %v1742 = vadd.f32 0.0, %v1741
        %v1743 = vpop.f32.mrb[0].mxu0
        %1744 = vmatprep.mubr.bf16.mxu0 0
        %1745 = vmatmul.mubr.bf16.gmra.mrb[0].mxu0 %v1635
        %v1746 = vpop.f32.mrb[0].mxu0
        %v1747 = vadd.f32 0.0, %v1746
        %v1748 = vpop.f32.mrb[0].mxu0
        %v1749 = vpop.f32.mrb[0].mxu0
        %v1750 = vadd.f32 0.0, %v1749
        %v1751 = vpop.f32.mrb[0].mxu0
        %1752 = vmatprep.mubr.bf16.mxu0 0
        %1753 = vmatmul.mubr.bf16.gmra.mrb[0].mxu0 %v1643
        %v1754 = vpop.f32.mrb[0].mxu0
        %v1755 = vadd.f32 0.0, %v1754
        %v1756 = vpop.f32.mrb[0].mxu0
        %v1757 = vpop.f32.mrb[0].mxu0
        %v1758 = vadd.f32 0.0, %v1757
        %v1759 = vpop.f32.mrb[0].mxu0
        %1760 = vmatprep.mubr.bf16.mxu0 0
        %1761 = vmatmul.mubr.bf16.gmra.mrb[0].mxu0 %v1651
        %v1762 = vpop.f32.mrb[0].mxu0
        %v1763 = vadd.f32 0.0, %v1762
        %v1764 = vpop.f32.mrb[0].mxu0
        %v1765 = vpop.f32.mrb[0].mxu0
        %v1766 = vadd.f32 0.0, %v1765
        %v1767 = vpop.f32.mrb[0].mxu0
        %1768 = vdwg.mxu0
        %v1769 = vadd.f32 %v1565, %v1739
        %v1770 = vadd.f32 %v1566, %v1742
        %v1771 = vadd.f32 %v1567, %v1747
        %v1772 = vadd.f32 %v1568, %v1750
        %v1773 = vadd.f32 %v1569, %v1755
        %v1774 = vadd.f32 %v1570, %v1758
        %v1775 = vadd.f32 %v1571, %v1763
        %v1776 = vadd.f32 %v1572, %v1766
        %v1777 = vld [vmem:[#allocation2 + $0x8] sm:$0xf8]
        %v1778 = vld [vmem:[#allocation2 + $0x28] sm:$0xf]
        %v1779 = vsel %vm618, %v1777, 0
        %v1780 = vsel %vm619, %v1574, 0
        %v1781 = vsel %vm620, %v1575, 0
        %v1782 = vsel %vm621, %v1576, 0
        %v1783 = vsel %vm622, %v1778, 0
        %s1784 = scalar_lea.vmem [#allocation7], 384
        %v1785 = vld [vmem:[%s1784] sm:$0xf]
        %v1786 = vld [vmem:[%s1784 + $0x4] sm:$0xf]
        %v1787 = vld [vmem:[%s1784 + $0x8] sm:$0xf]
        %v1788 = vld [vmem:[%s1784 + $0xc] sm:$0xf]
        %v1789 = vld [vmem:[%s1784 + $0x10] sm:$0xf]
        %v1790 = vld [vmem:[%s1784 + $0x14] sm:$0xf]
        %v1791 = vld [vmem:[%s1784 + $0x18] sm:$0xf]
        %v1792 = vld [vmem:[%s1784 + $0x1c] sm:$0xf]
        %v1793 = vld [vmem:[%s1784 + $0x20] sm:$0xf]
        %v1794 = vld [vmem:[%s1784 + $0x24] sm:$0xf]
        %v1795 = vld [vmem:[%s1784 + $0x28] sm:$0xf]
        %v1796 = vld [vmem:[%s1784 + $0x2c] sm:$0xf]
        %v1797 = vld [vmem:[%s1784 + $0x30] sm:$0xf]
        %v1798 = vld [vmem:[%s1784 + $0x34] sm:$0xf]
        %v1799 = vld [vmem:[%s1784 + $0x38] sm:$0xf]
        %v1800 = vld [vmem:[%s1784 + $0x3c] sm:$0xf]
        %v1802 = vshrl.u32 %v1779, 16
        %v1804 = vrot.slane %v1802, 3
        %v1805 = vshll.u32 %v1779, 16
        %v1807 = vrot.slane %v1805, 4
        %v1808 = vor.u32 %v1804, %v1807
        %v1810 = vshrl.u32 %v1780, 16
        %v1812 = vrot.slane %v1810, 3
        %v1813 = vshll.u32 %v1780, 16
        %v1815 = vrot.slane %v1813, 4
        %v1816 = vor.u32 %v1812, %v1815
        %v1817 = vsel %vm794, %v1808, %v1816
        %v1819 = vshrl.u32 %v1781, 16
        %v1821 = vrot.slane %v1819, 3
        %v1822 = vshll.u32 %v1781, 16
        %v1824 = vrot.slane %v1822, 4
        %v1825 = vor.u32 %v1821, %v1824
        %v1826 = vsel %vm794, %v1816, %v1825
        %v1828 = vshrl.u32 %v1782, 16
        %v1830 = vrot.slane %v1828, 3
        %v1831 = vshll.u32 %v1782, 16
        %v1833 = vrot.slane %v1831, 4
        %v1834 = vor.u32 %v1830, %v1833
        %v1835 = vsel %vm794, %v1825, %v1834
        %v1837 = vshrl.u32 %v1783, 16
        %v1839 = vrot.slane %v1837, 3
        %v1840 = vshll.u32 %v1783, 16
        %v1842 = vrot.slane %v1840, 4
        %v1843 = vor.u32 %v1839, %v1842
        %v1844 = vsel %vm794, %v1834, %v1843
        %v1865 = vunpack.c.l.b16 %v1785
        %v1866 = vunpack.c.l.b16 %v1786
        %v1867 = vunpack.c.l.b16 %v1787
        %v1868 = vunpack.c.l.b16 %v1788
        %v1869 = vunpack.c.l.b16 %v1789
        %v1870 = vunpack.c.l.b16 %v1790
        %v1871 = vunpack.c.l.b16 %v1791
        %v1872 = vunpack.c.l.b16 %v1792
        %v1873 = vunpack.c.l.b16 %v1793
        %v1874 = vunpack.c.l.b16 %v1794
        %v1875 = vunpack.c.l.b16 %v1795
        %v1876 = vunpack.c.l.b16 %v1796
        %v1877 = vunpack.c.l.b16 %v1797
        %v1878 = vunpack.c.l.b16 %v1798
        %v1879 = vunpack.c.l.b16 %v1799
        %v1880 = vunpack.c.l.b16 %v1800
        %v1881 = vpack.c.b16 %v1866, %v1865
        %v1882 = vpack.c.b16 %v1868, %v1867
        %v1883 = vpack.c.b16 %v1870, %v1869
        %v1884 = vpack.c.b16 %v1872, %v1871
        %v1885 = vpack.c.b16 %v1874, %v1873
        %v1886 = vpack.c.b16 %v1876, %v1875
        %v1887 = vpack.c.b16 %v1878, %v1877
        %v1888 = vpack.c.b16 %v1880, %v1879
        %1897 = vmatprep.subr.bf16.mxu0 0
        %1898 = vmatpush1.bf16.msra.mxu0 %v1881
        %1899 = vmatprep.subr.bf16.mxu0 0
        %1900 = vmatpush1.bf16.msra.mxu0 %v1882
        %1901 = vmatprep.subr.bf16.mxu0 0
        %1902 = vmatpush1.bf16.msra.mxu0 %v1883
        %1903 = vmatprep.subr.bf16.mxu0 0
        %1904 = vmatpush1.bf16.msra.mxu0 %v1884
        %1905 = vmatprep.subr.bf16.mxu0 0
        %1906 = vmatpush1.bf16.msra.mxu0 %v1885
        %1907 = vmatprep.subr.bf16.mxu0 0
        %1908 = vmatpush1.bf16.msra.mxu0 %v1886
        %1909 = vmatprep.subr.bf16.mxu0 0
        %1910 = vmatpush1.bf16.msra.mxu0 %v1887
        %1911 = vmatprep.subr.bf16.mxu0 0
        %1912 = vmatpush1.bf16.msra.mxu0 %v1888
        %1913 = vmatprep.subr.bf16.mxu0 0
        %1914 = vmatpush1.bf16.msra.mxu0 0
        %1915 = vmatprep.subr.bf16.mxu0 0
        %1916 = vmatpush1.bf16.msra.mxu0 0
        %1917 = vmatprep.subr.bf16.mxu0 0
        %1918 = vmatpush1.bf16.msra.mxu0 0
        %1919 = vmatprep.subr.bf16.mxu0 0
        %1920 = vmatpush1.bf16.msra.mxu0 0
        %1921 = vmatprep.subr.bf16.mxu0 0
        %1922 = vmatpush1.bf16.msra.mxu0 0
        %1923 = vmatprep.subr.bf16.mxu0 0
        %1924 = vmatpush1.bf16.msra.mxu0 0
        %1925 = vmatprep.subr.bf16.mxu0 0
        %1926 = vmatpush1.bf16.msra.mxu0 0
        %1927 = vmatprep.subr.bf16.mxu0 0
        %1928 = vmatpush1.bf16.msra.mxu0 0
        %1929 = vmatprep.mubr.bf16.mxu0 0
        %1930 = vmatmul.mubr.bf16.gmra.mrb[0].mxu0 %v1817
        %v1931 = vpop.f32.mrb[0].mxu0
        %v1932 = vadd.f32 0.0, %v1931
        %v1933 = vpop.f32.mrb[0].mxu0
        %v1934 = vpop.f32.mrb[0].mxu0
        %v1935 = vadd.f32 0.0, %v1934
        %v1936 = vpop.f32.mrb[0].mxu0
        %1937 = vmatprep.mubr.bf16.mxu0 0
        %1938 = vmatmul.mubr.bf16.gmra.mrb[0].mxu0 %v1826
        %v1939 = vpop.f32.mrb[0].mxu0
        %v1940 = vadd.f32 0.0, %v1939
        %v1941 = vpop.f32.mrb[0].mxu0
        %v1942 = vpop.f32.mrb[0].mxu0
        %v1943 = vadd.f32 0.0, %v1942
        %v1944 = vpop.f32.mrb[0].mxu0
        %1945 = vmatprep.mubr.bf16.mxu0 0
        %1946 = vmatmul.mubr.bf16.gmra.mrb[0].mxu0 %v1835
        %v1947 = vpop.f32.mrb[0].mxu0
        %v1948 = vadd.f32 0.0, %v1947
        %v1949 = vpop.f32.mrb[0].mxu0
        %v1950 = vpop.f32.mrb[0].mxu0
        %v1951 = vadd.f32 0.0, %v1950
        %v1952 = vpop.f32.mrb[0].mxu0
        %1953 = vmatprep.mubr.bf16.mxu0 0
        %1954 = vmatmul.mubr.bf16.gmra.mrb[0].mxu0 %v1844
        %v1955 = vpop.f32.mrb[0].mxu0
        %v1956 = vadd.f32 0.0, %v1955
        %v1957 = vpop.f32.mrb[0].mxu0
        %v1958 = vpop.f32.mrb[0].mxu0
        %v1959 = vadd.f32 0.0, %v1958
        %v1960 = vpop.f32.mrb[0].mxu0
        %1961 = vdwg.mxu0
        %v1962 = vadd.f32 %v1769, %v1932
        %v1963 = vadd.f32 %v1770, %v1935
        %v1964 = vadd.f32 %v1771, %v1940
        %v1965 = vadd.f32 %v1772, %v1943
        %v1966 = vadd.f32 %v1773, %v1948
        %v1967 = vadd.f32 %v1774, %v1951
        %v1968 = vadd.f32 %v1775, %v1956
        %v1969 = vadd.f32 %v1776, %v1959
        %v1970 = vld [vmem:[#allocation2 + $0x8] sm:$0xf0]
        %s1971 = scalar_lea.vmem [#allocation7], 448
        %v1972 = vld [vmem:[%s1971] sm:$0xf]
        %v1973 = vld [vmem:[%s1971 + $0x4] sm:$0xf]
        %v1974 = vld [vmem:[%s1971 + $0x8] sm:$0xf]
        %v1975 = vld [vmem:[%s1971 + $0xc] sm:$0xf]
        %v1976 = vld [vmem:[%s1971 + $0x10] sm:$0xf]
        %v1977 = vld [vmem:[%s1971 + $0x14] sm:$0xf]
        %v1978 = vld [vmem:[%s1971 + $0x18] sm:$0xf]
        %v1979 = vld [vmem:[%s1971 + $0x1c] sm:$0xf]
        %v1980 = vld [vmem:[%s1971 + $0x20] sm:$0xf]
        %v1981 = vld [vmem:[%s1971 + $0x24] sm:$0xf]
        %v1982 = vld [vmem:[%s1971 + $0x28] sm:$0xf]
        %v1983 = vld [vmem:[%s1971 + $0x2c] sm:$0xf]
        %v1984 = vld [vmem:[%s1971 + $0x30] sm:$0xf]
        %v1985 = vld [vmem:[%s1971 + $0x34] sm:$0xf]
        %v1986 = vld [vmem:[%s1971 + $0x38] sm:$0xf]
        %v1987 = vld [vmem:[%s1971 + $0x3c] sm:$0xf]
        %v1993 = vrot.slane %v1970, 4
        %v1994 = vrot.slane %v1574, 4
        %v1995 = vsel %vm667, %v1993, %v1994
        %v1996 = vrot.slane %v1575, 4
        %v1997 = vsel %vm667, %v1994, %v1996
        %v1998 = vrot.slane %v1576, 4
        %v1999 = vsel %vm667, %v1996, %v1998
        %v2000 = vrot.slane %v1778, 4
        %v2001 = vsel %vm667, %v1998, %v2000
        %v2022 = vunpack.c.l.b16 %v1972
        %v2023 = vunpack.c.l.b16 %v1973
        %v2024 = vunpack.c.l.b16 %v1974
        %v2025 = vunpack.c.l.b16 %v1975
        %v2026 = vunpack.c.l.b16 %v1976
        %v2027 = vunpack.c.l.b16 %v1977
        %v2028 = vunpack.c.l.b16 %v1978
        %v2029 = vunpack.c.l.b16 %v1979
        %v2030 = vunpack.c.l.b16 %v1980
        %v2031 = vunpack.c.l.b16 %v1981
        %v2032 = vunpack.c.l.b16 %v1982
        %v2033 = vunpack.c.l.b16 %v1983
        %v2034 = vunpack.c.l.b16 %v1984
        %v2035 = vunpack.c.l.b16 %v1985
        %v2036 = vunpack.c.l.b16 %v1986
        %v2037 = vunpack.c.l.b16 %v1987
        %v2038 = vpack.c.b16 %v2023, %v2022
        %v2039 = vpack.c.b16 %v2025, %v2024
        %v2040 = vpack.c.b16 %v2027, %v2026
        %v2041 = vpack.c.b16 %v2029, %v2028
        %v2042 = vpack.c.b16 %v2031, %v2030
        %v2043 = vpack.c.b16 %v2033, %v2032
        %v2044 = vpack.c.b16 %v2035, %v2034
        %v2045 = vpack.c.b16 %v2037, %v2036
        %2054 = vmatprep.subr.bf16.mxu0 0
        %2055 = vmatpush1.bf16.msra.mxu0 %v2038
        %2056 = vmatprep.subr.bf16.mxu0 0
        %2057 = vmatpush1.bf16.msra.mxu0 %v2039
        %2058 = vmatprep.subr.bf16.mxu0 0
        %2059 = vmatpush1.bf16.msra.mxu0 %v2040
        %2060 = vmatprep.subr.bf16.mxu0 0
        %2061 = vmatpush1.bf16.msra.mxu0 %v2041
        %2062 = vmatprep.subr.bf16.mxu0 0
        %2063 = vmatpush1.bf16.msra.mxu0 %v2042
        %2064 = vmatprep.subr.bf16.mxu0 0
        %2065 = vmatpush1.bf16.msra.mxu0 %v2043
        %2066 = vmatprep.subr.bf16.mxu0 0
        %2067 = vmatpush1.bf16.msra.mxu0 %v2044
        %2068 = vmatprep.subr.bf16.mxu0 0
        %2069 = vmatpush1.bf16.msra.mxu0 %v2045
        %2070 = vmatprep.subr.bf16.mxu0 0
        %2071 = vmatpush1.bf16.msra.mxu0 0
        %2072 = vmatprep.subr.bf16.mxu0 0
        %2073 = vmatpush1.bf16.msra.mxu0 0
        %2074 = vmatprep.subr.bf16.mxu0 0
        %2075 = vmatpush1.bf16.msra.mxu0 0
        %2076 = vmatprep.subr.bf16.mxu0 0
        %2077 = vmatpush1.bf16.msra.mxu0 0
        %2078 = vmatprep.subr.bf16.mxu0 0
        %2079 = vmatpush1.bf16.msra.mxu0 0
        %2080 = vmatprep.subr.bf16.mxu0 0
        %2081 = vmatpush1.bf16.msra.mxu0 0
        %2082 = vmatprep.subr.bf16.mxu0 0
        %2083 = vmatpush1.bf16.msra.mxu0 0
        %2084 = vmatprep.subr.bf16.mxu0 0
        %2085 = vmatpush1.bf16.msra.mxu0 0
        %2086 = vmatprep.mubr.bf16.mxu0 0
        %2087 = vmatmul.mubr.bf16.gmra.mrb[0].mxu0 %v1995
        %v2088 = vpop.f32.mrb[0].mxu0
        %v2089 = vadd.f32 0.0, %v2088
        %v2090 = vpop.f32.mrb[0].mxu0
        %v2091 = vpop.f32.mrb[0].mxu0
        %v2092 = vadd.f32 0.0, %v2091
        %v2093 = vpop.f32.mrb[0].mxu0
        %2094 = vmatprep.mubr.bf16.mxu0 0
        %2095 = vmatmul.mubr.bf16.gmra.mrb[0].mxu0 %v1997
        %v2096 = vpop.f32.mrb[0].mxu0
        %v2097 = vadd.f32 0.0, %v2096
        %v2098 = vpop.f32.mrb[0].mxu0
        %v2099 = vpop.f32.mrb[0].mxu0
        %v2100 = vadd.f32 0.0, %v2099
        %v2101 = vpop.f32.mrb[0].mxu0
        %2102 = vmatprep.mubr.bf16.mxu0 0
        %2103 = vmatmul.mubr.bf16.gmra.mrb[0].mxu0 %v1999
        %v2104 = vpop.f32.mrb[0].mxu0
        %v2105 = vadd.f32 0.0, %v2104
        %v2106 = vpop.f32.mrb[0].mxu0
        %v2107 = vpop.f32.mrb[0].mxu0
        %v2108 = vadd.f32 0.0, %v2107
        %v2109 = vpop.f32.mrb[0].mxu0
        %2110 = vmatprep.mubr.bf16.mxu0 0
        %2111 = vmatmul.mubr.bf16.gmra.mrb[0].mxu0 %v2001
        %v2112 = vpop.f32.mrb[0].mxu0
        %v2113 = vadd.f32 0.0, %v2112
        %v2114 = vpop.f32.mrb[0].mxu0
        %v2115 = vpop.f32.mrb[0].mxu0
        %v2116 = vadd.f32 0.0, %v2115
        %v2117 = vpop.f32.mrb[0].mxu0
        %2118 = vdwg.mxu0
        %v2119 = vadd.f32 %v1962, %v2089
        %v2120 = vadd.f32 %v1963, %v2092
        %v2121 = vadd.f32 %v1964, %v2097
        %v2122 = vadd.f32 %v1965, %v2100
        %v2123 = vadd.f32 %v1966, %v2105
        %v2124 = vadd.f32 %v1967, %v2108
        %v2125 = vadd.f32 %v1968, %v2113
        %v2126 = vadd.f32 %v1969, %v2116
        %v2127 = vld [vmem:[#allocation2 + $0x28] sm:$0x1f]
        %v2128 = vsel %vm1036, %v1970, 0
        %v2129 = vsel %vm1037, %v1574, 0
        %v2130 = vsel %vm1038, %v1575, 0
        %v2131 = vsel %vm1039, %v1576, 0
        %v2132 = vsel %vm1040, %v2127, 0
        %s2133 = scalar_lea.vmem [#allocation7], 512
        %v2134 = vld [vmem:[%s2133] sm:$0xf]
        %v2135 = vld [vmem:[%s2133 + $0x4] sm:$0xf]
        %v2136 = vld [vmem:[%s2133 + $0x8] sm:$0xf]
        %v2137 = vld [vmem:[%s2133 + $0xc] sm:$0xf]
        %v2138 = vld [vmem:[%s2133 + $0x10] sm:$0xf]
        %v2139 = vld [vmem:[%s2133 + $0x14] sm:$0xf]
        %v2140 = vld [vmem:[%s2133 + $0x18] sm:$0xf]
        %v2141 = vld [vmem:[%s2133 + $0x1c] sm:$0xf]
        %v2142 = vld [vmem:[%s2133 + $0x20] sm:$0xf]
        %v2143 = vld [vmem:[%s2133 + $0x24] sm:$0xf]
        %v2144 = vld [vmem:[%s2133 + $0x28] sm:$0xf]
        %v2145 = vld [vmem:[%s2133 + $0x2c] sm:$0xf]
        %v2146 = vld [vmem:[%s2133 + $0x30] sm:$0xf]
        %v2147 = vld [vmem:[%s2133 + $0x34] sm:$0xf]
        %v2148 = vld [vmem:[%s2133 + $0x38] sm:$0xf]
        %v2149 = vld [vmem:[%s2133 + $0x3c] sm:$0xf]
        %v2151 = vshrl.u32 %v2128, 16
        %v2153 = vrot.slane %v2151, 4
        %v2154 = vshll.u32 %v2128, 16
        %v2156 = vrot.slane %v2154, 5
        %v2157 = vor.u32 %v2153, %v2156
        %v2159 = vshrl.u32 %v2129, 16
        %v2161 = vrot.slane %v2159, 4
        %v2162 = vshll.u32 %v2129, 16
        %v2164 = vrot.slane %v2162, 5
        %v2165 = vor.u32 %v2161, %v2164
        %v2166 = vsel %vm582, %v2157, %v2165
        %v2168 = vshrl.u32 %v2130, 16
        %v2170 = vrot.slane %v2168, 4
        %v2171 = vshll.u32 %v2130, 16
        %v2173 = vrot.slane %v2171, 5
        %v2174 = vor.u32 %v2170, %v2173
        %v2175 = vsel %vm582, %v2165, %v2174
        %v2177 = vshrl.u32 %v2131, 16
        %v2179 = vrot.slane %v2177, 4
        %v2180 = vshll.u32 %v2131, 16
        %v2182 = vrot.slane %v2180, 5
        %v2183 = vor.u32 %v2179, %v2182
        %v2184 = vsel %vm582, %v2174, %v2183
        %v2186 = vshrl.u32 %v2132, 16
        %v2188 = vrot.slane %v2186, 4
        %v2189 = vshll.u32 %v2132, 16
        %v2191 = vrot.slane %v2189, 5
        %v2192 = vor.u32 %v2188, %v2191
        %v2193 = vsel %vm582, %v2183, %v2192
        %v2214 = vunpack.c.l.b16 %v2134
        %v2215 = vunpack.c.l.b16 %v2135
        %v2216 = vunpack.c.l.b16 %v2136
        %v2217 = vunpack.c.l.b16 %v2137
        %v2218 = vunpack.c.l.b16 %v2138
        %v2219 = vunpack.c.l.b16 %v2139
        %v2220 = vunpack.c.l.b16 %v2140
        %v2221 = vunpack.c.l.b16 %v2141
        %v2222 = vunpack.c.l.b16 %v2142
        %v2223 = vunpack.c.l.b16 %v2143
        %v2224 = vunpack.c.l.b16 %v2144
        %v2225 = vunpack.c.l.b16 %v2145
        %v2226 = vunpack.c.l.b16 %v2146
        %v2227 = vunpack.c.l.b16 %v2147
        %v2228 = vunpack.c.l.b16 %v2148
        %v2229 = vunpack.c.l.b16 %v2149
        %v2230 = vpack.c.b16 %v2215, %v2214
        %v2231 = vpack.c.b16 %v2217, %v2216
        %v2232 = vpack.c.b16 %v2219, %v2218
        %v2233 = vpack.c.b16 %v2221, %v2220
        %v2234 = vpack.c.b16 %v2223, %v2222
        %v2235 = vpack.c.b16 %v2225, %v2224
        %v2236 = vpack.c.b16 %v2227, %v2226
        %v2237 = vpack.c.b16 %v2229, %v2228
        %2246 = vmatprep.subr.bf16.mxu0 0
        %2247 = vmatpush1.bf16.msra.mxu0 %v2230
        %2248 = vmatprep.subr.bf16.mxu0 0
        %2249 = vmatpush1.bf16.msra.mxu0 %v2231
        %2250 = vmatprep.subr.bf16.mxu0 0
        %2251 = vmatpush1.bf16.msra.mxu0 %v2232
        %2252 = vmatprep.subr.bf16.mxu0 0
        %2253 = vmatpush1.bf16.msra.mxu0 %v2233
        %2254 = vmatprep.subr.bf16.mxu0 0
        %2255 = vmatpush1.bf16.msra.mxu0 %v2234
        %2256 = vmatprep.subr.bf16.mxu0 0
        %2257 = vmatpush1.bf16.msra.mxu0 %v2235
        %2258 = vmatprep.subr.bf16.mxu0 0
        %2259 = vmatpush1.bf16.msra.mxu0 %v2236
        %2260 = vmatprep.subr.bf16.mxu0 0
        %2261 = vmatpush1.bf16.msra.mxu0 %v2237
        %2262 = vmatprep.subr.bf16.mxu0 0
        %2263 = vmatpush1.bf16.msra.mxu0 0
        %2264 = vmatprep.subr.bf16.mxu0 0
        %2265 = vmatpush1.bf16.msra.mxu0 0
        %2266 = vmatprep.subr.bf16.mxu0 0
        %2267 = vmatpush1.bf16.msra.mxu0 0
        %2268 = vmatprep.subr.bf16.mxu0 0
        %2269 = vmatpush1.bf16.msra.mxu0 0
        %2270 = vmatprep.subr.bf16.mxu0 0
        %2271 = vmatpush1.bf16.msra.mxu0 0
        %2272 = vmatprep.subr.bf16.mxu0 0
        %2273 = vmatpush1.bf16.msra.mxu0 0
        %2274 = vmatprep.subr.bf16.mxu0 0
        %2275 = vmatpush1.bf16.msra.mxu0 0
        %2276 = vmatprep.subr.bf16.mxu0 0
        %2277 = vmatpush1.bf16.msra.mxu0 0
        %2278 = vmatprep.mubr.bf16.mxu0 0
        %2279 = vmatmul.mubr.bf16.gmra.mrb[0].mxu0 %v2166
        %v2280 = vpop.f32.mrb[0].mxu0
        %v2281 = vadd.f32 0.0, %v2280
        %v2282 = vpop.f32.mrb[0].mxu0
        %v2283 = vpop.f32.mrb[0].mxu0
        %v2284 = vadd.f32 0.0, %v2283
        %v2285 = vpop.f32.mrb[0].mxu0
        %2286 = vmatprep.mubr.bf16.mxu0 0
        %2287 = vmatmul.mubr.bf16.gmra.mrb[0].mxu0 %v2175
        %v2288 = vpop.f32.mrb[0].mxu0
        %v2289 = vadd.f32 0.0, %v2288
        %v2290 = vpop.f32.mrb[0].mxu0
        %v2291 = vpop.f32.mrb[0].mxu0
        %v2292 = vadd.f32 0.0, %v2291
        %v2293 = vpop.f32.mrb[0].mxu0
        %2294 = vmatprep.mubr.bf16.mxu0 0
        %2295 = vmatmul.mubr.bf16.gmra.mrb[0].mxu0 %v2184
        %v2296 = vpop.f32.mrb[0].mxu0
        %v2297 = vadd.f32 0.0, %v2296
        %v2298 = vpop.f32.mrb[0].mxu0
        %v2299 = vpop.f32.mrb[0].mxu0
        %v2300 = vadd.f32 0.0, %v2299
        %v2301 = vpop.f32.mrb[0].mxu0
        %2302 = vmatprep.mubr.bf16.mxu0 0
        %2303 = vmatmul.mubr.bf16.gmra.mrb[0].mxu0 %v2193
        %v2304 = vpop.f32.mrb[0].mxu0
        %v2305 = vadd.f32 0.0, %v2304
        %v2306 = vpop.f32.mrb[0].mxu0
        %v2307 = vpop.f32.mrb[0].mxu0
        %v2308 = vadd.f32 0.0, %v2307
        %v2309 = vpop.f32.mrb[0].mxu0
        %2310 = vdwg.mxu0
        %v2311 = vadd.f32 %v2119, %v2281
        %v2312 = vadd.f32 %v2120, %v2284
        %v2313 = vadd.f32 %v2121, %v2289
        %v2314 = vadd.f32 %v2122, %v2292
        %v2315 = vadd.f32 %v2123, %v2297
        %v2316 = vadd.f32 %v2124, %v2300
        %v2317 = vadd.f32 %v2125, %v2305
        %v2318 = vadd.f32 %v2126, %v2308
        %v2319 = vld [vmem:[%s2] sm:$0x1]
        %v2321 = vlaneseq
        %v2322 = vshrl.u32 %v2321, 7
        %v2323 = vsub.s32 0, %v2322
        %v2324 = vrot.slane %v2319, %v2323
        %v2326 = vadd.f32 %v2311, %v2324
        %v2327 = vadd.f32 %v2312, %v2324
        %v2328 = vadd.f32 %v2313, %v2324
        %v2329 = vadd.f32 %v2314, %v2324
        %v2330 = vadd.f32 %v2315, %v2324
        %v2331 = vadd.f32 %v2316, %v2324
        %v2332 = vadd.f32 %v2317, %v2324
        %v2333 = vadd.f32 %v2318, %v2324
        %v2334 = vmax.f32 %v2326, 0.0
        %v2335 = vmax.f32 %v2327, 0.0
        %v2336 = vmax.f32 %v2328, 0.0
        %v2337 = vmax.f32 %v2329, 0.0
        %v2338 = vmax.f32 %v2330, 0.0
        %v2339 = vmax.f32 %v2331, 0.0
        %v2340 = vmax.f32 %v2332, 0.0
        %v2341 = vmax.f32 %v2333, 0.0
        %2342 = vst [vmem:[#allocation3] sm:$0xff] 0
        %2343 = vst [vmem:[#allocation3 + $0x28] sm:$0xff] 0
        %v2344 = vpack.c.bf16 %v2335, %v2334
        %v2345 = vpack.c.bf16 %v2337, %v2336
        %v2346 = vpack.c.bf16 %v2339, %v2338
        %v2347 = vpack.c.bf16 %v2341, %v2340
        %2348 = vst [vmem:[#allocation3 + $0x8] sm:$0xff] %v2344
        %2349 = vst [vmem:[#allocation3 + $0x10] sm:$0xff] %v2345
        %2350 = vst [vmem:[#allocation3 + $0x18] sm:$0xff] %v2346
        %2351 = vst [vmem:[#allocation3 + $0x20] sm:$0xff] %v2347
        %v2352 = vld [vmem:[#allocation3] sm:$0xf8]
        %v2353 = vld [vmem:[#allocation3 + $0x8] sm:$0xff]
        %v2354 = vld [vmem:[#allocation3 + $0x10] sm:$0xff]
        %v2355 = vld [vmem:[#allocation3 + $0x18] sm:$0xff]
        %v2356 = vld [vmem:[#allocation3 + $0x20] sm:$0xf]
        %v2357 = vsel %vm618, %v2352, 0
        %v2358 = vsel %vm619, %v2353, 0
        %v2359 = vsel %vm620, %v2354, 0
        %v2360 = vsel %vm621, %v2355, 0
        %v2361 = vsel %vm622, %v2356, 0
        %v2362 = vld [vmem:[#allocation9] sm:$0xf]
        %v2363 = vld [vmem:[#allocation9 + $0x4] sm:$0xf]
        %v2364 = vld [vmem:[#allocation9 + $0x8] sm:$0xf]
        %v2365 = vld [vmem:[#allocation9 + $0xc] sm:$0xf]
        %v2366 = vld [vmem:[#allocation9 + $0x10] sm:$0xf]
        %v2367 = vld [vmem:[#allocation9 + $0x14] sm:$0xf]
        %v2368 = vld [vmem:[#allocation9 + $0x18] sm:$0xf]
        %v2369 = vld [vmem:[#allocation9 + $0x1c] sm:$0xf]
        %v2370 = vld [vmem:[#allocation9 + $0x20] sm:$0xf]
        %v2371 = vld [vmem:[#allocation9 + $0x24] sm:$0xf]
        %v2372 = vld [vmem:[#allocation9 + $0x28] sm:$0xf]
        %v2373 = vld [vmem:[#allocation9 + $0x2c] sm:$0xf]
        %v2374 = vld [vmem:[#allocation9 + $0x30] sm:$0xf]
        %v2375 = vld [vmem:[#allocation9 + $0x34] sm:$0xf]
        %v2376 = vld [vmem:[#allocation9 + $0x38] sm:$0xf]
        %v2377 = vld [vmem:[#allocation9 + $0x3c] sm:$0xf]
        %v2378 = vld [vmem:[#allocation3] sm:$0xf0]
        %s2379 = scalar_lea.vmem [#allocation9], 64
        %v2380 = vld [vmem:[%s2379] sm:$0xf]
        %v2381 = vld [vmem:[%s2379 + $0x4] sm:$0xf]
        %v2382 = vld [vmem:[%s2379 + $0x8] sm:$0xf]
        %v2383 = vld [vmem:[%s2379 + $0xc] sm:$0xf]
        %v2384 = vld [vmem:[%s2379 + $0x10] sm:$0xf]
        %v2385 = vld [vmem:[%s2379 + $0x14] sm:$0xf]
        %v2386 = vld [vmem:[%s2379 + $0x18] sm:$0xf]
        %v2387 = vld [vmem:[%s2379 + $0x1c] sm:$0xf]
        %v2388 = vld [vmem:[%s2379 + $0x20] sm:$0xf]
        %v2389 = vld [vmem:[%s2379 + $0x24] sm:$0xf]
        %v2390 = vld [vmem:[%s2379 + $0x28] sm:$0xf]
        %v2391 = vld [vmem:[%s2379 + $0x2c] sm:$0xf]
        %v2392 = vld [vmem:[%s2379 + $0x30] sm:$0xf]
        %v2393 = vld [vmem:[%s2379 + $0x34] sm:$0xf]
        %v2394 = vld [vmem:[%s2379 + $0x38] sm:$0xf]
        %v2395 = vld [vmem:[%s2379 + $0x3c] sm:$0xf]
        %v2401 = vrot.slane %v2378, 4
        %v2402 = vrot.slane %v2353, 4
        %v2403 = vsel %vm667, %v2401, %v2402
        %v2404 = vrot.slane %v2354, 4
        %v2405 = vsel %vm667, %v2402, %v2404
        %v2406 = vrot.slane %v2355, 4
        %v2407 = vsel %vm667, %v2404, %v2406
        %v2408 = vrot.slane %v2356, 4
        %v2409 = vsel %vm667, %v2406, %v2408
        %v2430 = vunpack.c.l.b16 %v2380
        %v2431 = vunpack.c.l.b16 %v2381
        %v2432 = vunpack.c.l.b16 %v2382
        %v2433 = vunpack.c.l.b16 %v2383
        %v2434 = vunpack.c.l.b16 %v2384
        %v2435 = vunpack.c.l.b16 %v2385
        %v2436 = vunpack.c.l.b16 %v2386
        %v2437 = vunpack.c.l.b16 %v2387
        %v2438 = vunpack.c.l.b16 %v2388
        %v2439 = vunpack.c.l.b16 %v2389
        %v2440 = vunpack.c.l.b16 %v2390
        %v2441 = vunpack.c.l.b16 %v2391
        %v2442 = vunpack.c.l.b16 %v2392
        %v2443 = vunpack.c.l.b16 %v2393
        %v2444 = vunpack.c.l.b16 %v2394
        %v2445 = vunpack.c.l.b16 %v2395
        %v2446 = vpack.c.b16 %v2431, %v2430
        %v2447 = vpack.c.b16 %v2433, %v2432
        %v2448 = vpack.c.b16 %v2435, %v2434
        %v2449 = vpack.c.b16 %v2437, %v2436
        %v2450 = vpack.c.b16 %v2439, %v2438
        %v2451 = vpack.c.b16 %v2441, %v2440
        %v2452 = vpack.c.b16 %v2443, %v2442
        %v2453 = vpack.c.b16 %v2445, %v2444
        %2462 = vmatprep.subr.bf16.mxu0 0
        %2463 = vmatpush1.bf16.msra.mxu0 %v2446
        %2464 = vmatprep.subr.bf16.mxu0 0
        %2465 = vmatpush1.bf16.msra.mxu0 %v2447
        %2466 = vmatprep.subr.bf16.mxu0 0
        %2467 = vmatpush1.bf16.msra.mxu0 %v2448
        %2468 = vmatprep.subr.bf16.mxu0 0
        %2469 = vmatpush1.bf16.msra.mxu0 %v2449
        %2470 = vmatprep.subr.bf16.mxu0 0
        %2471 = vmatpush1.bf16.msra.mxu0 %v2450
        %2472 = vmatprep.subr.bf16.mxu0 0
        %2473 = vmatpush1.bf16.msra.mxu0 %v2451
        %2474 = vmatprep.subr.bf16.mxu0 0
        %2475 = vmatpush1.bf16.msra.mxu0 %v2452
        %2476 = vmatprep.subr.bf16.mxu0 0
        %2477 = vmatpush1.bf16.msra.mxu0 %v2453
        %2478 = vmatprep.subr.bf16.mxu0 0
        %2479 = vmatpush1.bf16.msra.mxu0 0
        %2480 = vmatprep.subr.bf16.mxu0 0
        %2481 = vmatpush1.bf16.msra.mxu0 0
        %2482 = vmatprep.subr.bf16.mxu0 0
        %2483 = vmatpush1.bf16.msra.mxu0 0
        %2484 = vmatprep.subr.bf16.mxu0 0
        %2485 = vmatpush1.bf16.msra.mxu0 0
        %2486 = vmatprep.subr.bf16.mxu0 0
        %2487 = vmatpush1.bf16.msra.mxu0 0
        %2488 = vmatprep.subr.bf16.mxu0 0
        %2489 = vmatpush1.bf16.msra.mxu0 0
        %2490 = vmatprep.subr.bf16.mxu0 0
        %2491 = vmatpush1.bf16.msra.mxu0 0
        %2492 = vmatprep.subr.bf16.mxu0 0
        %2493 = vmatpush1.bf16.msra.mxu0 0
        %2494 = vmatprep.mubr.bf16.mxu0 0
        %2495 = vmatmul.mubr.bf16.gmra.mrb[0].mxu0 %v2403
        %v2496 = vpop.f32.mrb[0].mxu0
        %v2497 = vadd.f32 0.0, %v2496
        %v2498 = vpop.f32.mrb[0].mxu0
        %v2499 = vpop.f32.mrb[0].mxu0
        %v2500 = vadd.f32 0.0, %v2499
        %v2501 = vpop.f32.mrb[0].mxu0
        %2502 = vmatprep.mubr.bf16.mxu0 0
        %2503 = vmatmul.mubr.bf16.gmra.mrb[0].mxu0 %v2405
        %v2504 = vpop.f32.mrb[0].mxu0
        %v2505 = vadd.f32 0.0, %v2504
        %v2506 = vpop.f32.mrb[0].mxu0
        %v2507 = vpop.f32.mrb[0].mxu0
        %v2508 = vadd.f32 0.0, %v2507
        %v2509 = vpop.f32.mrb[0].mxu0
        %2510 = vmatprep.mubr.bf16.mxu0 0
        %2511 = vmatmul.mubr.bf16.gmra.mrb[0].mxu0 %v2407
        %v2512 = vpop.f32.mrb[0].mxu0
        %v2513 = vadd.f32 0.0, %v2512
        %v2514 = vpop.f32.mrb[0].mxu0
        %v2515 = vpop.f32.mrb[0].mxu0
        %v2516 = vadd.f32 0.0, %v2515
        %v2517 = vpop.f32.mrb[0].mxu0
        %2518 = vmatprep.mubr.bf16.mxu0 0
        %2519 = vmatmul.mubr.bf16.gmra.mrb[0].mxu0 %v2409
        %v2520 = vpop.f32.mrb[0].mxu0
        %v2521 = vadd.f32 0.0, %v2520
        %v2522 = vpop.f32.mrb[0].mxu0
        %v2523 = vpop.f32.mrb[0].mxu0
        %v2524 = vadd.f32 0.0, %v2523
        %v2525 = vpop.f32.mrb[0].mxu0
        %2526 = vdwg.mxu0
        %v2528 = vshrl.u32 %v2357, 16
        %v2530 = vrot.slane %v2528, 3
        %v2531 = vshll.u32 %v2357, 16
        %v2533 = vrot.slane %v2531, 4
        %v2534 = vor.u32 %v2530, %v2533
        %v2536 = vshrl.u32 %v2358, 16
        %v2538 = vrot.slane %v2536, 3
        %v2539 = vshll.u32 %v2358, 16
        %v2541 = vrot.slane %v2539, 4
        %v2542 = vor.u32 %v2538, %v2541
        %v2543 = vsel %vm794, %v2534, %v2542
        %v2545 = vshrl.u32 %v2359, 16
        %v2547 = vrot.slane %v2545, 3
        %v2548 = vshll.u32 %v2359, 16
        %v2550 = vrot.slane %v2548, 4
        %v2551 = vor.u32 %v2547, %v2550
        %v2552 = vsel %vm794, %v2542, %v2551
        %v2554 = vshrl.u32 %v2360, 16
        %v2556 = vrot.slane %v2554, 3
        %v2557 = vshll.u32 %v2360, 16
        %v2559 = vrot.slane %v2557, 4
        %v2560 = vor.u32 %v2556, %v2559
        %v2561 = vsel %vm794, %v2551, %v2560
        %v2563 = vshrl.u32 %v2361, 16
        %v2565 = vrot.slane %v2563, 3
        %v2566 = vshll.u32 %v2361, 16
        %v2568 = vrot.slane %v2566, 4
        %v2569 = vor.u32 %v2565, %v2568
        %v2570 = vsel %vm794, %v2560, %v2569
        %v2591 = vunpack.c.l.b16 %v2362
        %v2592 = vunpack.c.l.b16 %v2363
        %v2593 = vunpack.c.l.b16 %v2364
        %v2594 = vunpack.c.l.b16 %v2365
        %v2595 = vunpack.c.l.b16 %v2366
        %v2596 = vunpack.c.l.b16 %v2367
        %v2597 = vunpack.c.l.b16 %v2368
        %v2598 = vunpack.c.l.b16 %v2369
        %v2599 = vunpack.c.l.b16 %v2370
        %v2600 = vunpack.c.l.b16 %v2371
        %v2601 = vunpack.c.l.b16 %v2372
        %v2602 = vunpack.c.l.b16 %v2373
        %v2603 = vunpack.c.l.b16 %v2374
        %v2604 = vunpack.c.l.b16 %v2375
        %v2605 = vunpack.c.l.b16 %v2376
        %v2606 = vunpack.c.l.b16 %v2377
        %v2607 = vpack.c.b16 %v2592, %v2591
        %v2608 = vpack.c.b16 %v2594, %v2593
        %v2609 = vpack.c.b16 %v2596, %v2595
        %v2610 = vpack.c.b16 %v2598, %v2597
        %v2611 = vpack.c.b16 %v2600, %v2599
        %v2612 = vpack.c.b16 %v2602, %v2601
        %v2613 = vpack.c.b16 %v2604, %v2603
        %v2614 = vpack.c.b16 %v2606, %v2605
        %2623 = vmatprep.subr.bf16.mxu0 0
        %2624 = vmatpush1.bf16.msra.mxu0 %v2607
        %2625 = vmatprep.subr.bf16.mxu0 0
        %2626 = vmatpush1.bf16.msra.mxu0 %v2608
        %2627 = vmatprep.subr.bf16.mxu0 0
        %2628 = vmatpush1.bf16.msra.mxu0 %v2609
        %2629 = vmatprep.subr.bf16.mxu0 0
        %2630 = vmatpush1.bf16.msra.mxu0 %v2610
        %2631 = vmatprep.subr.bf16.mxu0 0
        %2632 = vmatpush1.bf16.msra.mxu0 %v2611
        %2633 = vmatprep.subr.bf16.mxu0 0
        %2634 = vmatpush1.bf16.msra.mxu0 %v2612
        %2635 = vmatprep.subr.bf16.mxu0 0
        %2636 = vmatpush1.bf16.msra.mxu0 %v2613
        %2637 = vmatprep.subr.bf16.mxu0 0
        %2638 = vmatpush1.bf16.msra.mxu0 %v2614
        %2639 = vmatprep.subr.bf16.mxu0 0
        %2640 = vmatpush1.bf16.msra.mxu0 0
        %2641 = vmatprep.subr.bf16.mxu0 0
        %2642 = vmatpush1.bf16.msra.mxu0 0
        %2643 = vmatprep.subr.bf16.mxu0 0
        %2644 = vmatpush1.bf16.msra.mxu0 0
        %2645 = vmatprep.subr.bf16.mxu0 0
        %2646 = vmatpush1.bf16.msra.mxu0 0
        %2647 = vmatprep.subr.bf16.mxu0 0
        %2648 = vmatpush1.bf16.msra.mxu0 0
        %2649 = vmatprep.subr.bf16.mxu0 0
        %2650 = vmatpush1.bf16.msra.mxu0 0
        %2651 = vmatprep.subr.bf16.mxu0 0
        %2652 = vmatpush1.bf16.msra.mxu0 0
        %2653 = vmatprep.subr.bf16.mxu0 0
        %2654 = vmatpush1.bf16.msra.mxu0 0
        %2655 = vmatprep.mubr.bf16.mxu0 0
        %2656 = vmatmul.mubr.bf16.gmra.mrb[0].mxu0 %v2543
        %v2657 = vpop.f32.mrb[0].mxu0
        %v2658 = vadd.f32 %v2497, %v2657
        %v2659 = vpop.f32.mrb[0].mxu0
        %v2660 = vpop.f32.mrb[0].mxu0
        %v2661 = vadd.f32 %v2500, %v2660
        %v2662 = vpop.f32.mrb[0].mxu0
        %2663 = vmatprep.mubr.bf16.mxu0 0
        %2664 = vmatmul.mubr.bf16.gmra.mrb[0].mxu0 %v2552
        %v2665 = vpop.f32.mrb[0].mxu0
        %v2666 = vadd.f32 %v2505, %v2665
        %v2667 = vpop.f32.mrb[0].mxu0
        %v2668 = vpop.f32.mrb[0].mxu0
        %v2669 = vadd.f32 %v2508, %v2668
        %v2670 = vpop.f32.mrb[0].mxu0
        %2671 = vmatprep.mubr.bf16.mxu0 0
        %2672 = vmatmul.mubr.bf16.gmra.mrb[0].mxu0 %v2561
        %v2673 = vpop.f32.mrb[0].mxu0
        %v2674 = vadd.f32 %v2513, %v2673
        %v2675 = vpop.f32.mrb[0].mxu0
        %v2676 = vpop.f32.mrb[0].mxu0
        %v2677 = vadd.f32 %v2516, %v2676
        %v2678 = vpop.f32.mrb[0].mxu0
        %2679 = vmatprep.mubr.bf16.mxu0 0
        %2680 = vmatmul.mubr.bf16.gmra.mrb[0].mxu0 %v2570
        %v2681 = vpop.f32.mrb[0].mxu0
        %v2682 = vadd.f32 %v2521, %v2681
        %v2683 = vpop.f32.mrb[0].mxu0
        %v2684 = vpop.f32.mrb[0].mxu0
        %v2685 = vadd.f32 %v2524, %v2684
        %v2686 = vpop.f32.mrb[0].mxu0
        %2687 = vdwg.mxu0
        %v2688 = vld [vmem:[#allocation3 + $0x20] sm:$0x1f]
        %v2689 = vsel %vm1036, %v2378, 0
        %v2690 = vsel %vm1037, %v2353, 0
        %v2691 = vsel %vm1038, %v2354, 0
        %v2692 = vsel %vm1039, %v2355, 0
        %v2693 = vsel %vm1040, %v2688, 0
        %s2694 = scalar_lea.vmem [#allocation9], 128
        %v2695 = vld [vmem:[%s2694] sm:$0xf]
        %v2696 = vld [vmem:[%s2694 + $0x4] sm:$0xf]
        %v2697 = vld [vmem:[%s2694 + $0x8] sm:$0xf]
        %v2698 = vld [vmem:[%s2694 + $0xc] sm:$0xf]
        %v2699 = vld [vmem:[%s2694 + $0x10] sm:$0xf]
        %v2700 = vld [vmem:[%s2694 + $0x14] sm:$0xf]
        %v2701 = vld [vmem:[%s2694 + $0x18] sm:$0xf]
        %v2702 = vld [vmem:[%s2694 + $0x1c] sm:$0xf]
        %v2703 = vld [vmem:[%s2694 + $0x20] sm:$0xf]
        %v2704 = vld [vmem:[%s2694 + $0x24] sm:$0xf]
        %v2705 = vld [vmem:[%s2694 + $0x28] sm:$0xf]
        %v2706 = vld [vmem:[%s2694 + $0x2c] sm:$0xf]
        %v2707 = vld [vmem:[%s2694 + $0x30] sm:$0xf]
        %v2708 = vld [vmem:[%s2694 + $0x34] sm:$0xf]
        %v2709 = vld [vmem:[%s2694 + $0x38] sm:$0xf]
        %v2710 = vld [vmem:[%s2694 + $0x3c] sm:$0xf]
        %v2712 = vshrl.u32 %v2689, 16
        %v2714 = vrot.slane %v2712, 4
        %v2715 = vshll.u32 %v2689, 16
        %v2717 = vrot.slane %v2715, 5
        %v2718 = vor.u32 %v2714, %v2717
        %v2720 = vshrl.u32 %v2690, 16
        %v2722 = vrot.slane %v2720, 4
        %v2723 = vshll.u32 %v2690, 16
        %v2725 = vrot.slane %v2723, 5
        %v2726 = vor.u32 %v2722, %v2725
        %v2727 = vsel %vm582, %v2718, %v2726
        %v2729 = vshrl.u32 %v2691, 16
        %v2731 = vrot.slane %v2729, 4
        %v2732 = vshll.u32 %v2691, 16
        %v2734 = vrot.slane %v2732, 5
        %v2735 = vor.u32 %v2731, %v2734
        %v2736 = vsel %vm582, %v2726, %v2735
        %v2738 = vshrl.u32 %v2692, 16
        %v2740 = vrot.slane %v2738, 4
        %v2741 = vshll.u32 %v2692, 16
        %v2743 = vrot.slane %v2741, 5
        %v2744 = vor.u32 %v2740, %v2743
        %v2745 = vsel %vm582, %v2735, %v2744
        %v2747 = vshrl.u32 %v2693, 16
        %v2749 = vrot.slane %v2747, 4
        %v2750 = vshll.u32 %v2693, 16
        %v2752 = vrot.slane %v2750, 5
        %v2753 = vor.u32 %v2749, %v2752
        %v2754 = vsel %vm582, %v2744, %v2753
        %v2775 = vunpack.c.l.b16 %v2695
        %v2776 = vunpack.c.l.b16 %v2696
        %v2777 = vunpack.c.l.b16 %v2697
        %v2778 = vunpack.c.l.b16 %v2698
        %v2779 = vunpack.c.l.b16 %v2699
        %v2780 = vunpack.c.l.b16 %v2700
        %v2781 = vunpack.c.l.b16 %v2701
        %v2782 = vunpack.c.l.b16 %v2702
        %v2783 = vunpack.c.l.b16 %v2703
        %v2784 = vunpack.c.l.b16 %v2704
        %v2785 = vunpack.c.l.b16 %v2705
        %v2786 = vunpack.c.l.b16 %v2706
        %v2787 = vunpack.c.l.b16 %v2707
        %v2788 = vunpack.c.l.b16 %v2708
        %v2789 = vunpack.c.l.b16 %v2709
        %v2790 = vunpack.c.l.b16 %v2710
        %v2791 = vpack.c.b16 %v2776, %v2775
        %v2792 = vpack.c.b16 %v2778, %v2777
        %v2793 = vpack.c.b16 %v2780, %v2779
        %v2794 = vpack.c.b16 %v2782, %v2781
        %v2795 = vpack.c.b16 %v2784, %v2783
        %v2796 = vpack.c.b16 %v2786, %v2785
        %v2797 = vpack.c.b16 %v2788, %v2787
        %v2798 = vpack.c.b16 %v2790, %v2789
        %2807 = vmatprep.subr.bf16.mxu0 0
        %2808 = vmatpush1.bf16.msra.mxu0 %v2791
        %2809 = vmatprep.subr.bf16.mxu0 0
        %2810 = vmatpush1.bf16.msra.mxu0 %v2792
        %2811 = vmatprep.subr.bf16.mxu0 0
        %2812 = vmatpush1.bf16.msra.mxu0 %v2793
        %2813 = vmatprep.subr.bf16.mxu0 0
        %2814 = vmatpush1.bf16.msra.mxu0 %v2794
        %2815 = vmatprep.subr.bf16.mxu0 0
        %2816 = vmatpush1.bf16.msra.mxu0 %v2795
        %2817 = vmatprep.subr.bf16.mxu0 0
        %2818 = vmatpush1.bf16.msra.mxu0 %v2796
        %2819 = vmatprep.subr.bf16.mxu0 0
        %2820 = vmatpush1.bf16.msra.mxu0 %v2797
        %2821 = vmatprep.subr.bf16.mxu0 0
        %2822 = vmatpush1.bf16.msra.mxu0 %v2798
        %2823 = vmatprep.subr.bf16.mxu0 0
        %2824 = vmatpush1.bf16.msra.mxu0 0
        %2825 = vmatprep.subr.bf16.mxu0 0
        %2826 = vmatpush1.bf16.msra.mxu0 0
        %2827 = vmatprep.subr.bf16.mxu0 0
        %2828 = vmatpush1.bf16.msra.mxu0 0
        %2829 = vmatprep.subr.bf16.mxu0 0
        %2830 = vmatpush1.bf16.msra.mxu0 0
        %2831 = vmatprep.subr.bf16.mxu0 0
        %2832 = vmatpush1.bf16.msra.mxu0 0
        %2833 = vmatprep.subr.bf16.mxu0 0
        %2834 = vmatpush1.bf16.msra.mxu0 0
        %2835 = vmatprep.subr.bf16.mxu0 0
        %2836 = vmatpush1.bf16.msra.mxu0 0
        %2837 = vmatprep.subr.bf16.mxu0 0
        %2838 = vmatpush1.bf16.msra.mxu0 0
        %2839 = vmatprep.mubr.bf16.mxu0 0
        %2840 = vmatmul.mubr.bf16.gmra.mrb[0].mxu0 %v2727
        %v2841 = vpop.f32.mrb[0].mxu0
        %v2842 = vadd.f32 0.0, %v2841
        %v2843 = vpop.f32.mrb[0].mxu0
        %v2844 = vpop.f32.mrb[0].mxu0
        %v2845 = vadd.f32 0.0, %v2844
        %v2846 = vpop.f32.mrb[0].mxu0
        %2847 = vmatprep.mubr.bf16.mxu0 0
        %2848 = vmatmul.mubr.bf16.gmra.mrb[0].mxu0 %v2736
        %v2849 = vpop.f32.mrb[0].mxu0
        %v2850 = vadd.f32 0.0, %v2849
        %v2851 = vpop.f32.mrb[0].mxu0
        %v2852 = vpop.f32.mrb[0].mxu0
        %v2853 = vadd.f32 0.0, %v2852
        %v2854 = vpop.f32.mrb[0].mxu0
        %2855 = vmatprep.mubr.bf16.mxu0 0
        %2856 = vmatmul.mubr.bf16.gmra.mrb[0].mxu0 %v2745
        %v2857 = vpop.f32.mrb[0].mxu0
        %v2858 = vadd.f32 0.0, %v2857
        %v2859 = vpop.f32.mrb[0].mxu0
        %v2860 = vpop.f32.mrb[0].mxu0
        %v2861 = vadd.f32 0.0, %v2860
        %v2862 = vpop.f32.mrb[0].mxu0
        %2863 = vmatprep.mubr.bf16.mxu0 0
        %2864 = vmatmul.mubr.bf16.gmra.mrb[0].mxu0 %v2754
        %v2865 = vpop.f32.mrb[0].mxu0
        %v2866 = vadd.f32 0.0, %v2865
        %v2867 = vpop.f32.mrb[0].mxu0
        %v2868 = vpop.f32.mrb[0].mxu0
        %v2869 = vadd.f32 0.0, %v2868
        %v2870 = vpop.f32.mrb[0].mxu0
        %2871 = vdwg.mxu0
        %v2872 = vadd.f32 %v2658, %v2842
        %v2873 = vadd.f32 %v2661, %v2845
        %v2874 = vadd.f32 %v2666, %v2850
        %v2875 = vadd.f32 %v2669, %v2853
        %v2876 = vadd.f32 %v2674, %v2858
        %v2877 = vadd.f32 %v2677, %v2861
        %v2878 = vadd.f32 %v2682, %v2866
        %v2879 = vadd.f32 %v2685, %v2869
        %v2880 = vld [vmem:[#allocation3] sm:$0x80]
        %v2881 = vld [vmem:[#allocation3 + $0x20] sm:$0xff]
        %v2882 = vsel %vm1246, %v2880, 0
        %v2883 = vsel %vm1247, %v2353, 0
        %v2884 = vsel %vm1248, %v2354, 0
        %v2885 = vsel %vm1249, %v2355, 0
        %v2886 = vsel %vm1250, %v2881, 0
        %s2887 = scalar_lea.vmem [#allocation9], 192
        %v2888 = vld [vmem:[%s2887] sm:$0xf]
        %v2889 = vld [vmem:[%s2887 + $0x4] sm:$0xf]
        %v2890 = vld [vmem:[%s2887 + $0x8] sm:$0xf]
        %v2891 = vld [vmem:[%s2887 + $0xc] sm:$0xf]
        %v2892 = vld [vmem:[%s2887 + $0x10] sm:$0xf]
        %v2893 = vld [vmem:[%s2887 + $0x14] sm:$0xf]
        %v2894 = vld [vmem:[%s2887 + $0x18] sm:$0xf]
        %v2895 = vld [vmem:[%s2887 + $0x1c] sm:$0xf]
        %v2896 = vld [vmem:[%s2887 + $0x20] sm:$0xf]
        %v2897 = vld [vmem:[%s2887 + $0x24] sm:$0xf]
        %v2898 = vld [vmem:[%s2887 + $0x28] sm:$0xf]
        %v2899 = vld [vmem:[%s2887 + $0x2c] sm:$0xf]
        %v2900 = vld [vmem:[%s2887 + $0x30] sm:$0xf]
        %v2901 = vld [vmem:[%s2887 + $0x34] sm:$0xf]
        %v2902 = vld [vmem:[%s2887 + $0x38] sm:$0xf]
        %v2903 = vld [vmem:[%s2887 + $0x3c] sm:$0xf]
        %v2905 = vshrl.u32 %v2882, 16
        %v2907 = vrot.slane %v2905, 7
        %v2909 = vshrl.u32 %v2883, 16
        %v2911 = vrot.slane %v2909, 7
        %v2912 = vshll.u32 %v2883, 16
        %v2914 = vor.u32 %v2911, %v2912
        %v2915 = vsel %vm1273, %v2907, %v2914
        %v2917 = vshrl.u32 %v2884, 16
        %v2919 = vrot.slane %v2917, 7
        %v2920 = vshll.u32 %v2884, 16
        %v2922 = vor.u32 %v2919, %v2920
        %v2923 = vsel %vm1273, %v2911, %v2922
        %v2925 = vshrl.u32 %v2885, 16
        %v2927 = vrot.slane %v2925, 7
        %v2928 = vshll.u32 %v2885, 16
        %v2930 = vor.u32 %v2927, %v2928
        %v2931 = vsel %vm1273, %v2919, %v2930
        %v2933 = vshrl.u32 %v2886, 16
        %v2935 = vrot.slane %v2933, 7
        %v2936 = vshll.u32 %v2886, 16
        %v2938 = vor.u32 %v2935, %v2936
        %v2939 = vsel %vm1273, %v2927, %v2938
        %v2960 = vunpack.c.l.b16 %v2888
        %v2961 = vunpack.c.l.b16 %v2889
        %v2962 = vunpack.c.l.b16 %v2890
        %v2963 = vunpack.c.l.b16 %v2891
        %v2964 = vunpack.c.l.b16 %v2892
        %v2965 = vunpack.c.l.b16 %v2893
        %v2966 = vunpack.c.l.b16 %v2894
        %v2967 = vunpack.c.l.b16 %v2895
        %v2968 = vunpack.c.l.b16 %v2896
        %v2969 = vunpack.c.l.b16 %v2897
        %v2970 = vunpack.c.l.b16 %v2898
        %v2971 = vunpack.c.l.b16 %v2899
        %v2972 = vunpack.c.l.b16 %v2900
        %v2973 = vunpack.c.l.b16 %v2901
        %v2974 = vunpack.c.l.b16 %v2902
        %v2975 = vunpack.c.l.b16 %v2903
        %v2976 = vpack.c.b16 %v2961, %v2960
        %v2977 = vpack.c.b16 %v2963, %v2962
        %v2978 = vpack.c.b16 %v2965, %v2964
        %v2979 = vpack.c.b16 %v2967, %v2966
        %v2980 = vpack.c.b16 %v2969, %v2968
        %v2981 = vpack.c.b16 %v2971, %v2970
        %v2982 = vpack.c.b16 %v2973, %v2972
        %v2983 = vpack.c.b16 %v2975, %v2974
        %2992 = vmatprep.subr.bf16.mxu0 0
        %2993 = vmatpush1.bf16.msra.mxu0 %v2976
        %2994 = vmatprep.subr.bf16.mxu0 0
        %2995 = vmatpush1.bf16.msra.mxu0 %v2977
        %2996 = vmatprep.subr.bf16.mxu0 0
        %2997 = vmatpush1.bf16.msra.mxu0 %v2978
        %2998 = vmatprep.subr.bf16.mxu0 0
        %2999 = vmatpush1.bf16.msra.mxu0 %v2979
        %3000 = vmatprep.subr.bf16.mxu0 0
        %3001 = vmatpush1.bf16.msra.mxu0 %v2980
        %3002 = vmatprep.subr.bf16.mxu0 0
        %3003 = vmatpush1.bf16.msra.mxu0 %v2981
        %3004 = vmatprep.subr.bf16.mxu0 0
        %3005 = vmatpush1.bf16.msra.mxu0 %v2982
        %3006 = vmatprep.subr.bf16.mxu0 0
        %3007 = vmatpush1.bf16.msra.mxu0 %v2983
        %3008 = vmatprep.subr.bf16.mxu0 0
        %3009 = vmatpush1.bf16.msra.mxu0 0
        %3010 = vmatprep.subr.bf16.mxu0 0
        %3011 = vmatpush1.bf16.msra.mxu0 0
        %3012 = vmatprep.subr.bf16.mxu0 0
        %3013 = vmatpush1.bf16.msra.mxu0 0
        %3014 = vmatprep.subr.bf16.mxu0 0
        %3015 = vmatpush1.bf16.msra.mxu0 0
        %3016 = vmatprep.subr.bf16.mxu0 0
        %3017 = vmatpush1.bf16.msra.mxu0 0
        %3018 = vmatprep.subr.bf16.mxu0 0
        %3019 = vmatpush1.bf16.msra.mxu0 0
        %3020 = vmatprep.subr.bf16.mxu0 0
        %3021 = vmatpush1.bf16.msra.mxu0 0
        %3022 = vmatprep.subr.bf16.mxu0 0
        %3023 = vmatpush1.bf16.msra.mxu0 0
        %3024 = vmatprep.mubr.bf16.mxu0 0
        %3025 = vmatmul.mubr.bf16.gmra.mrb[0].mxu0 %v2915
        %v3026 = vpop.f32.mrb[0].mxu0
        %v3027 = vadd.f32 0.0, %v3026
        %v3028 = vpop.f32.mrb[0].mxu0
        %v3029 = vpop.f32.mrb[0].mxu0
        %v3030 = vadd.f32 0.0, %v3029
        %v3031 = vpop.f32.mrb[0].mxu0
        %3032 = vmatprep.mubr.bf16.mxu0 0
        %3033 = vmatmul.mubr.bf16.gmra.mrb[0].mxu0 %v2923
        %v3034 = vpop.f32.mrb[0].mxu0
        %v3035 = vadd.f32 0.0, %v3034
        %v3036 = vpop.f32.mrb[0].mxu0
        %v3037 = vpop.f32.mrb[0].mxu0
        %v3038 = vadd.f32 0.0, %v3037
        %v3039 = vpop.f32.mrb[0].mxu0
        %3040 = vmatprep.mubr.bf16.mxu0 0
        %3041 = vmatmul.mubr.bf16.gmra.mrb[0].mxu0 %v2931
        %v3042 = vpop.f32.mrb[0].mxu0
        %v3043 = vadd.f32 0.0, %v3042
        %v3044 = vpop.f32.mrb[0].mxu0
        %v3045 = vpop.f32.mrb[0].mxu0
        %v3046 = vadd.f32 0.0, %v3045
        %v3047 = vpop.f32.mrb[0].mxu0
        %3048 = vmatprep.mubr.bf16.mxu0 0
        %3049 = vmatmul.mubr.bf16.gmra.mrb[0].mxu0 %v2939
        %v3050 = vpop.f32.mrb[0].mxu0
        %v3051 = vadd.f32 0.0, %v3050
        %v3052 = vpop.f32.mrb[0].mxu0
        %v3053 = vpop.f32.mrb[0].mxu0
        %v3054 = vadd.f32 0.0, %v3053
        %v3055 = vpop.f32.mrb[0].mxu0
        %3056 = vdwg.mxu0
        %v3057 = vadd.f32 %v2872, %v3027
        %v3058 = vadd.f32 %v2873, %v3030
        %v3059 = vadd.f32 %v2874, %v3035
        %v3060 = vadd.f32 %v2875, %v3038
        %v3061 = vadd.f32 %v2876, %v3043
        %v3062 = vadd.f32 %v2877, %v3046
        %v3063 = vadd.f32 %v2878, %v3051
        %v3064 = vadd.f32 %v2879, %v3054
        %s3065 = scalar_lea.vmem [#allocation9], 256
        %v3066 = vld [vmem:[%s3065] sm:$0xf]
        %v3067 = vld [vmem:[%s3065 + $0x4] sm:$0xf]
        %v3068 = vld [vmem:[%s3065 + $0x8] sm:$0xf]
        %v3069 = vld [vmem:[%s3065 + $0xc] sm:$0xf]
        %v3070 = vld [vmem:[%s3065 + $0x10] sm:$0xf]
        %v3071 = vld [vmem:[%s3065 + $0x14] sm:$0xf]
        %v3072 = vld [vmem:[%s3065 + $0x18] sm:$0xf]
        %v3073 = vld [vmem:[%s3065 + $0x1c] sm:$0xf]
        %v3074 = vld [vmem:[%s3065 + $0x20] sm:$0xf]
        %v3075 = vld [vmem:[%s3065 + $0x24] sm:$0xf]
        %v3076 = vld [vmem:[%s3065 + $0x28] sm:$0xf]
        %v3077 = vld [vmem:[%s3065 + $0x2c] sm:$0xf]
        %v3078 = vld [vmem:[%s3065 + $0x30] sm:$0xf]
        %v3079 = vld [vmem:[%s3065 + $0x34] sm:$0xf]
        %v3080 = vld [vmem:[%s3065 + $0x38] sm:$0xf]
        %v3081 = vld [vmem:[%s3065 + $0x3c] sm:$0xf]
        %v3098 = vunpack.c.l.b16 %v3066
        %v3099 = vunpack.c.l.b16 %v3067
        %v3100 = vunpack.c.l.b16 %v3068
        %v3101 = vunpack.c.l.b16 %v3069
        %v3102 = vunpack.c.l.b16 %v3070
        %v3103 = vunpack.c.l.b16 %v3071
        %v3104 = vunpack.c.l.b16 %v3072
        %v3105 = vunpack.c.l.b16 %v3073
        %v3106 = vunpack.c.l.b16 %v3074
        %v3107 = vunpack.c.l.b16 %v3075
        %v3108 = vunpack.c.l.b16 %v3076
        %v3109 = vunpack.c.l.b16 %v3077
        %v3110 = vunpack.c.l.b16 %v3078
        %v3111 = vunpack.c.l.b16 %v3079
        %v3112 = vunpack.c.l.b16 %v3080
        %v3113 = vunpack.c.l.b16 %v3081
        %v3114 = vpack.c.b16 %v3099, %v3098
        %v3115 = vpack.c.b16 %v3101, %v3100
        %v3116 = vpack.c.b16 %v3103, %v3102
        %v3117 = vpack.c.b16 %v3105, %v3104
        %v3118 = vpack.c.b16 %v3107, %v3106
        %v3119 = vpack.c.b16 %v3109, %v3108
        %v3120 = vpack.c.b16 %v3111, %v3110
        %v3121 = vpack.c.b16 %v3113, %v3112
        %3130 = vmatprep.subr.bf16.mxu0 0
        %3131 = vmatpush1.bf16.msra.mxu0 %v3114
        %3132 = vmatprep.subr.bf16.mxu0 0
        %3133 = vmatpush1.bf16.msra.mxu0 %v3115
        %3134 = vmatprep.subr.bf16.mxu0 0
        %3135 = vmatpush1.bf16.msra.mxu0 %v3116
        %3136 = vmatprep.subr.bf16.mxu0 0
        %3137 = vmatpush1.bf16.msra.mxu0 %v3117
        %3138 = vmatprep.subr.bf16.mxu0 0
        %3139 = vmatpush1.bf16.msra.mxu0 %v3118
        %3140 = vmatprep.subr.bf16.mxu0 0
        %3141 = vmatpush1.bf16.msra.mxu0 %v3119
        %3142 = vmatprep.subr.bf16.mxu0 0
        %3143 = vmatpush1.bf16.msra.mxu0 %v3120
        %3144 = vmatprep.subr.bf16.mxu0 0
        %3145 = vmatpush1.bf16.msra.mxu0 %v3121
        %3146 = vmatprep.subr.bf16.mxu0 0
        %3147 = vmatpush1.bf16.msra.mxu0 0
        %3148 = vmatprep.subr.bf16.mxu0 0
        %3149 = vmatpush1.bf16.msra.mxu0 0
        %3150 = vmatprep.subr.bf16.mxu0 0
        %3151 = vmatpush1.bf16.msra.mxu0 0
        %3152 = vmatprep.subr.bf16.mxu0 0
        %3153 = vmatpush1.bf16.msra.mxu0 0
        %3154 = vmatprep.subr.bf16.mxu0 0
        %3155 = vmatpush1.bf16.msra.mxu0 0
        %3156 = vmatprep.subr.bf16.mxu0 0
        %3157 = vmatpush1.bf16.msra.mxu0 0
        %3158 = vmatprep.subr.bf16.mxu0 0
        %3159 = vmatpush1.bf16.msra.mxu0 0
        %3160 = vmatprep.subr.bf16.mxu0 0
        %3161 = vmatpush1.bf16.msra.mxu0 0
        %3162 = vmatprep.mubr.bf16.mxu0 0
        %3163 = vmatmul.mubr.bf16.gmra.mrb[0].mxu0 %v2353
        %v3164 = vpop.f32.mrb[0].mxu0
        %v3165 = vadd.f32 0.0, %v3164
        %v3166 = vpop.f32.mrb[0].mxu0
        %v3167 = vpop.f32.mrb[0].mxu0
        %v3168 = vadd.f32 0.0, %v3167
        %v3169 = vpop.f32.mrb[0].mxu0
        %3170 = vmatprep.mubr.bf16.mxu0 0
        %3171 = vmatmul.mubr.bf16.gmra.mrb[0].mxu0 %v2354
        %v3172 = vpop.f32.mrb[0].mxu0
        %v3173 = vadd.f32 0.0, %v3172
        %v3174 = vpop.f32.mrb[0].mxu0
        %v3175 = vpop.f32.mrb[0].mxu0
        %v3176 = vadd.f32 0.0, %v3175
        %v3177 = vpop.f32.mrb[0].mxu0
        %3178 = vmatprep.mubr.bf16.mxu0 0
        %3179 = vmatmul.mubr.bf16.gmra.mrb[0].mxu0 %v2355
        %v3180 = vpop.f32.mrb[0].mxu0
        %v3181 = vadd.f32 0.0, %v3180
        %v3182 = vpop.f32.mrb[0].mxu0
        %v3183 = vpop.f32.mrb[0].mxu0
        %v3184 = vadd.f32 0.0, %v3183
        %v3185 = vpop.f32.mrb[0].mxu0
        %3186 = vmatprep.mubr.bf16.mxu0 0
        %3187 = vmatmul.mubr.bf16.gmra.mrb[0].mxu0 %v2881
        %v3188 = vpop.f32.mrb[0].mxu0
        %v3189 = vadd.f32 0.0, %v3188
        %v3190 = vpop.f32.mrb[0].mxu0
        %v3191 = vpop.f32.mrb[0].mxu0
        %v3192 = vadd.f32 0.0, %v3191
        %v3193 = vpop.f32.mrb[0].mxu0
        %3194 = vdwg.mxu0
        %v3195 = vadd.f32 %v3057, %v3165
        %v3196 = vadd.f32 %v3058, %v3168
        %v3197 = vadd.f32 %v3059, %v3173
        %v3198 = vadd.f32 %v3060, %v3176
        %v3199 = vadd.f32 %v3061, %v3181
        %v3200 = vadd.f32 %v3062, %v3184
        %v3201 = vadd.f32 %v3063, %v3189
        %v3202 = vadd.f32 %v3064, %v3192
        %v3203 = vld [vmem:[#allocation3 + $0x8] sm:$0xff]
        %v3204 = vld [vmem:[#allocation3 + $0x10] sm:$0xff]
        %v3205 = vld [vmem:[#allocation3 + $0x18] sm:$0xff]
        %v3206 = vld [vmem:[#allocation3 + $0x20] sm:$0xff]
        %v3207 = vld [vmem:[#allocation3 + $0x28] sm:$0x1]
        %v3208 = vsel %vm1589, %v3203, 0
        %v3209 = vsel %vm1590, %v3204, 0
        %v3210 = vsel %vm1591, %v3205, 0
        %v3211 = vsel %vm1592, %v3206, 0
        %v3212 = vsel %vm1593, %v3207, 0
        %s3213 = scalar_lea.vmem [#allocation9], 320
        %v3214 = vld [vmem:[%s3213] sm:$0xf]
        %v3215 = vld [vmem:[%s3213 + $0x4] sm:$0xf]
        %v3216 = vld [vmem:[%s3213 + $0x8] sm:$0xf]
        %v3217 = vld [vmem:[%s3213 + $0xc] sm:$0xf]
        %v3218 = vld [vmem:[%s3213 + $0x10] sm:$0xf]
        %v3219 = vld [vmem:[%s3213 + $0x14] sm:$0xf]
        %v3220 = vld [vmem:[%s3213 + $0x18] sm:$0xf]
        %v3221 = vld [vmem:[%s3213 + $0x1c] sm:$0xf]
        %v3222 = vld [vmem:[%s3213 + $0x20] sm:$0xf]
        %v3223 = vld [vmem:[%s3213 + $0x24] sm:$0xf]
        %v3224 = vld [vmem:[%s3213 + $0x28] sm:$0xf]
        %v3225 = vld [vmem:[%s3213 + $0x2c] sm:$0xf]
        %v3226 = vld [vmem:[%s3213 + $0x30] sm:$0xf]
        %v3227 = vld [vmem:[%s3213 + $0x34] sm:$0xf]
        %v3228 = vld [vmem:[%s3213 + $0x38] sm:$0xf]
        %v3229 = vld [vmem:[%s3213 + $0x3c] sm:$0xf]
        %v3231 = vshrl.u32 %v3208, 16
        %v3233 = vshll.u32 %v3208, 16
        %v3235 = vrot.slane %v3233, 1
        %v3236 = vor.u32 %v3231, %v3235
        %v3238 = vshll.u32 %v3209, 16
        %v3240 = vrot.slane %v3238, 1
        %v3241 = vsel %vm1234, %v3236, %v3240
        %v3242 = vshrl.u32 %v3209, 16
        %v3244 = vor.u32 %v3242, %v3240
        %v3246 = vshll.u32 %v3210, 16
        %v3248 = vrot.slane %v3246, 1
        %v3249 = vsel %vm1234, %v3244, %v3248
        %v3250 = vshrl.u32 %v3210, 16
        %v3252 = vor.u32 %v3250, %v3248
        %v3254 = vshll.u32 %v3211, 16
        %v3256 = vrot.slane %v3254, 1
        %v3257 = vsel %vm1234, %v3252, %v3256
        %v3258 = vshrl.u32 %v3211, 16
        %v3260 = vor.u32 %v3258, %v3256
        %v3262 = vshll.u32 %v3212, 16
        %v3264 = vrot.slane %v3262, 1
        %v3265 = vsel %vm1234, %v3260, %v3264
        %v3286 = vunpack.c.l.b16 %v3214
        %v3287 = vunpack.c.l.b16 %v3215
        %v3288 = vunpack.c.l.b16 %v3216
        %v3289 = vunpack.c.l.b16 %v3217
        %v3290 = vunpack.c.l.b16 %v3218
        %v3291 = vunpack.c.l.b16 %v3219
        %v3292 = vunpack.c.l.b16 %v3220
        %v3293 = vunpack.c.l.b16 %v3221
        %v3294 = vunpack.c.l.b16 %v3222
        %v3295 = vunpack.c.l.b16 %v3223
        %v3296 = vunpack.c.l.b16 %v3224
        %v3297 = vunpack.c.l.b16 %v3225
        %v3298 = vunpack.c.l.b16 %v3226
        %v3299 = vunpack.c.l.b16 %v3227
        %v3300 = vunpack.c.l.b16 %v3228
        %v3301 = vunpack.c.l.b16 %v3229
        %v3302 = vpack.c.b16 %v3287, %v3286
        %v3303 = vpack.c.b16 %v3289, %v3288
        %v3304 = vpack.c.b16 %v3291, %v3290
        %v3305 = vpack.c.b16 %v3293, %v3292
        %v3306 = vpack.c.b16 %v3295, %v3294
        %v3307 = vpack.c.b16 %v3297, %v3296
        %v3308 = vpack.c.b16 %v3299, %v3298
        %v3309 = vpack.c.b16 %v3301, %v3300
        %3318 = vmatprep.subr.bf16.mxu0 0
        %3319 = vmatpush1.bf16.msra.mxu0 %v3302
        %3320 = vmatprep.subr.bf16.mxu0 0
        %3321 = vmatpush1.bf16.msra.mxu0 %v3303
        %3322 = vmatprep.subr.bf16.mxu0 0
        %3323 = vmatpush1.bf16.msra.mxu0 %v3304
        %3324 = vmatprep.subr.bf16.mxu0 0
        %3325 = vmatpush1.bf16.msra.mxu0 %v3305
        %3326 = vmatprep.subr.bf16.mxu0 0
        %3327 = vmatpush1.bf16.msra.mxu0 %v3306
        %3328 = vmatprep.subr.bf16.mxu0 0
        %3329 = vmatpush1.bf16.msra.mxu0 %v3307
        %3330 = vmatprep.subr.bf16.mxu0 0
        %3331 = vmatpush1.bf16.msra.mxu0 %v3308
        %3332 = vmatprep.subr.bf16.mxu0 0
        %3333 = vmatpush1.bf16.msra.mxu0 %v3309
        %3334 = vmatprep.subr.bf16.mxu0 0
        %3335 = vmatpush1.bf16.msra.mxu0 0
        %3336 = vmatprep.subr.bf16.mxu0 0
        %3337 = vmatpush1.bf16.msra.mxu0 0
        %3338 = vmatprep.subr.bf16.mxu0 0
        %3339 = vmatpush1.bf16.msra.mxu0 0
        %3340 = vmatprep.subr.bf16.mxu0 0
        %3341 = vmatpush1.bf16.msra.mxu0 0
        %3342 = vmatprep.subr.bf16.mxu0 0
        %3343 = vmatpush1.bf16.msra.mxu0 0
        %3344 = vmatprep.subr.bf16.mxu0 0
        %3345 = vmatpush1.bf16.msra.mxu0 0
        %3346 = vmatprep.subr.bf16.mxu0 0
        %3347 = vmatpush1.bf16.msra.mxu0 0
        %3348 = vmatprep.subr.bf16.mxu0 0
        %3349 = vmatpush1.bf16.msra.mxu0 0
        %3350 = vmatprep.mubr.bf16.mxu0 0
        %3351 = vmatmul.mubr.bf16.gmra.mrb[0].mxu0 %v3241
        %v3352 = vpop.f32.mrb[0].mxu0
        %v3353 = vadd.f32 0.0, %v3352
        %v3354 = vpop.f32.mrb[0].mxu0
        %v3355 = vpop.f32.mrb[0].mxu0
        %v3356 = vadd.f32 0.0, %v3355
        %v3357 = vpop.f32.mrb[0].mxu0
        %3358 = vmatprep.mubr.bf16.mxu0 0
        %3359 = vmatmul.mubr.bf16.gmra.mrb[0].mxu0 %v3249
        %v3360 = vpop.f32.mrb[0].mxu0
        %v3361 = vadd.f32 0.0, %v3360
        %v3362 = vpop.f32.mrb[0].mxu0
        %v3363 = vpop.f32.mrb[0].mxu0
        %v3364 = vadd.f32 0.0, %v3363
        %v3365 = vpop.f32.mrb[0].mxu0
        %3366 = vmatprep.mubr.bf16.mxu0 0
        %3367 = vmatmul.mubr.bf16.gmra.mrb[0].mxu0 %v3257
        %v3368 = vpop.f32.mrb[0].mxu0
        %v3369 = vadd.f32 0.0, %v3368
        %v3370 = vpop.f32.mrb[0].mxu0
        %v3371 = vpop.f32.mrb[0].mxu0
        %v3372 = vadd.f32 0.0, %v3371
        %v3373 = vpop.f32.mrb[0].mxu0
        %3374 = vmatprep.mubr.bf16.mxu0 0
        %3375 = vmatmul.mubr.bf16.gmra.mrb[0].mxu0 %v3265
        %v3376 = vpop.f32.mrb[0].mxu0
        %v3377 = vadd.f32 0.0, %v3376
        %v3378 = vpop.f32.mrb[0].mxu0
        %v3379 = vpop.f32.mrb[0].mxu0
        %v3380 = vadd.f32 0.0, %v3379
        %v3381 = vpop.f32.mrb[0].mxu0
        %3382 = vdwg.mxu0
        %v3383 = vadd.f32 %v3195, %v3353
        %v3384 = vadd.f32 %v3196, %v3356
        %v3385 = vadd.f32 %v3197, %v3361
        %v3386 = vadd.f32 %v3198, %v3364
        %v3387 = vadd.f32 %v3199, %v3369
        %v3388 = vadd.f32 %v3200, %v3372
        %v3389 = vadd.f32 %v3201, %v3377
        %v3390 = vadd.f32 %v3202, %v3380
        %v3391 = vld [vmem:[#allocation3 + $0x8] sm:$0xf8]
        %v3392 = vld [vmem:[#allocation3 + $0x28] sm:$0xf]
        %v3393 = vsel %vm618, %v3391, 0
        %v3394 = vsel %vm619, %v3204, 0
        %v3395 = vsel %vm620, %v3205, 0
        %v3396 = vsel %vm621, %v3206, 0
        %v3397 = vsel %vm622, %v3392, 0
        %s3398 = scalar_lea.vmem [#allocation9], 384
        %v3399 = vld [vmem:[%s3398] sm:$0xf]
        %v3400 = vld [vmem:[%s3398 + $0x4] sm:$0xf]
        %v3401 = vld [vmem:[%s3398 + $0x8] sm:$0xf]
        %v3402 = vld [vmem:[%s3398 + $0xc] sm:$0xf]
        %v3403 = vld [vmem:[%s3398 + $0x10] sm:$0xf]
        %v3404 = vld [vmem:[%s3398 + $0x14] sm:$0xf]
        %v3405 = vld [vmem:[%s3398 + $0x18] sm:$0xf]
        %v3406 = vld [vmem:[%s3398 + $0x1c] sm:$0xf]
        %v3407 = vld [vmem:[%s3398 + $0x20] sm:$0xf]
        %v3408 = vld [vmem:[%s3398 + $0x24] sm:$0xf]
        %v3409 = vld [vmem:[%s3398 + $0x28] sm:$0xf]
        %v3410 = vld [vmem:[%s3398 + $0x2c] sm:$0xf]
        %v3411 = vld [vmem:[%s3398 + $0x30] sm:$0xf]
        %v3412 = vld [vmem:[%s3398 + $0x34] sm:$0xf]
        %v3413 = vld [vmem:[%s3398 + $0x38] sm:$0xf]
        %v3414 = vld [vmem:[%s3398 + $0x3c] sm:$0xf]
        %v3416 = vshrl.u32 %v3393, 16
        %v3418 = vrot.slane %v3416, 3
        %v3419 = vshll.u32 %v3393, 16
        %v3421 = vrot.slane %v3419, 4
        %v3422 = vor.u32 %v3418, %v3421
        %v3424 = vshrl.u32 %v3394, 16
        %v3426 = vrot.slane %v3424, 3
        %v3427 = vshll.u32 %v3394, 16
        %v3429 = vrot.slane %v3427, 4
        %v3430 = vor.u32 %v3426, %v3429
        %v3431 = vsel %vm794, %v3422, %v3430
        %v3433 = vshrl.u32 %v3395, 16
        %v3435 = vrot.slane %v3433, 3
        %v3436 = vshll.u32 %v3395, 16
        %v3438 = vrot.slane %v3436, 4
        %v3439 = vor.u32 %v3435, %v3438
        %v3440 = vsel %vm794, %v3430, %v3439
        %v3442 = vshrl.u32 %v3396, 16
        %v3444 = vrot.slane %v3442, 3
        %v3445 = vshll.u32 %v3396, 16
        %v3447 = vrot.slane %v3445, 4
        %v3448 = vor.u32 %v3444, %v3447
        %v3449 = vsel %vm794, %v3439, %v3448
        %v3451 = vshrl.u32 %v3397, 16
        %v3453 = vrot.slane %v3451, 3
        %v3454 = vshll.u32 %v3397, 16
        %v3456 = vrot.slane %v3454, 4
        %v3457 = vor.u32 %v3453, %v3456
        %v3458 = vsel %vm794, %v3448, %v3457
        %v3479 = vunpack.c.l.b16 %v3399
        %v3480 = vunpack.c.l.b16 %v3400
        %v3481 = vunpack.c.l.b16 %v3401
        %v3482 = vunpack.c.l.b16 %v3402
        %v3483 = vunpack.c.l.b16 %v3403
        %v3484 = vunpack.c.l.b16 %v3404
        %v3485 = vunpack.c.l.b16 %v3405
        %v3486 = vunpack.c.l.b16 %v3406
        %v3487 = vunpack.c.l.b16 %v3407
        %v3488 = vunpack.c.l.b16 %v3408
        %v3489 = vunpack.c.l.b16 %v3409
        %v3490 = vunpack.c.l.b16 %v3410
        %v3491 = vunpack.c.l.b16 %v3411
        %v3492 = vunpack.c.l.b16 %v3412
        %v3493 = vunpack.c.l.b16 %v3413
        %v3494 = vunpack.c.l.b16 %v3414
        %v3495 = vpack.c.b16 %v3480, %v3479
        %v3496 = vpack.c.b16 %v3482, %v3481
        %v3497 = vpack.c.b16 %v3484, %v3483
        %v3498 = vpack.c.b16 %v3486, %v3485
        %v3499 = vpack.c.b16 %v3488, %v3487
        %v3500 = vpack.c.b16 %v3490, %v3489
        %v3501 = vpack.c.b16 %v3492, %v3491
        %v3502 = vpack.c.b16 %v3494, %v3493
        %3511 = vmatprep.subr.bf16.mxu0 0
        %3512 = vmatpush1.bf16.msra.mxu0 %v3495
        %3513 = vmatprep.subr.bf16.mxu0 0
        %3514 = vmatpush1.bf16.msra.mxu0 %v3496
        %3515 = vmatprep.subr.bf16.mxu0 0
        %3516 = vmatpush1.bf16.msra.mxu0 %v3497
        %3517 = vmatprep.subr.bf16.mxu0 0
        %3518 = vmatpush1.bf16.msra.mxu0 %v3498
        %3519 = vmatprep.subr.bf16.mxu0 0
        %3520 = vmatpush1.bf16.msra.mxu0 %v3499
        %3521 = vmatprep.subr.bf16.mxu0 0
        %3522 = vmatpush1.bf16.msra.mxu0 %v3500
        %3523 = vmatprep.subr.bf16.mxu0 0
        %3524 = vmatpush1.bf16.msra.mxu0 %v3501
        %3525 = vmatprep.subr.bf16.mxu0 0
        %3526 = vmatpush1.bf16.msra.mxu0 %v3502
        %3527 = vmatprep.subr.bf16.mxu0 0
        %3528 = vmatpush1.bf16.msra.mxu0 0
        %3529 = vmatprep.subr.bf16.mxu0 0
        %3530 = vmatpush1.bf16.msra.mxu0 0
        %3531 = vmatprep.subr.bf16.mxu0 0
        %3532 = vmatpush1.bf16.msra.mxu0 0
        %3533 = vmatprep.subr.bf16.mxu0 0
        %3534 = vmatpush1.bf16.msra.mxu0 0
        %3535 = vmatprep.subr.bf16.mxu0 0
        %3536 = vmatpush1.bf16.msra.mxu0 0
        %3537 = vmatprep.subr.bf16.mxu0 0
        %3538 = vmatpush1.bf16.msra.mxu0 0
        %3539 = vmatprep.subr.bf16.mxu0 0
        %3540 = vmatpush1.bf16.msra.mxu0 0
        %3541 = vmatprep.subr.bf16.mxu0 0
        %3542 = vmatpush1.bf16.msra.mxu0 0
        %3543 = vmatprep.mubr.bf16.mxu0 0
        %3544 = vmatmul.mubr.bf16.gmra.mrb[0].mxu0 %v3431
        %v3545 = vpop.f32.mrb[0].mxu0
        %v3546 = vadd.f32 0.0, %v3545
        %v3547 = vpop.f32.mrb[0].mxu0
        %v3548 = vpop.f32.mrb[0].mxu0
        %v3549 = vadd.f32 0.0, %v3548
        %v3550 = vpop.f32.mrb[0].mxu0
        %3551 = vmatprep.mubr.bf16.mxu0 0
        %3552 = vmatmul.mubr.bf16.gmra.mrb[0].mxu0 %v3440
        %v3553 = vpop.f32.mrb[0].mxu0
        %v3554 = vadd.f32 0.0, %v3553
        %v3555 = vpop.f32.mrb[0].mxu0
        %v3556 = vpop.f32.mrb[0].mxu0
        %v3557 = vadd.f32 0.0, %v3556
        %v3558 = vpop.f32.mrb[0].mxu0
        %3559 = vmatprep.mubr.bf16.mxu0 0
        %3560 = vmatmul.mubr.bf16.gmra.mrb[0].mxu0 %v3449
        %v3561 = vpop.f32.mrb[0].mxu0
        %v3562 = vadd.f32 0.0, %v3561
        %v3563 = vpop.f32.mrb[0].mxu0
        %v3564 = vpop.f32.mrb[0].mxu0
        %v3565 = vadd.f32 0.0, %v3564
        %v3566 = vpop.f32.mrb[0].mxu0
        %3567 = vmatprep.mubr.bf16.mxu0 0
        %3568 = vmatmul.mubr.bf16.gmra.mrb[0].mxu0 %v3458
        %v3569 = vpop.f32.mrb[0].mxu0
        %v3570 = vadd.f32 0.0, %v3569
        %v3571 = vpop.f32.mrb[0].mxu0
        %v3572 = vpop.f32.mrb[0].mxu0
        %v3573 = vadd.f32 0.0, %v3572
        %v3574 = vpop.f32.mrb[0].mxu0
        %3575 = vdwg.mxu0
        %v3576 = vadd.f32 %v3383, %v3546
        %v3577 = vadd.f32 %v3384, %v3549
        %v3578 = vadd.f32 %v3385, %v3554
        %v3579 = vadd.f32 %v3386, %v3557
        %v3580 = vadd.f32 %v3387, %v3562
        %v3581 = vadd.f32 %v3388, %v3565
        %v3582 = vadd.f32 %v3389, %v3570
        %v3583 = vadd.f32 %v3390, %v3573
        %v3584 = vld [vmem:[#allocation3 + $0x8] sm:$0xf0]
        %s3585 = scalar_lea.vmem [#allocation9], 448
        %v3586 = vld [vmem:[%s3585] sm:$0xf]
        %v3587 = vld [vmem:[%s3585 + $0x4] sm:$0xf]
        %v3588 = vld [vmem:[%s3585 + $0x8] sm:$0xf]
        %v3589 = vld [vmem:[%s3585 + $0xc] sm:$0xf]
        %v3590 = vld [vmem:[%s3585 + $0x10] sm:$0xf]
        %v3591 = vld [vmem:[%s3585 + $0x14] sm:$0xf]
        %v3592 = vld [vmem:[%s3585 + $0x18] sm:$0xf]
        %v3593 = vld [vmem:[%s3585 + $0x1c] sm:$0xf]
        %v3594 = vld [vmem:[%s3585 + $0x20] sm:$0xf]
        %v3595 = vld [vmem:[%s3585 + $0x24] sm:$0xf]
        %v3596 = vld [vmem:[%s3585 + $0x28] sm:$0xf]
        %v3597 = vld [vmem:[%s3585 + $0x2c] sm:$0xf]
        %v3598 = vld [vmem:[%s3585 + $0x30] sm:$0xf]
        %v3599 = vld [vmem:[%s3585 + $0x34] sm:$0xf]
        %v3600 = vld [vmem:[%s3585 + $0x38] sm:$0xf]
        %v3601 = vld [vmem:[%s3585 + $0x3c] sm:$0xf]
        %v3607 = vrot.slane %v3584, 4
        %v3608 = vrot.slane %v3204, 4
        %v3609 = vsel %vm667, %v3607, %v3608
        %v3610 = vrot.slane %v3205, 4
        %v3611 = vsel %vm667, %v3608, %v3610
        %v3612 = vrot.slane %v3206, 4
        %v3613 = vsel %vm667, %v3610, %v3612
        %v3614 = vrot.slane %v3392, 4
        %v3615 = vsel %vm667, %v3612, %v3614
        %v3636 = vunpack.c.l.b16 %v3586
        %v3637 = vunpack.c.l.b16 %v3587
        %v3638 = vunpack.c.l.b16 %v3588
        %v3639 = vunpack.c.l.b16 %v3589
        %v3640 = vunpack.c.l.b16 %v3590
        %v3641 = vunpack.c.l.b16 %v3591
        %v3642 = vunpack.c.l.b16 %v3592
        %v3643 = vunpack.c.l.b16 %v3593
        %v3644 = vunpack.c.l.b16 %v3594
        %v3645 = vunpack.c.l.b16 %v3595
        %v3646 = vunpack.c.l.b16 %v3596
        %v3647 = vunpack.c.l.b16 %v3597
        %v3648 = vunpack.c.l.b16 %v3598
        %v3649 = vunpack.c.l.b16 %v3599
        %v3650 = vunpack.c.l.b16 %v3600
        %v3651 = vunpack.c.l.b16 %v3601
        %v3652 = vpack.c.b16 %v3637, %v3636
        %v3653 = vpack.c.b16 %v3639, %v3638
        %v3654 = vpack.c.b16 %v3641, %v3640
        %v3655 = vpack.c.b16 %v3643, %v3642
        %v3656 = vpack.c.b16 %v3645, %v3644
        %v3657 = vpack.c.b16 %v3647, %v3646
        %v3658 = vpack.c.b16 %v3649, %v3648
        %v3659 = vpack.c.b16 %v3651, %v3650
        %3668 = vmatprep.subr.bf16.mxu0 0
        %3669 = vmatpush1.bf16.msra.mxu0 %v3652
        %3670 = vmatprep.subr.bf16.mxu0 0
        %3671 = vmatpush1.bf16.msra.mxu0 %v3653
        %3672 = vmatprep.subr.bf16.mxu0 0
        %3673 = vmatpush1.bf16.msra.mxu0 %v3654
        %3674 = vmatprep.subr.bf16.mxu0 0
        %3675 = vmatpush1.bf16.msra.mxu0 %v3655
        %3676 = vmatprep.subr.bf16.mxu0 0
        %3677 = vmatpush1.bf16.msra.mxu0 %v3656
        %3678 = vmatprep.subr.bf16.mxu0 0
        %3679 = vmatpush1.bf16.msra.mxu0 %v3657
        %3680 = vmatprep.subr.bf16.mxu0 0
        %3681 = vmatpush1.bf16.msra.mxu0 %v3658
        %3682 = vmatprep.subr.bf16.mxu0 0
        %3683 = vmatpush1.bf16.msra.mxu0 %v3659
        %3684 = vmatprep.subr.bf16.mxu0 0
        %3685 = vmatpush1.bf16.msra.mxu0 0
        %3686 = vmatprep.subr.bf16.mxu0 0
        %3687 = vmatpush1.bf16.msra.mxu0 0
        %3688 = vmatprep.subr.bf16.mxu0 0
        %3689 = vmatpush1.bf16.msra.mxu0 0
        %3690 = vmatprep.subr.bf16.mxu0 0
        %3691 = vmatpush1.bf16.msra.mxu0 0
        %3692 = vmatprep.subr.bf16.mxu0 0
        %3693 = vmatpush1.bf16.msra.mxu0 0
        %3694 = vmatprep.subr.bf16.mxu0 0
        %3695 = vmatpush1.bf16.msra.mxu0 0
        %3696 = vmatprep.subr.bf16.mxu0 0
        %3697 = vmatpush1.bf16.msra.mxu0 0
        %3698 = vmatprep.subr.bf16.mxu0 0
        %3699 = vmatpush1.bf16.msra.mxu0 0
        %3700 = vmatprep.mubr.bf16.mxu0 0
        %3701 = vmatmul.mubr.bf16.gmra.mrb[0].mxu0 %v3609
        %v3702 = vpop.f32.mrb[0].mxu0
        %v3703 = vadd.f32 0.0, %v3702
        %v3704 = vpop.f32.mrb[0].mxu0
        %v3705 = vpop.f32.mrb[0].mxu0
        %v3706 = vadd.f32 0.0, %v3705
        %v3707 = vpop.f32.mrb[0].mxu0
        %3708 = vmatprep.mubr.bf16.mxu0 0
        %3709 = vmatmul.mubr.bf16.gmra.mrb[0].mxu0 %v3611
        %v3710 = vpop.f32.mrb[0].mxu0
        %v3711 = vadd.f32 0.0, %v3710
        %v3712 = vpop.f32.mrb[0].mxu0
        %v3713 = vpop.f32.mrb[0].mxu0
        %v3714 = vadd.f32 0.0, %v3713
        %v3715 = vpop.f32.mrb[0].mxu0
        %3716 = vmatprep.mubr.bf16.mxu0 0
        %3717 = vmatmul.mubr.bf16.gmra.mrb[0].mxu0 %v3613
        %v3718 = vpop.f32.mrb[0].mxu0
        %v3719 = vadd.f32 0.0, %v3718
        %v3720 = vpop.f32.mrb[0].mxu0
        %v3721 = vpop.f32.mrb[0].mxu0
        %v3722 = vadd.f32 0.0, %v3721
        %v3723 = vpop.f32.mrb[0].mxu0
        %3724 = vmatprep.mubr.bf16.mxu0 0
        %3725 = vmatmul.mubr.bf16.gmra.mrb[0].mxu0 %v3615
        %v3726 = vpop.f32.mrb[0].mxu0
        %v3727 = vadd.f32 0.0, %v3726
        %v3728 = vpop.f32.mrb[0].mxu0
        %v3729 = vpop.f32.mrb[0].mxu0
        %v3730 = vadd.f32 0.0, %v3729
        %v3731 = vpop.f32.mrb[0].mxu0
        %3732 = vdwg.mxu0
        %v3733 = vadd.f32 %v3576, %v3703
        %v3734 = vadd.f32 %v3577, %v3706
        %v3735 = vadd.f32 %v3578, %v3711
        %v3736 = vadd.f32 %v3579, %v3714
        %v3737 = vadd.f32 %v3580, %v3719
        %v3738 = vadd.f32 %v3581, %v3722
        %v3739 = vadd.f32 %v3582, %v3727
        %v3740 = vadd.f32 %v3583, %v3730
        %v3741 = vld [vmem:[#allocation3 + $0x28] sm:$0x1f]
        %v3742 = vsel %vm1036, %v3584, 0
        %v3743 = vsel %vm1037, %v3204, 0
        %v3744 = vsel %vm1038, %v3205, 0
        %v3745 = vsel %vm1039, %v3206, 0
        %v3746 = vsel %vm1040, %v3741, 0
        %s3747 = scalar_lea.vmem [#allocation9], 512
        %v3748 = vld [vmem:[%s3747] sm:$0xf]
        %v3749 = vld [vmem:[%s3747 + $0x4] sm:$0xf]
        %v3750 = vld [vmem:[%s3747 + $0x8] sm:$0xf]
        %v3751 = vld [vmem:[%s3747 + $0xc] sm:$0xf]
        %v3752 = vld [vmem:[%s3747 + $0x10] sm:$0xf]
        %v3753 = vld [vmem:[%s3747 + $0x14] sm:$0xf]
        %v3754 = vld [vmem:[%s3747 + $0x18] sm:$0xf]
        %v3755 = vld [vmem:[%s3747 + $0x1c] sm:$0xf]
        %v3756 = vld [vmem:[%s3747 + $0x20] sm:$0xf]
        %v3757 = vld [vmem:[%s3747 + $0x24] sm:$0xf]
        %v3758 = vld [vmem:[%s3747 + $0x28] sm:$0xf]
        %v3759 = vld [vmem:[%s3747 + $0x2c] sm:$0xf]
        %v3760 = vld [vmem:[%s3747 + $0x30] sm:$0xf]
        %v3761 = vld [vmem:[%s3747 + $0x34] sm:$0xf]
        %v3762 = vld [vmem:[%s3747 + $0x38] sm:$0xf]
        %v3763 = vld [vmem:[%s3747 + $0x3c] sm:$0xf]
        %v3765 = vshrl.u32 %v3742, 16
        %v3767 = vrot.slane %v3765, 4
        %v3768 = vshll.u32 %v3742, 16
        %v3770 = vrot.slane %v3768, 5
        %v3771 = vor.u32 %v3767, %v3770
        %v3773 = vshrl.u32 %v3743, 16
        %v3775 = vrot.slane %v3773, 4
        %v3776 = vshll.u32 %v3743, 16
        %v3778 = vrot.slane %v3776, 5
        %v3779 = vor.u32 %v3775, %v3778
        %v3780 = vsel %vm582, %v3771, %v3779
        %v3782 = vshrl.u32 %v3744, 16
        %v3784 = vrot.slane %v3782, 4
        %v3785 = vshll.u32 %v3744, 16
        %v3787 = vrot.slane %v3785, 5
        %v3788 = vor.u32 %v3784, %v3787
        %v3789 = vsel %vm582, %v3779, %v3788
        %v3791 = vshrl.u32 %v3745, 16
        %v3793 = vrot.slane %v3791, 4
        %v3794 = vshll.u32 %v3745, 16
        %v3796 = vrot.slane %v3794, 5
        %v3797 = vor.u32 %v3793, %v3796
        %v3798 = vsel %vm582, %v3788, %v3797
        %v3800 = vshrl.u32 %v3746, 16
        %v3802 = vrot.slane %v3800, 4
        %v3803 = vshll.u32 %v3746, 16
        %v3805 = vrot.slane %v3803, 5
        %v3806 = vor.u32 %v3802, %v3805
        %v3807 = vsel %vm582, %v3797, %v3806
        %v3828 = vunpack.c.l.b16 %v3748
        %v3829 = vunpack.c.l.b16 %v3749
        %v3830 = vunpack.c.l.b16 %v3750
        %v3831 = vunpack.c.l.b16 %v3751
        %v3832 = vunpack.c.l.b16 %v3752
        %v3833 = vunpack.c.l.b16 %v3753
        %v3834 = vunpack.c.l.b16 %v3754
        %v3835 = vunpack.c.l.b16 %v3755
        %v3836 = vunpack.c.l.b16 %v3756
        %v3837 = vunpack.c.l.b16 %v3757
        %v3838 = vunpack.c.l.b16 %v3758
        %v3839 = vunpack.c.l.b16 %v3759
        %v3840 = vunpack.c.l.b16 %v3760
        %v3841 = vunpack.c.l.b16 %v3761
        %v3842 = vunpack.c.l.b16 %v3762
        %v3843 = vunpack.c.l.b16 %v3763
        %v3844 = vpack.c.b16 %v3829, %v3828
        %v3845 = vpack.c.b16 %v3831, %v3830
        %v3846 = vpack.c.b16 %v3833, %v3832
        %v3847 = vpack.c.b16 %v3835, %v3834
        %v3848 = vpack.c.b16 %v3837, %v3836
        %v3849 = vpack.c.b16 %v3839, %v3838
        %v3850 = vpack.c.b16 %v3841, %v3840
        %v3851 = vpack.c.b16 %v3843, %v3842
        %3860 = vmatprep.subr.bf16.mxu0 0
        %3861 = vmatpush1.bf16.msra.mxu0 %v3844
        %3862 = vmatprep.subr.bf16.mxu0 0
        %3863 = vmatpush1.bf16.msra.mxu0 %v3845
        %3864 = vmatprep.subr.bf16.mxu0 0
        %3865 = vmatpush1.bf16.msra.mxu0 %v3846
        %3866 = vmatprep.subr.bf16.mxu0 0
        %3867 = vmatpush1.bf16.msra.mxu0 %v3847
        %3868 = vmatprep.subr.bf16.mxu0 0
        %3869 = vmatpush1.bf16.msra.mxu0 %v3848
        %3870 = vmatprep.subr.bf16.mxu0 0
        %3871 = vmatpush1.bf16.msra.mxu0 %v3849
        %3872 = vmatprep.subr.bf16.mxu0 0
        %3873 = vmatpush1.bf16.msra.mxu0 %v3850
        %3874 = vmatprep.subr.bf16.mxu0 0
        %3875 = vmatpush1.bf16.msra.mxu0 %v3851
        %3876 = vmatprep.subr.bf16.mxu0 0
        %3877 = vmatpush1.bf16.msra.mxu0 0
        %3878 = vmatprep.subr.bf16.mxu0 0
        %3879 = vmatpush1.bf16.msra.mxu0 0
        %3880 = vmatprep.subr.bf16.mxu0 0
        %3881 = vmatpush1.bf16.msra.mxu0 0
        %3882 = vmatprep.subr.bf16.mxu0 0
        %3883 = vmatpush1.bf16.msra.mxu0 0
        %3884 = vmatprep.subr.bf16.mxu0 0
        %3885 = vmatpush1.bf16.msra.mxu0 0
        %3886 = vmatprep.subr.bf16.mxu0 0
        %3887 = vmatpush1.bf16.msra.mxu0 0
        %3888 = vmatprep.subr.bf16.mxu0 0
        %3889 = vmatpush1.bf16.msra.mxu0 0
        %3890 = vmatprep.subr.bf16.mxu0 0
        %3891 = vmatpush1.bf16.msra.mxu0 0
        %3892 = vmatprep.mubr.bf16.mxu0 0
        %3893 = vmatmul.mubr.bf16.gmra.mrb[0].mxu0 %v3780
        %v3894 = vpop.f32.mrb[0].mxu0
        %v3895 = vadd.f32 0.0, %v3894
        %v3896 = vpop.f32.mrb[0].mxu0
        %v3897 = vpop.f32.mrb[0].mxu0
        %v3898 = vadd.f32 0.0, %v3897
        %v3899 = vpop.f32.mrb[0].mxu0
        %3900 = vmatprep.mubr.bf16.mxu0 0
        %3901 = vmatmul.mubr.bf16.gmra.mrb[0].mxu0 %v3789
        %v3902 = vpop.f32.mrb[0].mxu0
        %v3903 = vadd.f32 0.0, %v3902
        %v3904 = vpop.f32.mrb[0].mxu0
        %v3905 = vpop.f32.mrb[0].mxu0
        %v3906 = vadd.f32 0.0, %v3905
        %v3907 = vpop.f32.mrb[0].mxu0
        %3908 = vmatprep.mubr.bf16.mxu0 0
        %3909 = vmatmul.mubr.bf16.gmra.mrb[0].mxu0 %v3798
        %v3910 = vpop.f32.mrb[0].mxu0
        %v3911 = vadd.f32 0.0, %v3910
        %v3912 = vpop.f32.mrb[0].mxu0
        %v3913 = vpop.f32.mrb[0].mxu0
        %v3914 = vadd.f32 0.0, %v3913
        %v3915 = vpop.f32.mrb[0].mxu0
        %3916 = vmatprep.mubr.bf16.mxu0 0
        %3917 = vmatmul.mubr.bf16.gmra.mrb[0].mxu0 %v3807
        %v3918 = vpop.f32.mrb[0].mxu0
        %v3919 = vadd.f32 0.0, %v3918
        %v3920 = vpop.f32.mrb[0].mxu0
        %v3921 = vpop.f32.mrb[0].mxu0
        %v3922 = vadd.f32 0.0, %v3921
        %v3923 = vpop.f32.mrb[0].mxu0
        %3924 = vdwg.mxu0
        %v3925 = vadd.f32 %v3733, %v3895
        %v3926 = vadd.f32 %v3734, %v3898
        %v3927 = vadd.f32 %v3735, %v3903
        %v3928 = vadd.f32 %v3736, %v3906
        %v3929 = vadd.f32 %v3737, %v3911
        %v3930 = vadd.f32 %v3738, %v3914
        %v3931 = vadd.f32 %v3739, %v3919
        %v3932 = vadd.f32 %v3740, %v3922
        %v3933 = vld [vmem:[%s4] sm:$0x1]
        %v3935 = vlaneseq
        %v3936 = vshrl.u32 %v3935, 7
        %v3937 = vsub.s32 0, %v3936
        %v3938 = vrot.slane %v3933, %v3937
        %v3940 = vadd.f32 %v3925, %v3938
        %v3941 = vadd.f32 %v3926, %v3938
        %v3942 = vadd.f32 %v3927, %v3938
        %v3943 = vadd.f32 %v3928, %v3938
        %v3944 = vadd.f32 %v3929, %v3938
        %v3945 = vadd.f32 %v3930, %v3938
        %v3946 = vadd.f32 %v3931, %v3938
        %v3947 = vadd.f32 %v3932, %v3938
        %v3948 = vmax.f32 %v3940, 0.0
        %v3949 = vmax.f32 %v3941, 0.0
        %v3950 = vmax.f32 %v3942, 0.0
        %v3951 = vmax.f32 %v3943, 0.0
        %v3952 = vmax.f32 %v3944, 0.0
        %v3953 = vmax.f32 %v3945, 0.0
        %v3954 = vmax.f32 %v3946, 0.0
        %v3955 = vmax.f32 %v3947, 0.0
        %3956 = vst [vmem:[%s271] sm:$0xff] %v3948
        %3957 = vst [vmem:[%s271 + $0x8] sm:$0xff] %v3949
        %3958 = vst [vmem:[%s271 + $0x10] sm:$0xff] %v3950
        %3959 = vst [vmem:[%s271 + $0x18] sm:$0xff] %v3951
        %3960 = vst [vmem:[%s271 + $0x20] sm:$0xff] %v3952
        %3961 = vst [vmem:[%s271 + $0x28] sm:$0xff] %v3953
        %3962 = vst [vmem:[%s271 + $0x30] sm:$0xff] %v3954
        %3963 = vst [vmem:[%s271 + $0x38] sm:$0xff] %v3955
        %s3964 = sand.u32 %s141, 1
        %s3965 = scalar_lea.sflag [#allocation6], %s3964
        %s3966 = sand.u32 %s141, 1
        %s3967 = smul.addr %s3966, 64
        %s3968 = scalar_lea.vmem [#allocation10], %s3967
        // Predicated region
        $region53: #{tpu_custom_call.1} parent=39 // pred_check
          %p3969 = pneg %p151
        $region54: #{tpu_custom_call.1} parent=39 // pred_check_branch
          %3971 = sbr.rel (%p3969) target = $region56
        $region55: #{tpu_custom_call.1} parent=39 // pred_region
          %s3973 = ssub.s32 1024, 1024
          %3974 = vsyncadd %s3965, %s3973
          %s3975 = smul.addr %s23, 8
          %s3976 = smul.addr %s3975, 128
          %s3977 = scalar_lea.hbm %s5, %s3976
          %s3978 = sshll.u32 %s3968, 4
          %s3979 = int_to_ptr.vmem [resolvable:$true] %s3978
          %3984 = dma.vmem_to_hbm [thread:$0]  %s3979, 1024, %s3977, %s3965, 128, 128, 8
        $region56: #{tpu_custom_call.1} parent=39 // pred_fallthru
          _
      $region40: #{tpu_custom_call.1} parent=5 // pred_fallthru
        _
      %p3985 = scmp.le.s32.totalorder 2, %s18
      // Predicated region
      $region57: #{tpu_custom_call.1} parent=5 // pred_check
        %p3986 = pneg %p3985
      $region58: #{tpu_custom_call.1} parent=5 // pred_check_branch
        %3988 = sbr.rel (%p3986) target = $region60
      $region59: #{tpu_custom_call.1} parent=5 // pred_region
        %s3989 = ssub.s32 %s18, 2
        // Predicated region
        $region61: #{tpu_custom_call.1} parent=59 // pred_check
          %p3990 = pneg %p157
        $region62: #{tpu_custom_call.1} parent=59 // pred_check_branch
          %3992 = sbr.rel (%p3990) target = $region64
        $region63: #{tpu_custom_call.1} parent=59 // pred_region
          %s3993 = sand.u32 %s142, 1
          %s3994 = scalar_lea.sflag [#allocation6], %s3993
          %s3995 = sand.u32 %s142, 1
          %s3996 = smul.addr %s3995, 64
          %s3997 = scalar_lea.vmem [#allocation10], %s3996
          %3998 = dma.done %s3994, 1024
        $region64: #{tpu_custom_call.1} parent=59 // pred_fallthru
          _
      $region60: #{tpu_custom_call.1} parent=5 // pred_fallthru
        _
    $region6: #{tpu_custom_call.1} parent=1 // loop_footer
      %s22 = sadd.s32 1, %s18
    $region7: #{tpu_custom_call.1} parent=1 // loop_footer_branch
      %17 = sbr.rel target = $region3
    $region8: #{tpu_custom_call.1} parent=1 // loop_exit
      _
    %3999 = vsyncpa [#allocation5], 1
    %s4000 = scalar_lea.sflag [#allocation5], 1
    %4001 = vsyncpa %s4000, 1
    %4002 = vsyncpa [#allocation8], 1
    %4003 = vsyncpa [#allocation6], 1
    %s4004 = scalar_lea.sflag [#allocation6], 1
    %4005 = vsyncpa %s4004, 1

</llo_original>
